<compile_context>
chip_gen: v7x
topology: tpu7x:2x2x1
jax: 0.10.0
libtpu: 0.0.40
codegen_flags: <defaults>
</compile_context>

<pallas_src>
import functools

import jax
import jax.numpy as jnp
from jax.experimental import pallas as pl
from jax.experimental.pallas import tpu as pltpu

HIDDEN = 32          # Config.hidden_dim
K = 5                # k nearest neighbors
OUT_DIM = 2          # output_dim
NEG_SLOPE = 0.2      # LeakyReLU slope
_NEG_BIG = -3.0e38   # mask sentinel for max-selections
# Config.dropout: dropout is identity at inference time (eval mode).


def _leaky_relu(v, slope=NEG_SLOPE):
    return jnp.where(v > 0.0, v, slope * v)


_COMPILER_PARAMS_CACHE = None


def _compiler_params():
    """Chip-adaptive scoped-VMEM limit (v5e/v6e ~96MiB, v7x ~48MiB)."""
    global _COMPILER_PARAMS_CACHE
    if _COMPILER_PARAMS_CACHE is None:
        try:
            cap = int(pltpu.get_tpu_info().vmem_capacity_bytes)
            limit = min((cap * 3) // 4, 100 * 1024 * 1024)
        except Exception:
            limit = 32 * 1024 * 1024
        _COMPILER_PARAMS_CACHE = pltpu.CompilerParams(vmem_limit_bytes=limit)
    return _COMPILER_PARAMS_CACHE


def _vmem_specs(n):
    return [pl.BlockSpec(memory_space=pltpu.MemorySpace.VMEM) for _ in range(n)]


# --------------------------- shared conv body --------------------------------

def _conv_body(x, key, b_col, b_row, wi, wj, wd, b1, wa2_row, wm2, bm2, k):
    """One AttentionEdgeConv (+ identity skip + outer LeakyReLU), kNN in-kernel.

    wi/wj/wd/b1 are the first layers of the att and mlp branches stacked
    column-wise: columns [0:H] -> att branch, [H:2H] -> mlp branch.
    """
    N, H = x.shape

    # ---- kNN in feature space (same graph, no self-loops) --------------------
    rows = jax.lax.broadcasted_iota(jnp.int32, (N, N), 0)
    cols = jax.lax.broadcasted_iota(jnp.int32, (N, N), 1)
    col_f = cols.astype(jnp.float32)

    gram = jnp.dot(x, x.T, preferred_element_type=jnp.float32)            # (N,N)
    sq_col = jnp.sum(x * x, axis=1, keepdims=True)                        # (N,1) ||x_i||^2
    # ||x_j||^2 as a (1,N) row via masked-diagonal sublane reduce (no transpose).
    sq_row = jnp.sum(jnp.where(rows == cols, gram, 0.0), axis=0, keepdims=True)
    negd = 2.0 * gram - sq_col - sq_row                                    # -||x_i-x_j||^2
    valid = (b_col == b_row) & (rows != cols)
    negd = jnp.where(valid, negd, _NEG_BIG)
    # TODO(synk): graphs with <= k valid neighbors fall back to arbitrary picks
    # (same behavior as top_k over masked distances in the previous version).

    # ---- node-level projections (att & mlp first layers, stacked) ------------
    proj_i = jnp.dot(x, wi, preferred_element_type=jnp.float32)           # (N,2H)
    proj_j = jnp.dot(x, wj, preferred_element_type=jnp.float32)           # (N,2H)
    # Everything source-node dependent, gathered with a bf16 one-hot MXU matmul.
    src_feat = jnp.concatenate([proj_j, key], axis=1).astype(jnp.bfloat16)  # (N,2H+1)

    logit_cols = []
    hm_list = []
    for _ in range(k):
        # pick the current nearest neighbor per row, lowest-index tie-break
        best = jnp.max(negd, axis=1, keepdims=True)                        # (N,1)
        cand = jnp.where(negd == best, col_f, jnp.float32(N))
        pick = jnp.min(cand, axis=1, keepdims=True)                        # (N,1)
        sel = col_f == pick                                                # (N,N) one-hot rows
        negd = jnp.where(sel, _NEG_BIG, negd)                              # exclude next round

        sel_bf16 = jnp.where(sel, 1.0, 0.0).astype(jnp.bfloat16)
        gath = jnp.dot(sel_bf16, src_feat,
                       preferred_element_type=jnp.float32)                 # (N,2H+1) j-features
        diff = key - gath[:, 2 * H:2 * H + 1]                              # key_i - key_j
        h1 = proj_i + gath[:, :2 * H] + diff * wd + b1                     # (N,2H)

        # att branch: Tanh -> Linear(H,1,no bias) as VPU mul + lane reduce
        logit_cols.append(jnp.sum(jnp.tanh(h1[:, :H]) * wa2_row,
                                  axis=-1, keepdims=True))                 # (N,1)
        # mlp branch first activation (second Linear deferred past aggregation)
        hm_list.append(_leaky_relu(h1[:, H:]))                             # (N,H)

    # ---- F.softmax(att(combined), dim=0): global over ALL E = k*N edges ------
    logits = jnp.concatenate(logit_cols, axis=1)                           # (N,k)
    gmax = jnp.max(jnp.max(logits, axis=1, keepdims=True), axis=0, keepdims=True)
    e = jnp.exp(logits - gmax)
    denom = jnp.sum(jnp.sum(e, axis=1, keepdims=True), axis=0, keepdims=True)
    att = e * pl.reciprocal(denom, approx=True)                            # (N,k)

    # ---- aggr='add' with the mlp second Linear deferred ----------------------
    wsum = att[:, 0:1] * hm_list[0]
    for m in range(1, k):
        wsum = wsum + att[:, m:m + 1] * hm_list[m]                         # (N,H)
    att_sum = jnp.sum(att, axis=1, keepdims=True)                          # (N,1)
    agg = jnp.dot(wsum, wm2, preferred_element_type=jnp.float32) + att_sum * bm2

    # skip_lin = Identity (in_channels == out_channels) + outer F.leaky_relu(0.2)
    return _leaky_relu(agg + x)


# ------------------------------- kernels --------------------------------------

def _init_conv_kernel(feat_ref, key_ref, bcol_ref, brow_ref, iw_ref, ib_ref,
                      wi_ref, wj_ref, wd_ref, b1_ref, wa2_ref, wm2_ref, bm2_ref,
                      o_ref, *, k):
    # initial_mlp: Linear -> ReLU -> Dropout(eval: identity), fused with conv1.
    h = jnp.maximum(
        jnp.dot(feat_ref[...], iw_ref[...], preferred_element_type=jnp.float32)
        + ib_ref[...], 0.0)
    o_ref[...] = _conv_body(h, key_ref[...], bcol_ref[...], brow_ref[...],
                            wi_ref[...], wj_ref[...], wd_ref[...], b1_ref[...],
                            wa2_ref[...], wm2_ref[...], bm2_ref[...], k)


def _conv_head_kernel(x_ref, key_ref, bcol_ref, brow_ref,
                      wi_ref, wj_ref, wd_ref, b1_ref, wa2_ref, wm2_ref, bm2_ref,
                      hw1_ref, hb1_ref, hw2_ref, hb2_ref, o_ref, *, k, num_graphs):
    # conv2 fused with global_max_pool + classifier + log_softmax.
    x1 = x_ref[...]
    b_col = bcol_ref[...]
    x2 = _conv_body(x1, key_ref[...], b_col, brow_ref[...],
                    wi_ref[...], wj_ref[...], wd_ref[...], b1_ref[...],
                    wa2_ref[...], wm2_ref[...], bm2_ref[...], k)

    xc = jnp.concatenate([x1, x2], axis=1)                                 # (N,2H)
    # per-graph masked max (static loop over B graphs; no (B,N,2H) buffer)
    pooled_rows = []
    for b in range(num_graphs):
        in_g = b_col == jnp.float32(b)                                     # (N,1)
        pooled_rows.append(
            jnp.max(jnp.where(in_g, xc, -1e30), axis=0, keepdims=True))    # (1,2H)
    pooled = jnp.concatenate(pooled_rows, axis=0)                          # (B,2H)

    # classifier: Linear -> ReLU -> Dropout(eval: id) -> Linear, then log_softmax(dim=1)
    hcls = jnp.maximum(
        jnp.dot(pooled, hw1_ref[...], preferred_element_type=jnp.float32)
        + hb1_ref[...], 0.0)
    logits = jnp.dot(hcls, hw2_ref[...], preferred_element_type=jnp.float32) + hb2_ref[...]
    s = logits - jnp.max(logits, axis=1, keepdims=True)
    o_ref[...] = s - jnp.log(jnp.sum(jnp.exp(s), axis=1, keepdims=True))


# ------------------------------- wrappers --------------------------------------

def _stack_conv_params(p, h):
    wa1, ba1, wa2 = p["att_w1"], p["att_b1"], p["att_w2"]
    wm1, bm1, wm2, bm2 = p["mlp_w1"], p["mlp_b1"], p["mlp_w2"], p["mlp_b2"]
    wi = jnp.concatenate([wa1[:h], wm1[:h]], axis=1)                       # (H,2H)
    wj = jnp.concatenate([wa1[h:2 * h], wm1[h:2 * h]], axis=1)             # (H,2H)
    wd = jnp.concatenate([wa1[2 * h:2 * h + 1], wm1[2 * h:2 * h + 1]], axis=1)  # (1,2H)
    b1 = jnp.concatenate([ba1, bm1]).reshape(1, 2 * h)                     # (1,2H)
    wa2_row = wa2.reshape(1, h)                                            # (1,H)
    return wi, wj, wd, b1, wa2_row, wm2, bm2.reshape(1, h)


def attention_dgcnn_forward(x, batch, num_graphs, params, key_feature_idx=0, k=K):
    # TODO(synk): create_spatiotemporal_edges is external to the provided module;
    # approximated as dynamic per-graph kNN in feature space (Config.temporal_window
    # not applied), matching the previous revision.
    N = x.shape[0]
    key_feature = x[:, key_feature_idx:key_feature_idx + 1]                # (N,1)
    features = jnp.concatenate(
        [x[:, :key_feature_idx], x[:, key_feature_idx + 1:]], axis=1)      # (N,input_dim-1)
    b_col = batch.astype(jnp.float32).reshape(N, 1)
    b_row = batch.astype(jnp.float32).reshape(1, N)

    H = params["init_w"].shape[1]
    c1 = _stack_conv_params(params["conv1"], H)
    c2 = _stack_conv_params(params["conv2"], H)
    head = params["cls"]
    cp = _compiler_params()

    # kernel 1: initial_mlp + conv1 (+ outer leaky_relu)
    x1 = pl.pallas_call(
        functools.partial(_init_conv_kernel, k=k),
        out_shape=jax.ShapeDtypeStruct((N, H), jnp.float32),
        in_specs=_vmem_specs(13),
        out_specs=pl.BlockSpec(memory_space=pltpu.MemorySpace.VMEM),
        compiler_params=cp,
    )(features, key_feature, b_col, b_row,
      params["init_w"], params["init_b"].reshape(1, -1), *c1)

    # kernel 2: conv2 (+ outer leaky_relu) + global_max_pool + classifier + log_softmax
    out_dim = head["w2"].shape[1]
    return pl.pallas_call(
        functools.partial(_conv_head_kernel, k=k, num_graphs=num_graphs),
        out_shape=jax.ShapeDtypeStruct((num_graphs, out_dim), jnp.float32),
        in_specs=_vmem_specs(15),
        out_specs=pl.BlockSpec(memory_space=pltpu.MemorySpace.VMEM),
        compiler_params=cp,
    )(x1, key_feature, b_col, b_row, *c2,
      head["w1"], head["b1"].reshape(1, -1), head["w2"], head["b2"].reshape(1, -1))


# --------------------------- deterministic params ------------------------------

def _lin(key, fan_in, shape):
    s = 1.0 / jnp.sqrt(jnp.float32(fan_in))
    return jax.random.uniform(key, shape, jnp.float32, -s, s)


def _conv_params(key, h):
    ks = jax.random.split(key, 7)
    in2 = 2 * h + 1
    return {
        "att_w1": _lin(ks[0], in2, (in2, h)),
        "att_b1": _lin(ks[1], in2, (h,)),
        "att_w2": _lin(ks[2], h, (h, 1)),        # no bias
        "mlp_w1": _lin(ks[3], in2, (in2, h)),
        "mlp_b1": _lin(ks[4], in2, (h,)),
        "mlp_w2": _lin(ks[5], h, (h, h)),
        "mlp_b2": _lin(ks[6], h, (h,)),
    }


def init_params(rng, input_dim, hidden=HIDDEN, out_dim=OUT_DIM):
    feature_dim = input_dim - 1
    ks = jax.random.split(rng, 8)
    return {
        "init_w": _lin(ks[0], feature_dim, (feature_dim, hidden)),
        "init_b": _lin(ks[1], feature_dim, (hidden,)),
        "conv1": _conv_params(ks[2], hidden),
        "conv2": _conv_params(ks[3], hidden),
        "cls": {
            "w1": _lin(ks[4], 2 * hidden, (2 * hidden, hidden)),
            "b1": _lin(ks[5], 2 * hidden, (hidden,)),
            "w2": _lin(ks[6], hidden, (hidden, out_dim)),
            "b2": _lin(ks[7], hidden, (out_dim,)),
        },
    }


if __name__ == "__main__":
    rng = jax.random.PRNGKey(0)
    N = 64                 # total nodes across the batch
    num_graphs = 2         # graphs in the batch
    input_dim = 5          # -> feature_dim = 4, key_feature_idx = 0

    k_x, k_p = jax.random.split(rng)
    x = jax.random.normal(k_x, (N, input_dim), dtype=jnp.float32)          # data.x
    batch = jnp.repeat(jnp.arange(num_graphs, dtype=jnp.int32),
                       N // num_graphs)                                     # data.batch
    params = init_params(k_p, input_dim)

    out = attention_dgcnn_forward(x, batch, num_graphs, params, key_feature_idx=0)
    out = jax.block_until_ready(out)

    assert out.shape == (num_graphs, OUT_DIM)
    assert bool(jnp.all(jnp.isfinite(out)))
    # rows are log-probabilities -> each row sums to ~1 after exp
    assert bool(jnp.allclose(jnp.sum(jnp.exp(out), axis=1), 1.0, atol=1e-4))
    print("KERNEL_OK")
</pallas_src>

<mosaic_0001>
module attributes {stable_mosaic.version = 11 : i64} {
  func.func @_init_conv_kernel(%arg0: memref<64x4xf32, #tpu.memory_space<vmem>>, %arg1: memref<64x1xf32, #tpu.memory_space<vmem>>, %arg2: memref<64x1xf32, #tpu.memory_space<vmem>>, %arg3: memref<1x64xf32, #tpu.memory_space<vmem>>, %arg4: memref<4x32xf32, #tpu.memory_space<vmem>>, %arg5: memref<1x32xf32, #tpu.memory_space<vmem>>, %arg6: memref<32x64xf32, #tpu.memory_space<vmem>>, %arg7: memref<32x64xf32, #tpu.memory_space<vmem>>, %arg8: memref<1x64xf32, #tpu.memory_space<vmem>>, %arg9: memref<1x64xf32, #tpu.memory_space<vmem>>, %arg10: memref<1x32xf32, #tpu.memory_space<vmem>>, %arg11: memref<32x32xf32, #tpu.memory_space<vmem>>, %arg12: memref<1x32xf32, #tpu.memory_space<vmem>>, %arg13: memref<64x32xf32, #tpu.memory_space<vmem>>) attributes {dimension_semantics = [], scalar_prefetch = 0 : i64, scratch_operands = 0 : i64, tpu.core_type = #tpu.core_type<tc>} {
    %c0 = arith.constant 0 : index
    %c0_0 = arith.constant 0 : index
    %0 = vector.load %arg0[%c0, %c0_0] : memref<64x4xf32, #tpu.memory_space<vmem>>, vector<64x4xf32>
    %c0_1 = arith.constant 0 : index
    %c0_2 = arith.constant 0 : index
    %1 = vector.load %arg4[%c0_1, %c0_2] : memref<4x32xf32, #tpu.memory_space<vmem>>, vector<4x32xf32>
    %cst = arith.constant dense<0.000000e+00> : vector<64x32xf32>
    %2 = tpu.matmul %0, %1, %cst {dimension_numbers = #tpu.dot_dimension_numbers<[1], [0], [0], [1], [0, 0, 1, 1], [], []>} : vector<64x4xf32>, vector<4x32xf32>, vector<64x32xf32> -> vector<64x32xf32>
    %c0_3 = arith.constant 0 : index
    %c0_4 = arith.constant 0 : index
    %3 = vector.load %arg5[%c0_3, %c0_4] : memref<1x32xf32, #tpu.memory_space<vmem>>, vector<1x32xf32>
    %4 = vector.broadcast %3 : vector<1x32xf32> to vector<64x32xf32>
    %5 = arith.addf %2, %4 : vector<64x32xf32>
    %cst_5 = arith.constant 0.000000e+00 : f32
    %6 = vector.broadcast %cst_5 : f32 to vector<64x32xf32>
    %7 = arith.maximumf %5, %6 : vector<64x32xf32>
    %c0_6 = arith.constant 0 : index
    %c0_7 = arith.constant 0 : index
    %8 = vector.load %arg1[%c0_6, %c0_7] : memref<64x1xf32, #tpu.memory_space<vmem>>, vector<64x1xf32>
    %c0_8 = arith.constant 0 : index
    %c0_9 = arith.constant 0 : index
    %9 = vector.load %arg2[%c0_8, %c0_9] : memref<64x1xf32, #tpu.memory_space<vmem>>, vector<64x1xf32>
    %c0_10 = arith.constant 0 : index
    %c0_11 = arith.constant 0 : index
    %10 = vector.load %arg3[%c0_10, %c0_11] : memref<1x64xf32, #tpu.memory_space<vmem>>, vector<1x64xf32>
    %c0_12 = arith.constant 0 : index
    %c0_13 = arith.constant 0 : index
    %11 = vector.load %arg6[%c0_12, %c0_13] : memref<32x64xf32, #tpu.memory_space<vmem>>, vector<32x64xf32>
    %c0_14 = arith.constant 0 : index
    %c0_15 = arith.constant 0 : index
    %12 = vector.load %arg7[%c0_14, %c0_15] : memref<32x64xf32, #tpu.memory_space<vmem>>, vector<32x64xf32>
    %c0_16 = arith.constant 0 : index
    %c0_17 = arith.constant 0 : index
    %13 = vector.load %arg8[%c0_16, %c0_17] : memref<1x64xf32, #tpu.memory_space<vmem>>, vector<1x64xf32>
    %c0_18 = arith.constant 0 : index
    %c0_19 = arith.constant 0 : index
    %14 = vector.load %arg9[%c0_18, %c0_19] : memref<1x64xf32, #tpu.memory_space<vmem>>, vector<1x64xf32>
    %c0_20 = arith.constant 0 : index
    %c0_21 = arith.constant 0 : index
    %15 = vector.load %arg10[%c0_20, %c0_21] : memref<1x32xf32, #tpu.memory_space<vmem>>, vector<1x32xf32>
    %c0_22 = arith.constant 0 : index
    %c0_23 = arith.constant 0 : index
    %16 = vector.load %arg11[%c0_22, %c0_23] : memref<32x32xf32, #tpu.memory_space<vmem>>, vector<32x32xf32>
    %c0_24 = arith.constant 0 : index
    %c0_25 = arith.constant 0 : index
    %17 = vector.load %arg12[%c0_24, %c0_25] : memref<1x32xf32, #tpu.memory_space<vmem>>, vector<1x32xf32>
    %18 = tpu.iota {dimensions = array<i32: 0>} : vector<64x64xi32>
    %19 = tpu.iota {dimensions = array<i32: 1>} : vector<64x64xi32>
    %20 = arith.sitofp %19 : vector<64x64xi32> to vector<64x64xf32>
    %21 = tpu.transpose %7, [1, 0] : vector<64x32xf32> -> vector<32x64xf32>
    %cst_26 = arith.constant dense<0.000000e+00> : vector<64x64xf32>
    %22 = tpu.matmul %7, %21, %cst_26 {dimension_numbers = #tpu.dot_dimension_numbers<[1], [0], [0], [1], [0, 0, 1, 1], [], []>} : vector<64x32xf32>, vector<32x64xf32>, vector<64x64xf32> -> vector<64x64xf32>
    %23 = arith.mulf %7, %7 : vector<64x32xf32>
    %cst_27 = arith.constant dense<0.000000e+00> : vector<64xf32>
    %24 = vector.multi_reduction <add>, %23, %cst_27 [1] : vector<64x32xf32> to vector<64xf32>
    %25 = vector.shape_cast %24 : vector<64xf32> to vector<64x1xf32>
    %26 = arith.cmpi eq, %18, %19 : vector<64x64xi32>
    %cst_28 = arith.constant 0.000000e+00 : f32
    %27 = vector.broadcast %cst_28 : f32 to vector<64x64xf32>
    %28 = arith.select %26, %22, %27 : vector<64x64xi1>, vector<64x64xf32>
    %cst_29 = arith.constant dense<0.000000e+00> : vector<64xf32>
    %29 = vector.multi_reduction <add>, %28, %cst_29 [0] : vector<64x64xf32> to vector<64xf32>
    %30 = vector.shape_cast %29 : vector<64xf32> to vector<1x64xf32>
    %cst_30 = arith.constant 2.000000e+00 : f32
    %31 = vector.broadcast %cst_30 : f32 to vector<64x64xf32>
    %32 = arith.mulf %31, %22 : vector<64x64xf32>
    %33 = vector.broadcast %25 : vector<64x1xf32> to vector<64x64xf32>
    %34 = arith.subf %32, %33 : vector<64x64xf32>
    %35 = vector.broadcast %30 : vector<1x64xf32> to vector<64x64xf32>
    %36 = arith.subf %34, %35 : vector<64x64xf32>
    %37 = vector.broadcast %9 : vector<64x1xf32> to vector<64x64xf32>
    %38 = vector.broadcast %10 : vector<1x64xf32> to vector<64x64xf32>
    %39 = arith.cmpf oeq, %37, %38 : vector<64x64xf32>
    %40 = arith.cmpi ne, %18, %19 : vector<64x64xi32>
    %41 = arith.andi %39, %40 : vector<64x64xi1>
    %cst_31 = arith.constant -3.000000e+38 : f32
    %42 = vector.broadcast %cst_31 : f32 to vector<64x64xf32>
    %43 = arith.select %41, %36, %42 : vector<64x64xi1>, vector<64x64xf32>
    %cst_32 = arith.constant dense<0.000000e+00> : vector<64x64xf32>
    %44 = tpu.matmul %7, %11, %cst_32 {dimension_numbers = #tpu.dot_dimension_numbers<[1], [0], [0], [1], [0, 0, 1, 1], [], []>} : vector<64x32xf32>, vector<32x64xf32>, vector<64x64xf32> -> vector<64x64xf32>
    %cst_33 = arith.constant dense<0.000000e+00> : vector<64x64xf32>
    %45 = tpu.matmul %7, %12, %cst_33 {dimension_numbers = #tpu.dot_dimension_numbers<[1], [0], [0], [1], [0, 0, 1, 1], [], []>} : vector<64x32xf32>, vector<32x64xf32>, vector<64x64xf32> -> vector<64x64xf32>
    %46 = tpu.concatenate %45, %8 in 1 : vector<64x64xf32>, vector<64x1xf32> -> vector<64x65xf32>
    %47 = arith.truncf %46 : vector<64x65xf32> to vector<64x65xbf16>
    %cst_34 = arith.constant dense<0xFF800000> : vector<64xf32>
    %48 = vector.multi_reduction <maximumf>, %43, %cst_34 [1] : vector<64x64xf32> to vector<64xf32>
    %49 = vector.shape_cast %48 : vector<64xf32> to vector<64x1xf32>
    %50 = vector.broadcast %49 : vector<64x1xf32> to vector<64x64xf32>
    %51 = arith.cmpf oeq, %43, %50 : vector<64x64xf32>
    %cst_35 = arith.constant 6.400000e+01 : f32
    %52 = vector.broadcast %cst_35 : f32 to vector<64x64xf32>
    %53 = arith.select %51, %20, %52 : vector<64x64xi1>, vector<64x64xf32>
    %cst_36 = arith.constant dense<0x7F800000> : vector<64xf32>
    %54 = vector.multi_reduction <minimumf>, %53, %cst_36 [1] : vector<64x64xf32> to vector<64xf32>
    %55 = vector.shape_cast %54 : vector<64xf32> to vector<64x1xf32>
    %56 = vector.broadcast %55 : vector<64x1xf32> to vector<64x64xf32>
    %57 = arith.cmpf oeq, %20, %56 : vector<64x64xf32>
    %cst_37 = arith.constant -3.000000e+38 : f32
    %58 = vector.broadcast %cst_37 : f32 to vector<64x64xf32>
    %59 = arith.select %57, %58, %43 : vector<64x64xi1>, vector<64x64xf32>
    %cst_38 = arith.constant 1.000000e+00 : f32
    %cst_39 = arith.constant 0.000000e+00 : f32
    %60 = vector.broadcast %cst_38 : f32 to vector<64x64xf32>
    %61 = vector.broadcast %cst_39 : f32 to vector<64x64xf32>
    %62 = arith.select %57, %60, %61 : vector<64x64xi1>, vector<64x64xf32>
    %63 = arith.truncf %62 : vector<64x64xf32> to vector<64x64xbf16>
    %cst_40 = arith.constant dense<0.000000e+00> : vector<64x65xf32>
    %64 = tpu.matmul %63, %47, %cst_40 {dimension_numbers = #tpu.dot_dimension_numbers<[1], [0], [0], [1], [0, 0, 1, 1], [], []>} : vector<64x64xbf16>, vector<64x65xbf16>, vector<64x65xf32> -> vector<64x65xf32>
    %65 = vector.extract_strided_slice %64 {offsets = [0, 64], sizes = [64, 1], strides = [1, 1]} : vector<64x65xf32> to vector<64x1xf32>
    %66 = arith.subf %8, %65 : vector<64x1xf32>
    %67 = vector.extract_strided_slice %64 {offsets = [0, 0], sizes = [64, 64], strides = [1, 1]} : vector<64x65xf32> to vector<64x64xf32>
    %68 = arith.addf %44, %67 : vector<64x64xf32>
    %69 = vector.broadcast %66 : vector<64x1xf32> to vector<64x64xf32>
    %70 = vector.broadcast %13 : vector<1x64xf32> to vector<64x64xf32>
    %71 = arith.mulf %69, %70 : vector<64x64xf32>
    %72 = arith.addf %68, %71 : vector<64x64xf32>
    %73 = vector.broadcast %14 : vector<1x64xf32> to vector<64x64xf32>
    %74 = arith.addf %72, %73 : vector<64x64xf32>
    %75 = vector.extract_strided_slice %74 {offsets = [0, 0], sizes = [64, 32], strides = [1, 1]} : vector<64x64xf32> to vector<64x32xf32>
    %76 = math.tanh %75 : vector<64x32xf32>
    %77 = vector.broadcast %15 : vector<1x32xf32> to vector<64x32xf32>
    %78 = arith.mulf %76, %77 : vector<64x32xf32>
    %cst_41 = arith.constant dense<0.000000e+00> : vector<64xf32>
    %79 = vector.multi_reduction <add>, %78, %cst_41 [1] : vector<64x32xf32> to vector<64xf32>
    %80 = vector.shape_cast %79 : vector<64xf32> to vector<64x1xf32>
    %81 = vector.extract_strided_slice %74 {offsets = [0, 32], sizes = [64, 32], strides = [1, 1]} : vector<64x64xf32> to vector<64x32xf32>
    %cst_42 = arith.constant 0.000000e+00 : f32
    %82 = vector.broadcast %cst_42 : f32 to vector<64x32xf32>
    %83 = arith.cmpf ogt, %81, %82 : vector<64x32xf32>
    %cst_43 = arith.constant 2.000000e-01 : f32
    %84 = vector.broadcast %cst_43 : f32 to vector<64x32xf32>
    %85 = arith.mulf %84, %81 : vector<64x32xf32>
    %86 = arith.select %83, %81, %85 : vector<64x32xi1>, vector<64x32xf32>
    %cst_44 = arith.constant dense<0xFF800000> : vector<64xf32>
    %87 = vector.multi_reduction <maximumf>, %59, %cst_44 [1] : vector<64x64xf32> to vector<64xf32>
    %88 = vector.shape_cast %87 : vector<64xf32> to vector<64x1xf32>
    %89 = vector.broadcast %88 : vector<64x1xf32> to vector<64x64xf32>
    %90 = arith.cmpf oeq, %59, %89 : vector<64x64xf32>
    %cst_45 = arith.constant 6.400000e+01 : f32
    %91 = vector.broadcast %cst_45 : f32 to vector<64x64xf32>
    %92 = arith.select %90, %20, %91 : vector<64x64xi1>, vector<64x64xf32>
    %cst_46 = arith.constant dense<0x7F800000> : vector<64xf32>
    %93 = vector.multi_reduction <minimumf>, %92, %cst_46 [1] : vector<64x64xf32> to vector<64xf32>
    %94 = vector.shape_cast %93 : vector<64xf32> to vector<64x1xf32>
    %95 = vector.broadcast %94 : vector<64x1xf32> to vector<64x64xf32>
    %96 = arith.cmpf oeq, %20, %95 : vector<64x64xf32>
    %cst_47 = arith.constant -3.000000e+38 : f32
    %97 = vector.broadcast %cst_47 : f32 to vector<64x64xf32>
    %98 = arith.select %96, %97, %59 : vector<64x64xi1>, vector<64x64xf32>
    %cst_48 = arith.constant 1.000000e+00 : f32
    %cst_49 = arith.constant 0.000000e+00 : f32
    %99 = vector.broadcast %cst_48 : f32 to vector<64x64xf32>
    %100 = vector.broadcast %cst_49 : f32 to vector<64x64xf32>
    %101 = arith.select %96, %99, %100 : vector<64x64xi1>, vector<64x64xf32>
    %102 = arith.truncf %101 : vector<64x64xf32> to vector<64x64xbf16>
    %cst_50 = arith.constant dense<0.000000e+00> : vector<64x65xf32>
    %103 = tpu.matmul %102, %47, %cst_50 {dimension_numbers = #tpu.dot_dimension_numbers<[1], [0], [0], [1], [0, 0, 1, 1], [], []>} : vector<64x64xbf16>, vector<64x65xbf16>, vector<64x65xf32> -> vector<64x65xf32>
    %104 = vector.extract_strided_slice %103 {offsets = [0, 64], sizes = [64, 1], strides = [1, 1]} : vector<64x65xf32> to vector<64x1xf32>
    %105 = arith.subf %8, %104 : vector<64x1xf32>
    %106 = vector.extract_strided_slice %103 {offsets = [0, 0], sizes = [64, 64], strides = [1, 1]} : vector<64x65xf32> to vector<64x64xf32>
    %107 = arith.addf %44, %106 : vector<64x64xf32>
    %108 = vector.broadcast %105 : vector<64x1xf32> to vector<64x64xf32>
    %109 = vector.broadcast %13 : vector<1x64xf32> to vector<64x64xf32>
    %110 = arith.mulf %108, %109 : vector<64x64xf32>
    %111 = arith.addf %107, %110 : vector<64x64xf32>
    %112 = vector.broadcast %14 : vector<1x64xf32> to vector<64x64xf32>
    %113 = arith.addf %111, %112 : vector<64x64xf32>
    %114 = vector.extract_strided_slice %113 {offsets = [0, 0], sizes = [64, 32], strides = [1, 1]} : vector<64x64xf32> to vector<64x32xf32>
    %115 = math.tanh %114 : vector<64x32xf32>
    %116 = vector.broadcast %15 : vector<1x32xf32> to vector<64x32xf32>
    %117 = arith.mulf %115, %116 : vector<64x32xf32>
    %cst_51 = arith.constant dense<0.000000e+00> : vector<64xf32>
    %118 = vector.multi_reduction <add>, %117, %cst_51 [1] : vector<64x32xf32> to vector<64xf32>
    %119 = vector.shape_cast %118 : vector<64xf32> to vector<64x1xf32>
    %120 = vector.extract_strided_slice %113 {offsets = [0, 32], sizes = [64, 32], strides = [1, 1]} : vector<64x64xf32> to vector<64x32xf32>
    %cst_52 = arith.constant 0.000000e+00 : f32
    %121 = vector.broadcast %cst_52 : f32 to vector<64x32xf32>
    %122 = arith.cmpf ogt, %120, %121 : vector<64x32xf32>
    %cst_53 = arith.constant 2.000000e-01 : f32
    %123 = vector.broadcast %cst_53 : f32 to vector<64x32xf32>
    %124 = arith.mulf %123, %120 : vector<64x32xf32>
    %125 = arith.select %122, %120, %124 : vector<64x32xi1>, vector<64x32xf32>
    %cst_54 = arith.constant dense<0xFF800000> : vector<64xf32>
    %126 = vector.multi_reduction <maximumf>, %98, %cst_54 [1] : vector<64x64xf32> to vector<64xf32>
    %127 = vector.shape_cast %126 : vector<64xf32> to vector<64x1xf32>
    %128 = vector.broadcast %127 : vector<64x1xf32> to vector<64x64xf32>
    %129 = arith.cmpf oeq, %98, %128 : vector<64x64xf32>
    %cst_55 = arith.constant 6.400000e+01 : f32
    %130 = vector.broadcast %cst_55 : f32 to vector<64x64xf32>
    %131 = arith.select %129, %20, %130 : vector<64x64xi1>, vector<64x64xf32>
    %cst_56 = arith.constant dense<0x7F800000> : vector<64xf32>
    %132 = vector.multi_reduction <minimumf>, %131, %cst_56 [1] : vector<64x64xf32> to vector<64xf32>
    %133 = vector.shape_cast %132 : vector<64xf32> to vector<64x1xf32>
    %134 = vector.broadcast %133 : vector<64x1xf32> to vector<64x64xf32>
    %135 = arith.cmpf oeq, %20, %134 : vector<64x64xf32>
    %cst_57 = arith.constant -3.000000e+38 : f32
    %136 = vector.broadcast %cst_57 : f32 to vector<64x64xf32>
    %137 = arith.select %135, %136, %98 : vector<64x64xi1>, vector<64x64xf32>
    %cst_58 = arith.constant 1.000000e+00 : f32
    %cst_59 = arith.constant 0.000000e+00 : f32
    %138 = vector.broadcast %cst_58 : f32 to vector<64x64xf32>
    %139 = vector.broadcast %cst_59 : f32 to vector<64x64xf32>
    %140 = arith.select %135, %138, %139 : vector<64x64xi1>, vector<64x64xf32>
    %141 = arith.truncf %140 : vector<64x64xf32> to vector<64x64xbf16>
    %cst_60 = arith.constant dense<0.000000e+00> : vector<64x65xf32>
    %142 = tpu.matmul %141, %47, %cst_60 {dimension_numbers = #tpu.dot_dimension_numbers<[1], [0], [0], [1], [0, 0, 1, 1], [], []>} : vector<64x64xbf16>, vector<64x65xbf16>, vector<64x65xf32> -> vector<64x65xf32>
    %143 = vector.extract_strided_slice %142 {offsets = [0, 64], sizes = [64, 1], strides = [1, 1]} : vector<64x65xf32> to vector<64x1xf32>
    %144 = arith.subf %8, %143 : vector<64x1xf32>
    %145 = vector.extract_strided_slice %142 {offsets = [0, 0], sizes = [64, 64], strides = [1, 1]} : vector<64x65xf32> to vector<64x64xf32>
    %146 = arith.addf %44, %145 : vector<64x64xf32>
    %147 = vector.broadcast %144 : vector<64x1xf32> to vector<64x64xf32>
    %148 = vector.broadcast %13 : vector<1x64xf32> to vector<64x64xf32>
    %149 = arith.mulf %147, %148 : vector<64x64xf32>
    %150 = arith.addf %146, %149 : vector<64x64xf32>
    %151 = vector.broadcast %14 : vector<1x64xf32> to vector<64x64xf32>
    %152 = arith.addf %150, %151 : vector<64x64xf32>
    %153 = vector.extract_strided_slice %152 {offsets = [0, 0], sizes = [64, 32], strides = [1, 1]} : vector<64x64xf32> to vector<64x32xf32>
    %154 = math.tanh %153 : vector<64x32xf32>
    %155 = vector.broadcast %15 : vector<1x32xf32> to vector<64x32xf32>
    %156 = arith.mulf %154, %155 : vector<64x32xf32>
    %cst_61 = arith.constant dense<0.000000e+00> : vector<64xf32>
    %157 = vector.multi_reduction <add>, %156, %cst_61 [1] : vector<64x32xf32> to vector<64xf32>
    %158 = vector.shape_cast %157 : vector<64xf32> to vector<64x1xf32>
    %159 = vector.extract_strided_slice %152 {offsets = [0, 32], sizes = [64, 32], strides = [1, 1]} : vector<64x64xf32> to vector<64x32xf32>
    %cst_62 = arith.constant 0.000000e+00 : f32
    %160 = vector.broadcast %cst_62 : f32 to vector<64x32xf32>
    %161 = arith.cmpf ogt, %159, %160 : vector<64x32xf32>
    %cst_63 = arith.constant 2.000000e-01 : f32
    %162 = vector.broadcast %cst_63 : f32 to vector<64x32xf32>
    %163 = arith.mulf %162, %159 : vector<64x32xf32>
    %164 = arith.select %161, %159, %163 : vector<64x32xi1>, vector<64x32xf32>
    %cst_64 = arith.constant dense<0xFF800000> : vector<64xf32>
    %165 = vector.multi_reduction <maximumf>, %137, %cst_64 [1] : vector<64x64xf32> to vector<64xf32>
    %166 = vector.shape_cast %165 : vector<64xf32> to vector<64x1xf32>
    %167 = vector.broadcast %166 : vector<64x1xf32> to vector<64x64xf32>
    %168 = arith.cmpf oeq, %137, %167 : vector<64x64xf32>
    %cst_65 = arith.constant 6.400000e+01 : f32
    %169 = vector.broadcast %cst_65 : f32 to vector<64x64xf32>
    %170 = arith.select %168, %20, %169 : vector<64x64xi1>, vector<64x64xf32>
    %cst_66 = arith.constant dense<0x7F800000> : vector<64xf32>
    %171 = vector.multi_reduction <minimumf>, %170, %cst_66 [1] : vector<64x64xf32> to vector<64xf32>
    %172 = vector.shape_cast %171 : vector<64xf32> to vector<64x1xf32>
    %173 = vector.broadcast %172 : vector<64x1xf32> to vector<64x64xf32>
    %174 = arith.cmpf oeq, %20, %173 : vector<64x64xf32>
    %cst_67 = arith.constant -3.000000e+38 : f32
    %175 = vector.broadcast %cst_67 : f32 to vector<64x64xf32>
    %176 = arith.select %174, %175, %137 : vector<64x64xi1>, vector<64x64xf32>
    %cst_68 = arith.constant 1.000000e+00 : f32
    %cst_69 = arith.constant 0.000000e+00 : f32
    %177 = vector.broadcast %cst_68 : f32 to vector<64x64xf32>
    %178 = vector.broadcast %cst_69 : f32 to vector<64x64xf32>
    %179 = arith.select %174, %177, %178 : vector<64x64xi1>, vector<64x64xf32>
    %180 = arith.truncf %179 : vector<64x64xf32> to vector<64x64xbf16>
    %cst_70 = arith.constant dense<0.000000e+00> : vector<64x65xf32>
    %181 = tpu.matmul %180, %47, %cst_70 {dimension_numbers = #tpu.dot_dimension_numbers<[1], [0], [0], [1], [0, 0, 1, 1], [], []>} : vector<64x64xbf16>, vector<64x65xbf16>, vector<64x65xf32> -> vector<64x65xf32>
    %182 = vector.extract_strided_slice %181 {offsets = [0, 64], sizes = [64, 1], strides = [1, 1]} : vector<64x65xf32> to vector<64x1xf32>
    %183 = arith.subf %8, %182 : vector<64x1xf32>
    %184 = vector.extract_strided_slice %181 {offsets = [0, 0], sizes = [64, 64], strides = [1, 1]} : vector<64x65xf32> to vector<64x64xf32>
    %185 = arith.addf %44, %184 : vector<64x64xf32>
    %186 = vector.broadcast %183 : vector<64x1xf32> to vector<64x64xf32>
    %187 = vector.broadcast %13 : vector<1x64xf32> to vector<64x64xf32>
    %188 = arith.mulf %186, %187 : vector<64x64xf32>
    %189 = arith.addf %185, %188 : vector<64x64xf32>
    %190 = vector.broadcast %14 : vector<1x64xf32> to vector<64x64xf32>
    %191 = arith.addf %189, %190 : vector<64x64xf32>
    %192 = vector.extract_strided_slice %191 {offsets = [0, 0], sizes = [64, 32], strides = [1, 1]} : vector<64x64xf32> to vector<64x32xf32>
    %193 = math.tanh %192 : vector<64x32xf32>
    %194 = vector.broadcast %15 : vector<1x32xf32> to vector<64x32xf32>
    %195 = arith.mulf %193, %194 : vector<64x32xf32>
    %cst_71 = arith.constant dense<0.000000e+00> : vector<64xf32>
    %196 = vector.multi_reduction <add>, %195, %cst_71 [1] : vector<64x32xf32> to vector<64xf32>
    %197 = vector.shape_cast %196 : vector<64xf32> to vector<64x1xf32>
    %198 = vector.extract_strided_slice %191 {offsets = [0, 32], sizes = [64, 32], strides = [1, 1]} : vector<64x64xf32> to vector<64x32xf32>
    %cst_72 = arith.constant 0.000000e+00 : f32
    %199 = vector.broadcast %cst_72 : f32 to vector<64x32xf32>
    %200 = arith.cmpf ogt, %198, %199 : vector<64x32xf32>
    %cst_73 = arith.constant 2.000000e-01 : f32
    %201 = vector.broadcast %cst_73 : f32 to vector<64x32xf32>
    %202 = arith.mulf %201, %198 : vector<64x32xf32>
    %203 = arith.select %200, %198, %202 : vector<64x32xi1>, vector<64x32xf32>
    %cst_74 = arith.constant dense<0xFF800000> : vector<64xf32>
    %204 = vector.multi_reduction <maximumf>, %176, %cst_74 [1] : vector<64x64xf32> to vector<64xf32>
    %205 = vector.shape_cast %204 : vector<64xf32> to vector<64x1xf32>
    %206 = vector.broadcast %205 : vector<64x1xf32> to vector<64x64xf32>
    %207 = arith.cmpf oeq, %176, %206 : vector<64x64xf32>
    %cst_75 = arith.constant 6.400000e+01 : f32
    %208 = vector.broadcast %cst_75 : f32 to vector<64x64xf32>
    %209 = arith.select %207, %20, %208 : vector<64x64xi1>, vector<64x64xf32>
    %cst_76 = arith.constant dense<0x7F800000> : vector<64xf32>
    %210 = vector.multi_reduction <minimumf>, %209, %cst_76 [1] : vector<64x64xf32> to vector<64xf32>
    %211 = vector.shape_cast %210 : vector<64xf32> to vector<64x1xf32>
    %212 = vector.broadcast %211 : vector<64x1xf32> to vector<64x64xf32>
    %213 = arith.cmpf oeq, %20, %212 : vector<64x64xf32>
    %cst_77 = arith.constant 1.000000e+00 : f32
    %cst_78 = arith.constant 0.000000e+00 : f32
    %214 = vector.broadcast %cst_77 : f32 to vector<64x64xf32>
    %215 = vector.broadcast %cst_78 : f32 to vector<64x64xf32>
    %216 = arith.select %213, %214, %215 : vector<64x64xi1>, vector<64x64xf32>
    %217 = arith.truncf %216 : vector<64x64xf32> to vector<64x64xbf16>
    %cst_79 = arith.constant dense<0.000000e+00> : vector<64x65xf32>
    %218 = tpu.matmul %217, %47, %cst_79 {dimension_numbers = #tpu.dot_dimension_numbers<[1], [0], [0], [1], [0, 0, 1, 1], [], []>} : vector<64x64xbf16>, vector<64x65xbf16>, vector<64x65xf32> -> vector<64x65xf32>
    %219 = vector.extract_strided_slice %218 {offsets = [0, 64], sizes = [64, 1], strides = [1, 1]} : vector<64x65xf32> to vector<64x1xf32>
    %220 = arith.subf %8, %219 : vector<64x1xf32>
    %221 = vector.extract_strided_slice %218 {offsets = [0, 0], sizes = [64, 64], strides = [1, 1]} : vector<64x65xf32> to vector<64x64xf32>
    %222 = arith.addf %44, %221 : vector<64x64xf32>
    %223 = vector.broadcast %220 : vector<64x1xf32> to vector<64x64xf32>
    %224 = vector.broadcast %13 : vector<1x64xf32> to vector<64x64xf32>
    %225 = arith.mulf %223, %224 : vector<64x64xf32>
    %226 = arith.addf %222, %225 : vector<64x64xf32>
    %227 = vector.broadcast %14 : vector<1x64xf32> to vector<64x64xf32>
    %228 = arith.addf %226, %227 : vector<64x64xf32>
    %229 = vector.extract_strided_slice %228 {offsets = [0, 0], sizes = [64, 32], strides = [1, 1]} : vector<64x64xf32> to vector<64x32xf32>
    %230 = math.tanh %229 : vector<64x32xf32>
    %231 = vector.broadcast %15 : vector<1x32xf32> to vector<64x32xf32>
    %232 = arith.mulf %230, %231 : vector<64x32xf32>
    %cst_80 = arith.constant dense<0.000000e+00> : vector<64xf32>
    %233 = vector.multi_reduction <add>, %232, %cst_80 [1] : vector<64x32xf32> to vector<64xf32>
    %234 = vector.shape_cast %233 : vector<64xf32> to vector<64x1xf32>
    %235 = vector.extract_strided_slice %228 {offsets = [0, 32], sizes = [64, 32], strides = [1, 1]} : vector<64x64xf32> to vector<64x32xf32>
    %cst_81 = arith.constant 0.000000e+00 : f32
    %236 = vector.broadcast %cst_81 : f32 to vector<64x32xf32>
    %237 = arith.cmpf ogt, %235, %236 : vector<64x32xf32>
    %cst_82 = arith.constant 2.000000e-01 : f32
    %238 = vector.broadcast %cst_82 : f32 to vector<64x32xf32>
    %239 = arith.mulf %238, %235 : vector<64x32xf32>
    %240 = arith.select %237, %235, %239 : vector<64x32xi1>, vector<64x32xf32>
    %241 = tpu.concatenate %80, %119, %158, %197, %234 in 1 : vector<64x1xf32>, vector<64x1xf32>, vector<64x1xf32>, vector<64x1xf32>, vector<64x1xf32> -> vector<64x5xf32>
    %cst_83 = arith.constant dense<0xFF800000> : vector<64xf32>
    %242 = vector.multi_reduction <maximumf>, %241, %cst_83 [1] : vector<64x5xf32> to vector<64xf32>
    %243 = vector.shape_cast %242 : vector<64xf32> to vector<64x1xf32>
    %cst_84 = arith.constant dense<0xFF800000> : vector<1xf32>
    %244 = vector.multi_reduction <maximumf>, %243, %cst_84 [0] : vector<64x1xf32> to vector<1xf32>
    %245 = vector.shape_cast %244 : vector<1xf32> to vector<1x1xf32>
    %246 = vector.broadcast %245 : vector<1x1xf32> to vector<64x5xf32>
    %247 = arith.subf %241, %246 : vector<64x5xf32>
    %248 = math.exp %247 : vector<64x5xf32>
    %cst_85 = arith.constant dense<0.000000e+00> : vector<64xf32>
    %249 = vector.multi_reduction <add>, %248, %cst_85 [1] : vector<64x5xf32> to vector<64xf32>
    %250 = vector.shape_cast %249 : vector<64xf32> to vector<64x1xf32>
    %cst_86 = arith.constant dense<0.000000e+00> : vector<1xf32>
    %251 = vector.multi_reduction <add>, %250, %cst_86 [0] : vector<64x1xf32> to vector<1xf32>
    %252 = vector.shape_cast %251 : vector<1xf32> to vector<1x1xf32>
    %253 = tpu.reciprocal %252 {approx = true} : vector<1x1xf32> -> vector<1x1xf32>
    %254 = vector.broadcast %253 : vector<1x1xf32> to vector<64x5xf32>
    %255 = arith.mulf %248, %254 : vector<64x5xf32>
    %256 = vector.extract_strided_slice %255 {offsets = [0, 0], sizes = [64, 1], strides = [1, 1]} : vector<64x5xf32> to vector<64x1xf32>
    %257 = vector.broadcast %256 : vector<64x1xf32> to vector<64x32xf32>
    %258 = arith.mulf %257, %86 : vector<64x32xf32>
    %259 = vector.extract_strided_slice %255 {offsets = [0, 1], sizes = [64, 1], strides = [1, 1]} : vector<64x5xf32> to vector<64x1xf32>
    %260 = vector.broadcast %259 : vector<64x1xf32> to vector<64x32xf32>
    %261 = arith.mulf %260, %125 : vector<64x32xf32>
    %262 = arith.addf %258, %261 : vector<64x32xf32>
    %263 = vector.extract_strided_slice %255 {offsets = [0, 2], sizes = [64, 1], strides = [1, 1]} : vector<64x5xf32> to vector<64x1xf32>
    %264 = vector.broadcast %263 : vector<64x1xf32> to vector<64x32xf32>
    %265 = arith.mulf %264, %164 : vector<64x32xf32>
    %266 = arith.addf %262, %265 : vector<64x32xf32>
    %267 = vector.extract_strided_slice %255 {offsets = [0, 3], sizes = [64, 1], strides = [1, 1]} : vector<64x5xf32> to vector<64x1xf32>
    %268 = vector.broadcast %267 : vector<64x1xf32> to vector<64x32xf32>
    %269 = arith.mulf %268, %203 : vector<64x32xf32>
    %270 = arith.addf %266, %269 : vector<64x32xf32>
    %271 = vector.extract_strided_slice %255 {offsets = [0, 4], sizes = [64, 1], strides = [1, 1]} : vector<64x5xf32> to vector<64x1xf32>
    %272 = vector.broadcast %271 : vector<64x1xf32> to vector<64x32xf32>
    %273 = arith.mulf %272, %240 : vector<64x32xf32>
    %274 = arith.addf %270, %273 : vector<64x32xf32>
    %cst_87 = arith.constant dense<0.000000e+00> : vector<64xf32>
    %275 = vector.multi_reduction <add>, %255, %cst_87 [1] : vector<64x5xf32> to vector<64xf32>
    %276 = vector.shape_cast %275 : vector<64xf32> to vector<64x1xf32>
    %cst_88 = arith.constant dense<0.000000e+00> : vector<64x32xf32>
    %277 = tpu.matmul %274, %16, %cst_88 {dimension_numbers = #tpu.dot_dimension_numbers<[1], [0], [0], [1], [0, 0, 1, 1], [], []>} : vector<64x32xf32>, vector<32x32xf32>, vector<64x32xf32> -> vector<64x32xf32>
    %278 = vector.broadcast %276 : vector<64x1xf32> to vector<64x32xf32>
    %279 = vector.broadcast %17 : vector<1x32xf32> to vector<64x32xf32>
    %280 = arith.mulf %278, %279 : vector<64x32xf32>
    %281 = arith.addf %277, %280 : vector<64x32xf32>
    %282 = arith.addf %281, %7 : vector<64x32xf32>
    %cst_89 = arith.constant 0.000000e+00 : f32
    %283 = vector.broadcast %cst_89 : f32 to vector<64x32xf32>
    %284 = arith.cmpf ogt, %282, %283 : vector<64x32xf32>
    %cst_90 = arith.constant 2.000000e-01 : f32
    %285 = vector.broadcast %cst_90 : f32 to vector<64x32xf32>
    %286 = arith.mulf %285, %282 : vector<64x32xf32>
    %287 = arith.select %284, %282, %286 : vector<64x32xi1>, vector<64x32xf32>
    %c0_91 = arith.constant 0 : index
    %c0_92 = arith.constant 0 : index
    %288 = vector.load %arg13[%c0_91, %c0_92] : memref<64x32xf32, #tpu.memory_space<vmem>>, vector<64x32xf32>
    tpu.vector_store %arg13[%c0_91, %c0_92], %287 {strides = array<i32>} : memref<64x32xf32, #tpu.memory_space<vmem>>, vector<64x32xf32>,
    return
  }
}

</mosaic_0001>

<llo_original>
// kernel: tpu_custom_call.1
$region0: #{tpu_custom_call.1}
  #allocation0 [shape = 'u32[]', space=smem, size = 0x4, offset = 0x4, fixed_abs, tag = 'smem constant byte address 0x4 - core index']
  #allocation1 [shape = 'u32[144,128]{1,0:T(1,128)}', space=vmem, size = 0x12000, scoped, tag = 'internal scratch']
  %s0 = inlined_call_operand.vmem [shape: f32[64,4], index: 0, kind: input, shape index: {}]
  %s1 = inlined_call_operand.vmem [shape: f32[64,1], index: 1, kind: input, shape index: {}]
  %s2 = inlined_call_operand.vmem [shape: f32[64,1], index: 2, kind: input, shape index: {}]
  %s3 = inlined_call_operand.vmem [shape: f32[1,64], index: 3, kind: input, shape index: {}]
  %s4 = inlined_call_operand.vmem [shape: f32[4,32], index: 4, kind: input, shape index: {}]
  %s5 = inlined_call_operand.vmem [shape: f32[1,32], index: 5, kind: input, shape index: {}]
  %s6 = inlined_call_operand.vmem [shape: f32[32,64], index: 6, kind: input, shape index: {}]
  %s7 = inlined_call_operand.vmem [shape: f32[32,64], index: 7, kind: input, shape index: {}]
  %s8 = inlined_call_operand.vmem [shape: f32[1,64], index: 8, kind: input, shape index: {}]
  %s9 = inlined_call_operand.vmem [shape: f32[1,64], index: 9, kind: input, shape index: {}]
  %s10 = inlined_call_operand.vmem [shape: f32[1,32], index: 10, kind: input, shape index: {}]
  %s11 = inlined_call_operand.vmem [shape: f32[32,32], index: 11, kind: input, shape index: {}]
  %s12 = inlined_call_operand.vmem [shape: f32[1,32], index: 12, kind: input, shape index: {}]
  %s13 = inlined_call_operand.vmem [shape: f32[64,32], index: 13, kind: output, shape index: {}]
  %s14 = sld [smem:[#allocation0]]
  $region62: #{tpu_custom_call.1} parent=0
    _
  %s16 = ssub.s32 1, %s14
  %s17 = scalar_select 0, %s16, %s14
  // Predicated region
  $region2: #{tpu_custom_call.1} parent=0 // pred_check
    _
  $region3: #{tpu_custom_call.1} parent=0 // pred_check_branch
    %19 = sbr.rel (0) target = $region5
  $region4: #{tpu_custom_call.1} parent=0 // pred_region
    _
  $region5: #{tpu_custom_call.1} parent=0 // pred_fallthru
    _
  // Predicated region
  $region6: #{tpu_custom_call.1} parent=0 // pred_check
    _
  $region7: #{tpu_custom_call.1} parent=0 // pred_check_branch
    %21 = sbr.rel (0) target = $region9
  $region8: #{tpu_custom_call.1} parent=0 // pred_region
    _
  $region9: #{tpu_custom_call.1} parent=0 // pred_fallthru
    _
  // Predicated region
  $region10: #{tpu_custom_call.1} parent=0 // pred_check
    _
  $region11: #{tpu_custom_call.1} parent=0 // pred_check_branch
    %23 = sbr.rel (0) target = $region13
  $region12: #{tpu_custom_call.1} parent=0 // pred_region
    _
  $region13: #{tpu_custom_call.1} parent=0 // pred_fallthru
    _
  // Predicated region
  $region14: #{tpu_custom_call.1} parent=0 // pred_check
    _
  $region15: #{tpu_custom_call.1} parent=0 // pred_check_branch
    %25 = sbr.rel (0) target = $region17
  $region16: #{tpu_custom_call.1} parent=0 // pred_region
    _
  $region17: #{tpu_custom_call.1} parent=0 // pred_fallthru
    _
  // Predicated region
  $region18: #{tpu_custom_call.1} parent=0 // pred_check
    _
  $region19: #{tpu_custom_call.1} parent=0 // pred_check_branch
    %27 = sbr.rel (0) target = $region21
  $region20: #{tpu_custom_call.1} parent=0 // pred_region
    _
  $region21: #{tpu_custom_call.1} parent=0 // pred_fallthru
    _
  // Predicated region
  $region22: #{tpu_custom_call.1} parent=0 // pred_check
    _
  $region23: #{tpu_custom_call.1} parent=0 // pred_check_branch
    %29 = sbr.rel (0) target = $region25
  $region24: #{tpu_custom_call.1} parent=0 // pred_region
    _
  $region25: #{tpu_custom_call.1} parent=0 // pred_fallthru
    _
  // Predicated region
  $region26: #{tpu_custom_call.1} parent=0 // pred_check
    _
  $region27: #{tpu_custom_call.1} parent=0 // pred_check_branch
    %31 = sbr.rel (0) target = $region29
  $region28: #{tpu_custom_call.1} parent=0 // pred_region
    _
  $region29: #{tpu_custom_call.1} parent=0 // pred_fallthru
    _
  // Predicated region
  $region30: #{tpu_custom_call.1} parent=0 // pred_check
    _
  $region31: #{tpu_custom_call.1} parent=0 // pred_check_branch
    %33 = sbr.rel (0) target = $region33
  $region32: #{tpu_custom_call.1} parent=0 // pred_region
    _
  $region33: #{tpu_custom_call.1} parent=0 // pred_fallthru
    _
  // Predicated region
  $region34: #{tpu_custom_call.1} parent=0 // pred_check
    _
  $region35: #{tpu_custom_call.1} parent=0 // pred_check_branch
    %35 = sbr.rel (0) target = $region37
  $region36: #{tpu_custom_call.1} parent=0 // pred_region
    _
  $region37: #{tpu_custom_call.1} parent=0 // pred_fallthru
    _
  // Predicated region
  $region38: #{tpu_custom_call.1} parent=0 // pred_check
    _
  $region39: #{tpu_custom_call.1} parent=0 // pred_check_branch
    %37 = sbr.rel (0) target = $region41
  $region40: #{tpu_custom_call.1} parent=0 // pred_region
    _
  $region41: #{tpu_custom_call.1} parent=0 // pred_fallthru
    _
  // Predicated region
  $region42: #{tpu_custom_call.1} parent=0 // pred_check
    _
  $region43: #{tpu_custom_call.1} parent=0 // pred_check_branch
    %39 = sbr.rel (0) target = $region45
  $region44: #{tpu_custom_call.1} parent=0 // pred_region
    _
  $region45: #{tpu_custom_call.1} parent=0 // pred_fallthru
    _
  // Predicated region
  $region46: #{tpu_custom_call.1} parent=0 // pred_check
    _
  $region47: #{tpu_custom_call.1} parent=0 // pred_check_branch
    %41 = sbr.rel (0) target = $region49
  $region48: #{tpu_custom_call.1} parent=0 // pred_region
    _
  $region49: #{tpu_custom_call.1} parent=0 // pred_fallthru
    _
  // Predicated region
  $region50: #{tpu_custom_call.1} parent=0 // pred_check
    _
  $region51: #{tpu_custom_call.1} parent=0 // pred_check_branch
    %43 = sbr.rel (0) target = $region53
  $region52: #{tpu_custom_call.1} parent=0 // pred_region
    _
  $region53: #{tpu_custom_call.1} parent=0 // pred_fallthru
    _
  %v45 = vld [vmem:[%s0] sm:$0xff]
  %v46 = vld [vmem:[%s0 + $0x8] sm:$0xff]
  %v47 = vld [vmem:[%s0 + $0x10] sm:$0xff]
  %v48 = vld [vmem:[%s0 + $0x18] sm:$0xff]
  %v49 = vld [vmem:[%s0 + $0x20] sm:$0xff]
  %v50 = vld [vmem:[%s0 + $0x28] sm:$0xff]
  %v51 = vld [vmem:[%s0 + $0x30] sm:$0xff]
  %v52 = vld [vmem:[%s0 + $0x38] sm:$0xff]
  %v53 = vld [vmem:[%s4] sm:$0xf]
  %v54 = vld [vmem:[%s5] sm:$0x1]
  %v56 = vlaneseq
  %v57 = vshrl.u32 %v56, 7
  %v58 = vsub.s32 0, %v57
  %v59 = vrot.slane %v54, %v58
  %vm61 = vcmask 31744
  %v63 = vsel %vm61, %v45, 0
  %v66 = vsel %vm61, %v46, 0
  %v69 = vsel %vm61, %v47, 0
  %v72 = vsel %vm61, %v48, 0
  %v75 = vsel %vm61, %v49, 0
  %v78 = vsel %vm61, %v50, 0
  %v81 = vsel %vm61, %v51, 0
  %v84 = vsel %vm61, %v52, 0
  %vm86 = vcmask 1043456
  %v88 = vsel %vm86, %v53, 0
  %90 = vmatprep.subr.mxu0 0.0
  %91 = vmatpush1.msra.mxu0 %v88
  %92 = vmatprep.subr.mxu0 0.0
  %93 = vmatpush1.msra.mxu0 0.0
  %94 = vmatprep.subr.mxu0 0.0
  %95 = vmatpush1.msra.mxu0 0.0
  %96 = vmatprep.subr.mxu0 0.0
  %97 = vmatpush1.msra.mxu0 0.0
  %98 = vmatprep.subr.mxu0 0.0
  %99 = vmatpush1.msra.mxu0 0.0
  %100 = vmatprep.subr.mxu0 0.0
  %101 = vmatpush1.msra.mxu0 0.0
  %102 = vmatprep.subr.mxu0 0.0
  %103 = vmatpush1.msra.mxu0 0.0
  %104 = vmatprep.subr.mxu0 0.0
  %105 = vmatpush1.msra.mxu0 0.0
  %106 = vmatprep.subr.mxu0 0.0
  %107 = vmatpush1.msra.mxu0 0.0
  %108 = vmatprep.subr.mxu0 0.0
  %109 = vmatpush1.msra.mxu0 0.0
  %110 = vmatprep.subr.mxu0 0.0
  %111 = vmatpush1.msra.mxu0 0.0
  %112 = vmatprep.subr.mxu0 0.0
  %113 = vmatpush1.msra.mxu0 0.0
  %114 = vmatprep.subr.mxu0 0.0
  %115 = vmatpush1.msra.mxu0 0.0
  %116 = vmatprep.subr.mxu0 0.0
  %117 = vmatpush1.msra.mxu0 0.0
  %118 = vmatprep.subr.mxu0 0.0
  %119 = vmatpush1.msra.mxu0 0.0
  %120 = vmatprep.subr.mxu0 0.0
  %121 = vmatpush1.msra.mxu0 0.0
  %122 = vmatprep.subr.mxu0 0.0
  %123 = vmatpush1.msra.mxu0 0.0
  %124 = vmatprep.subr.mxu0 0.0
  %125 = vmatpush1.msra.mxu0 0.0
  %126 = vmatprep.subr.mxu0 0.0
  %127 = vmatpush1.msra.mxu0 0.0
  %128 = vmatprep.subr.mxu0 0.0
  %129 = vmatpush1.msra.mxu0 0.0
  %130 = vmatprep.subr.mxu0 0.0
  %131 = vmatpush1.msra.mxu0 0.0
  %132 = vmatprep.subr.mxu0 0.0
  %133 = vmatpush1.msra.mxu0 0.0
  %134 = vmatprep.subr.mxu0 0.0
  %135 = vmatpush1.msra.mxu0 0.0
  %136 = vmatprep.subr.mxu0 0.0
  %137 = vmatpush1.msra.mxu0 0.0
  %138 = vmatprep.subr.mxu0 0.0
  %139 = vmatpush1.msra.mxu0 0.0
  %140 = vmatprep.subr.mxu0 0.0
  %141 = vmatpush1.msra.mxu0 0.0
  %142 = vmatprep.subr.mxu0 0.0
  %143 = vmatpush1.msra.mxu0 0.0
  %144 = vmatprep.subr.mxu0 0.0
  %145 = vmatpush1.msra.mxu0 0.0
  %146 = vmatprep.subr.mxu0 0.0
  %147 = vmatpush1.msra.mxu0 0.0
  %148 = vmatprep.subr.mxu0 0.0
  %149 = vmatpush1.msra.mxu0 0.0
  %150 = vmatprep.subr.mxu0 0.0
  %151 = vmatpush1.msra.mxu0 0.0
  %152 = vmatprep.subr.mxu0 0.0
  %153 = vmatpush1.msra.mxu0 0.0
  %154 = vmatprep.mubr.f32.mxu0 0.0
  %155 = vmatmul.mubr.f32.gmra.mrb[0].mxu0 %v63
  %v156 = vpop.f32.mrb[0].mxu0
  %v157 = vadd.f32 %v59, %v156
  %v158 = vpop.f32.mrb[0].mxu0
  %159 = vmatprep.mubr.f32.mxu0 0.0
  %160 = vmatmul.mubr.f32.gmra.mrb[0].mxu0 %v66
  %v161 = vpop.f32.mrb[0].mxu0
  %v162 = vadd.f32 %v59, %v161
  %v163 = vpop.f32.mrb[0].mxu0
  %164 = vmatprep.mubr.f32.mxu0 0.0
  %165 = vmatmul.mubr.f32.gmra.mrb[0].mxu0 %v69
  %v166 = vpop.f32.mrb[0].mxu0
  %v167 = vadd.f32 %v59, %v166
  %v168 = vpop.f32.mrb[0].mxu0
  %169 = vmatprep.mubr.f32.mxu0 0.0
  %170 = vmatmul.mubr.f32.gmra.mrb[0].mxu0 %v72
  %v171 = vpop.f32.mrb[0].mxu0
  %v172 = vadd.f32 %v59, %v171
  %v173 = vpop.f32.mrb[0].mxu0
  %174 = vmatprep.mubr.f32.mxu0 0.0
  %175 = vmatmul.mubr.f32.gmra.mrb[0].mxu0 %v75
  %v176 = vpop.f32.mrb[0].mxu0
  %v177 = vadd.f32 %v59, %v176
  %v178 = vpop.f32.mrb[0].mxu0
  %179 = vmatprep.mubr.f32.mxu0 0.0
  %180 = vmatmul.mubr.f32.gmra.mrb[0].mxu0 %v78
  %v181 = vpop.f32.mrb[0].mxu0
  %v182 = vadd.f32 %v59, %v181
  %v183 = vpop.f32.mrb[0].mxu0
  %184 = vmatprep.mubr.f32.mxu0 0.0
  %185 = vmatmul.mubr.f32.gmra.mrb[0].mxu0 %v81
  %v186 = vpop.f32.mrb[0].mxu0
  %v187 = vadd.f32 %v59, %v186
  %v188 = vpop.f32.mrb[0].mxu0
  %189 = vmatprep.mubr.f32.mxu0 0.0
  %190 = vmatmul.mubr.f32.gmra.mrb[0].mxu0 %v84
  %v191 = vpop.f32.mrb[0].mxu0
  %v192 = vadd.f32 %v59, %v191
  %v193 = vpop.f32.mrb[0].mxu0
  %194 = vdwg.mxu0
  %v195 = vmax.f32 %v157, 0.0
  %v196 = vmax.f32 %v162, 0.0
  %v197 = vmax.f32 %v167, 0.0
  %v198 = vmax.f32 %v172, 0.0
  %v199 = vmax.f32 %v177, 0.0
  %v200 = vmax.f32 %v182, 0.0
  %v201 = vmax.f32 %v187, 0.0
  %v202 = vmax.f32 %v192, 0.0
  %v203 = vld [vmem:[%s1] sm:$0xff]
  %v204 = vld [vmem:[%s1 + $0x8] sm:$0xff]
  %v205 = vld [vmem:[%s1 + $0x10] sm:$0xff]
  %v206 = vld [vmem:[%s1 + $0x18] sm:$0xff]
  %v207 = vld [vmem:[%s1 + $0x20] sm:$0xff]
  %v208 = vld [vmem:[%s1 + $0x28] sm:$0xff]
  %v209 = vld [vmem:[%s1 + $0x30] sm:$0xff]
  %v210 = vld [vmem:[%s1 + $0x38] sm:$0xff]
  %v211 = vld [vmem:[%s2] sm:$0xff]
  %v212 = vld [vmem:[%s2 + $0x8] sm:$0xff]
  %v213 = vld [vmem:[%s2 + $0x10] sm:$0xff]
  %v214 = vld [vmem:[%s2 + $0x18] sm:$0xff]
  %v215 = vld [vmem:[%s2 + $0x20] sm:$0xff]
  %v216 = vld [vmem:[%s2 + $0x28] sm:$0xff]
  %v217 = vld [vmem:[%s2 + $0x30] sm:$0xff]
  %v218 = vld [vmem:[%s2 + $0x38] sm:$0xff]
  %v219 = vld [vmem:[%s3] sm:$0x1]
  %v220 = vld [vmem:[%s6] sm:$0xff]
  %v221 = vld [vmem:[%s6 + $0x8] sm:$0xff]
  %v222 = vld [vmem:[%s6 + $0x10] sm:$0xff]
  %v223 = vld [vmem:[%s6 + $0x18] sm:$0xff]
  %v224 = vld [vmem:[%s7] sm:$0xff]
  %v225 = vld [vmem:[%s7 + $0x8] sm:$0xff]
  %v226 = vld [vmem:[%s7 + $0x10] sm:$0xff]
  %v227 = vld [vmem:[%s7 + $0x18] sm:$0xff]
  %v228 = vld [vmem:[%s8] sm:$0x1]
  %v229 = vld [vmem:[%s9] sm:$0x1]
  %v230 = vld [vmem:[%s10] sm:$0x1]
  %v231 = vld [vmem:[%s11] sm:$0xff]
  %v232 = vld [vmem:[%s11 + $0x8] sm:$0xff]
  %v233 = vld [vmem:[%s11 + $0x10] sm:$0xff]
  %v234 = vld [vmem:[%s11 + $0x18] sm:$0xff]
  %v235 = vld [vmem:[%s12] sm:$0x1]
  %v236 = vlaneseq
  %v237 = vshrl.u32 %v236, 7
  %v238 = vadd.s32 %v237, 8
  %v239 = vadd.s32 %v237, 16
  %v240 = vadd.s32 %v237, 24
  %v241 = vadd.s32 %v237, 32
  %v242 = vadd.s32 %v237, 40
  %v243 = vadd.s32 %v237, 48
  %v244 = vadd.s32 %v237, 56
  %v245 = vlaneseq
  %v246 = vand.u32 %v245, 127
  %v247 = vcvt.s32.f32 %v246
  %vm248 = vcmask 261120
  %v250 = vsel %vm248, %v195, 0
  %v253 = vsel %vm248, %v196, 0
  %v256 = vsel %vm248, %v197, 0
  %v259 = vsel %vm248, %v198, 0
  %v262 = vsel %vm248, %v199, 0
  %v265 = vsel %vm248, %v200, 0
  %v268 = vsel %vm248, %v201, 0
  %v271 = vsel %vm248, %v202, 0
  %273 = vmatprep.subr.mxu0 0.0
  %274 = vmatpush1.xpose.msra.mxu0 %v250
  %275 = vmatprep.subr.mxu0 0.0
  %276 = vmatpush1.xpose.msra.mxu0 %v253
  %277 = vmatprep.subr.mxu0 0.0
  %278 = vmatpush1.xpose.msra.mxu0 %v256
  %279 = vmatprep.subr.mxu0 0.0
  %280 = vmatpush1.xpose.msra.mxu0 %v259
  %281 = vmatprep.subr.mxu0 0.0
  %282 = vmatpush1.xpose.msra.mxu0 %v262
  %283 = vmatprep.subr.mxu0 0.0
  %284 = vmatpush1.xpose.msra.mxu0 %v265
  %285 = vmatprep.subr.mxu0 0.0
  %286 = vmatpush1.xpose.msra.mxu0 %v268
  %287 = vmatprep.subr.mxu0 0.0
  %288 = vmatpush1.xpose.msra.mxu0 %v271
  %289 = vmatprep.subr.mxu0 0.0
  %290 = vmatpush1.xpose.msra.mxu0 0.0
  %291 = vmatprep.subr.mxu0 0.0
  %292 = vmatpush1.xpose.msra.mxu0 0.0
  %293 = vmatprep.subr.mxu0 0.0
  %294 = vmatpush1.xpose.msra.mxu0 0.0
  %295 = vmatprep.subr.mxu0 0.0
  %296 = vmatpush1.xpose.msra.mxu0 0.0
  %297 = vmatprep.subr.mxu0 0.0
  %298 = vmatpush1.xpose.msra.mxu0 0.0
  %299 = vmatprep.subr.mxu0 0.0
  %300 = vmatpush1.xpose.msra.mxu0 0.0
  %301 = vmatprep.subr.mxu0 0.0
  %302 = vmatpush1.xpose.msra.mxu0 0.0
  %303 = vmatprep.subr.mxu0 0.0
  %304 = vmatpush1.xpose.msra.mxu0 0.0
  %305 = vmatprep.subr.mxu0 0.0
  %306 = vmatpush1.xpose.msra.mxu0 0.0
  %307 = vmatprep.subr.mxu0 0.0
  %308 = vmatpush1.xpose.msra.mxu0 0.0
  %309 = vmatprep.subr.mxu0 0.0
  %310 = vmatpush1.xpose.msra.mxu0 0.0
  %311 = vmatprep.subr.mxu0 0.0
  %312 = vmatpush1.xpose.msra.mxu0 0.0
  %313 = vmatprep.subr.mxu0 0.0
  %314 = vmatpush1.xpose.msra.mxu0 0.0
  %315 = vmatprep.subr.mxu0 0.0
  %316 = vmatpush1.xpose.msra.mxu0 0.0
  %317 = vmatprep.subr.mxu0 0.0
  %318 = vmatpush1.xpose.msra.mxu0 0.0
  %319 = vmatprep.subr.mxu0 0.0
  %320 = vmatpush1.xpose.msra.mxu0 0.0
  %321 = vmatprep.subr.mxu0 0.0
  %322 = vmatpush1.xpose.msra.mxu0 0.0
  %323 = vmatprep.subr.mxu0 0.0
  %324 = vmatpush1.xpose.msra.mxu0 0.0
  %325 = vmatprep.subr.mxu0 0.0
  %326 = vmatpush1.xpose.msra.mxu0 0.0
  %327 = vmatprep.subr.mxu0 0.0
  %328 = vmatpush1.xpose.msra.mxu0 0.0
  %329 = vmatprep.subr.mxu0 0.0
  %330 = vmatpush1.xpose.msra.mxu0 0.0
  %331 = vmatprep.subr.mxu0 0.0
  %332 = vmatpush1.xpose.msra.mxu0 0.0
  %333 = vmatprep.subr.mxu0 0.0
  %334 = vmatpush1.xpose.msra.mxu0 0.0
  %335 = vmatprep.subr.mxu0 0.0
  %336 = vmatpush1.xpose.msra.mxu0 0.0
  %337 = vmatprep.mubr.f32.mxu0 0.0
  %338 = vmatmul.mubr.f32.gmra.mrb[0].mxu0 %v250
  %v339 = vpop.f32.mrb[0].mxu0
  %v340 = vadd.f32 0.0, %v339
  %v341 = vpop.f32.mrb[0].mxu0
  %342 = vmatprep.mubr.f32.mxu0 0.0
  %343 = vmatmul.mubr.f32.gmra.mrb[0].mxu0 %v253
  %v344 = vpop.f32.mrb[0].mxu0
  %v345 = vadd.f32 0.0, %v344
  %v346 = vpop.f32.mrb[0].mxu0
  %347 = vmatprep.mubr.f32.mxu0 0.0
  %348 = vmatmul.mubr.f32.gmra.mrb[0].mxu0 %v256
  %v349 = vpop.f32.mrb[0].mxu0
  %v350 = vadd.f32 0.0, %v349
  %v351 = vpop.f32.mrb[0].mxu0
  %352 = vmatprep.mubr.f32.mxu0 0.0
  %353 = vmatmul.mubr.f32.gmra.mrb[0].mxu0 %v259
  %v354 = vpop.f32.mrb[0].mxu0
  %v355 = vadd.f32 0.0, %v354
  %v356 = vpop.f32.mrb[0].mxu0
  %357 = vmatprep.mubr.f32.mxu0 0.0
  %358 = vmatmul.mubr.f32.gmra.mrb[0].mxu0 %v262
  %v359 = vpop.f32.mrb[0].mxu0
  %v360 = vadd.f32 0.0, %v359
  %v361 = vpop.f32.mrb[0].mxu0
  %362 = vmatprep.mubr.f32.mxu0 0.0
  %363 = vmatmul.mubr.f32.gmra.mrb[0].mxu0 %v265
  %v364 = vpop.f32.mrb[0].mxu0
  %v365 = vadd.f32 0.0, %v364
  %v366 = vpop.f32.mrb[0].mxu0
  %367 = vmatprep.mubr.f32.mxu0 0.0
  %368 = vmatmul.mubr.f32.gmra.mrb[0].mxu0 %v268
  %v369 = vpop.f32.mrb[0].mxu0
  %v370 = vadd.f32 0.0, %v369
  %v371 = vpop.f32.mrb[0].mxu0
  %372 = vmatprep.mubr.f32.mxu0 0.0
  %373 = vmatmul.mubr.f32.gmra.mrb[0].mxu0 %v271
  %v374 = vpop.f32.mrb[0].mxu0
  %v375 = vadd.f32 0.0, %v374
  %v376 = vpop.f32.mrb[0].mxu0
  %377 = vdwg.mxu0
  %v378 = vmul.f32 %v195, %v195
  %v379 = vmul.f32 %v196, %v196
  %v380 = vmul.f32 %v197, %v197
  %v381 = vmul.f32 %v198, %v198
  %v382 = vmul.f32 %v199, %v199
  %v383 = vmul.f32 %v200, %v200
  %v384 = vmul.f32 %v201, %v201
  %v385 = vmul.f32 %v202, %v202
  %v386 = vsel %vm248, %v378, 0.0
  %387 = vadd.xlane.f32.xlu0 %v386
  %v388 = vpop.xlane.xlu0 %387
  %v389 = vsel %vm248, %v379, 0.0
  %390 = vadd.xlane.f32.xlu0 %v389
  %v391 = vpop.xlane.xlu0 %390
  %v392 = vsel %vm248, %v380, 0.0
  %393 = vadd.xlane.f32.xlu0 %v392
  %v394 = vpop.xlane.xlu0 %393
  %v395 = vsel %vm248, %v381, 0.0
  %396 = vadd.xlane.f32.xlu0 %v395
  %v397 = vpop.xlane.xlu0 %396
  %v398 = vsel %vm248, %v382, 0.0
  %399 = vadd.xlane.f32.xlu0 %v398
  %v400 = vpop.xlane.xlu0 %399
  %v401 = vsel %vm248, %v383, 0.0
  %402 = vadd.xlane.f32.xlu0 %v401
  %v403 = vpop.xlane.xlu0 %402
  %v404 = vsel %vm248, %v384, 0.0
  %405 = vadd.xlane.f32.xlu0 %v404
  %v406 = vpop.xlane.xlu0 %405
  %v407 = vsel %vm248, %v385, 0.0
  %408 = vadd.xlane.f32.xlu0 %v407
  %v409 = vpop.xlane.xlu0 %408
  %vm410 = vcmp.eq.s32.totalorder %v237, %v246
  %vm411 = vcmp.eq.s32.totalorder %v238, %v246
  %vm412 = vcmp.eq.s32.totalorder %v239, %v246
  %vm413 = vcmp.eq.s32.totalorder %v240, %v246
  %vm414 = vcmp.eq.s32.totalorder %v241, %v246
  %vm415 = vcmp.eq.s32.totalorder %v242, %v246
  %vm416 = vcmp.eq.s32.totalorder %v243, %v246
  %vm417 = vcmp.eq.s32.totalorder %v244, %v246
  %v418 = vsel %vm410, %v340, 0.0
  %v419 = vsel %vm411, %v345, 0.0
  %v420 = vsel %vm412, %v350, 0.0
  %v421 = vsel %vm413, %v355, 0.0
  %v422 = vsel %vm414, %v360, 0.0
  %v423 = vsel %vm415, %v365, 0.0
  %v424 = vsel %vm416, %v370, 0.0
  %v425 = vsel %vm417, %v375, 0.0
  %vm426 = vcmask 523264
  %v427 = vsel %vm426, %v418, 0.0
  %v428 = vsel %vm426, %v419, 0.0
  %v429 = vadd.f32 %v427, %v428
  %v430 = vsel %vm426, %v420, 0.0
  %v431 = vadd.f32 %v429, %v430
  %v432 = vsel %vm426, %v421, 0.0
  %v433 = vadd.f32 %v431, %v432
  %v434 = vsel %vm426, %v422, 0.0
  %v435 = vadd.f32 %v433, %v434
  %v436 = vsel %vm426, %v423, 0.0
  %v437 = vadd.f32 %v435, %v436
  %v438 = vsel %vm426, %v424, 0.0
  %v439 = vadd.f32 %v437, %v438
  %v440 = vsel %vm426, %v425, 0.0
  %v441 = vadd.f32 %v439, %v440
  %v442 = vrot.slane %v441, 4
  %v443 = vadd.f32 %v441, %v442
  %v444 = vrot.slane %v443, 2
  %v445 = vadd.f32 %v443, %v444
  %v446 = vrot.slane %v445, 1
  %v447 = vadd.f32 %v445, %v446
  %v448 = vmul.f32 %v340, 2.0
  %v449 = vmul.f32 %v345, 2.0
  %v450 = vmul.f32 %v350, 2.0
  %v451 = vmul.f32 %v355, 2.0
  %v452 = vmul.f32 %v360, 2.0
  %v453 = vmul.f32 %v365, 2.0
  %v454 = vmul.f32 %v370, 2.0
  %v455 = vmul.f32 %v375, 2.0
  %v456 = vsub.f32 %v448, %v388
  %v457 = vsub.f32 %v449, %v391
  %v458 = vsub.f32 %v450, %v394
  %v459 = vsub.f32 %v451, %v397
  %v460 = vsub.f32 %v452, %v400
  %v461 = vsub.f32 %v453, %v403
  %v462 = vsub.f32 %v454, %v406
  %v463 = vsub.f32 %v455, %v409
  %v464 = vsub.f32 %v456, %v447
  %v465 = vsub.f32 %v457, %v447
  %v466 = vsub.f32 %v458, %v447
  %v467 = vsub.f32 %v459, %v447
  %v468 = vsub.f32 %v460, %v447
  %v469 = vsub.f32 %v461, %v447
  %v470 = vsub.f32 %v462, %v447
  %v471 = vsub.f32 %v463, %v447
  %473 = vset.pattern.permute.xlu0 0
  %474 = vperm.xlu0 %473, %v211
  %v475 = vpop.permute.xlu0 %474
  %478 = vset.pattern.permute.xlu0 0
  %479 = vperm.xlu0 %478, %v212
  %v480 = vpop.permute.xlu0 %479
  %483 = vset.pattern.permute.xlu0 0
  %484 = vperm.xlu0 %483, %v213
  %v485 = vpop.permute.xlu0 %484
  %488 = vset.pattern.permute.xlu0 0
  %489 = vperm.xlu0 %488, %v214
  %v490 = vpop.permute.xlu0 %489
  %493 = vset.pattern.permute.xlu0 0
  %494 = vperm.xlu0 %493, %v215
  %v495 = vpop.permute.xlu0 %494
  %498 = vset.pattern.permute.xlu0 0
  %499 = vperm.xlu0 %498, %v216
  %v500 = vpop.permute.xlu0 %499
  %503 = vset.pattern.permute.xlu0 0
  %504 = vperm.xlu0 %503, %v217
  %v505 = vpop.permute.xlu0 %504
  %508 = vset.pattern.permute.xlu0 0
  %509 = vperm.xlu0 %508, %v218
  %v510 = vpop.permute.xlu0 %509
  %v513 = vlaneseq
  %v514 = vshrl.u32 %v513, 7
  %v515 = vsub.s32 0, %v514
  %v516 = vrot.slane %v219, %v515
  %vm518 = vcmp.eq.f32.partialorder %v475, %v516
  %vm519 = vcmp.eq.f32.partialorder %v480, %v516
  %vm520 = vcmp.eq.f32.partialorder %v485, %v516
  %vm521 = vcmp.eq.f32.partialorder %v490, %v516
  %vm522 = vcmp.eq.f32.partialorder %v495, %v516
  %vm523 = vcmp.eq.f32.partialorder %v500, %v516
  %vm524 = vcmp.eq.f32.partialorder %v505, %v516
  %vm525 = vcmp.eq.f32.partialorder %v510, %v516
  %vm526 = vcmp.ne.s32.totalorder %v237, %v246
  %vm527 = vcmp.ne.s32.totalorder %v238, %v246
  %vm528 = vcmp.ne.s32.totalorder %v239, %v246
  %vm529 = vcmp.ne.s32.totalorder %v240, %v246
  %vm530 = vcmp.ne.s32.totalorder %v241, %v246
  %vm531 = vcmp.ne.s32.totalorder %v242, %v246
  %vm532 = vcmp.ne.s32.totalorder %v243, %v246
  %vm533 = vcmp.ne.s32.totalorder %v244, %v246
  %vm534 = vmand %vm518, %vm526
  %vm535 = vmand %vm519, %vm527
  %vm536 = vmand %vm520, %vm528
  %vm537 = vmand %vm521, %vm529
  %vm538 = vmand %vm522, %vm530
  %vm539 = vmand %vm523, %vm531
  %vm540 = vmand %vm524, %vm532
  %vm541 = vmand %vm525, %vm533
  %v542 = vsel %vm534, %v464, -3e+38
  %v543 = vsel %vm535, %v465, -3e+38
  %v544 = vsel %vm536, %v466, -3e+38
  %v545 = vsel %vm537, %v467, -3e+38
  %v546 = vsel %vm538, %v468, -3e+38
  %v547 = vsel %vm539, %v469, -3e+38
  %v548 = vsel %vm540, %v470, -3e+38
  %v549 = vsel %vm541, %v471, -3e+38
  %550 = vmatprep.subr.mxu0 0.0
  %551 = vmatpush1.msra.mxu0 %v220
  %552 = vmatprep.subr.mxu0 0.0
  %553 = vmatpush1.msra.mxu0 %v221
  %554 = vmatprep.subr.mxu0 0.0
  %555 = vmatpush1.msra.mxu0 %v222
  %556 = vmatprep.subr.mxu0 0.0
  %557 = vmatpush1.msra.mxu0 %v223
  %558 = vmatprep.subr.mxu0 0.0
  %559 = vmatpush1.msra.mxu0 0.0
  %560 = vmatprep.subr.mxu0 0.0
  %561 = vmatpush1.msra.mxu0 0.0
  %562 = vmatprep.subr.mxu0 0.0
  %563 = vmatpush1.msra.mxu0 0.0
  %564 = vmatprep.subr.mxu0 0.0
  %565 = vmatpush1.msra.mxu0 0.0
  %566 = vmatprep.subr.mxu0 0.0
  %567 = vmatpush1.msra.mxu0 0.0
  %568 = vmatprep.subr.mxu0 0.0
  %569 = vmatpush1.msra.mxu0 0.0
  %570 = vmatprep.subr.mxu0 0.0
  %571 = vmatpush1.msra.mxu0 0.0
  %572 = vmatprep.subr.mxu0 0.0
  %573 = vmatpush1.msra.mxu0 0.0
  %574 = vmatprep.subr.mxu0 0.0
  %575 = vmatpush1.msra.mxu0 0.0
  %576 = vmatprep.subr.mxu0 0.0
  %577 = vmatpush1.msra.mxu0 0.0
  %578 = vmatprep.subr.mxu0 0.0
  %579 = vmatpush1.msra.mxu0 0.0
  %580 = vmatprep.subr.mxu0 0.0
  %581 = vmatpush1.msra.mxu0 0.0
  %582 = vmatprep.subr.mxu0 0.0
  %583 = vmatpush1.msra.mxu0 0.0
  %584 = vmatprep.subr.mxu0 0.0
  %585 = vmatpush1.msra.mxu0 0.0
  %586 = vmatprep.subr.mxu0 0.0
  %587 = vmatpush1.msra.mxu0 0.0
  %588 = vmatprep.subr.mxu0 0.0
  %589 = vmatpush1.msra.mxu0 0.0
  %590 = vmatprep.subr.mxu0 0.0
  %591 = vmatpush1.msra.mxu0 0.0
  %592 = vmatprep.subr.mxu0 0.0
  %593 = vmatpush1.msra.mxu0 0.0
  %594 = vmatprep.subr.mxu0 0.0
  %595 = vmatpush1.msra.mxu0 0.0
  %596 = vmatprep.subr.mxu0 0.0
  %597 = vmatpush1.msra.mxu0 0.0
  %598 = vmatprep.subr.mxu0 0.0
  %599 = vmatpush1.msra.mxu0 0.0
  %600 = vmatprep.subr.mxu0 0.0
  %601 = vmatpush1.msra.mxu0 0.0
  %602 = vmatprep.subr.mxu0 0.0
  %603 = vmatpush1.msra.mxu0 0.0
  %604 = vmatprep.subr.mxu0 0.0
  %605 = vmatpush1.msra.mxu0 0.0
  %606 = vmatprep.subr.mxu0 0.0
  %607 = vmatpush1.msra.mxu0 0.0
  %608 = vmatprep.subr.mxu0 0.0
  %609 = vmatpush1.msra.mxu0 0.0
  %610 = vmatprep.subr.mxu0 0.0
  %611 = vmatpush1.msra.mxu0 0.0
  %612 = vmatprep.subr.mxu0 0.0
  %613 = vmatpush1.msra.mxu0 0.0
  %614 = vmatprep.mubr.f32.mxu0 0.0
  %615 = vmatmul.mubr.f32.gmra.mrb[0].mxu0 %v250
  %v616 = vpop.f32.mrb[0].mxu0
  %v617 = vadd.f32 0.0, %v616
  %v618 = vpop.f32.mrb[0].mxu0
  %619 = vmatprep.mubr.f32.mxu0 0.0
  %620 = vmatmul.mubr.f32.gmra.mrb[0].mxu0 %v253
  %v621 = vpop.f32.mrb[0].mxu0
  %v622 = vadd.f32 0.0, %v621
  %v623 = vpop.f32.mrb[0].mxu0
  %624 = vmatprep.mubr.f32.mxu0 0.0
  %625 = vmatmul.mubr.f32.gmra.mrb[0].mxu0 %v256
  %v626 = vpop.f32.mrb[0].mxu0
  %v627 = vadd.f32 0.0, %v626
  %v628 = vpop.f32.mrb[0].mxu0
  %629 = vmatprep.mubr.f32.mxu0 0.0
  %630 = vmatmul.mubr.f32.gmra.mrb[0].mxu0 %v259
  %v631 = vpop.f32.mrb[0].mxu0
  %v632 = vadd.f32 0.0, %v631
  %v633 = vpop.f32.mrb[0].mxu0
  %634 = vmatprep.mubr.f32.mxu0 0.0
  %635 = vmatmul.mubr.f32.gmra.mrb[0].mxu0 %v262
  %v636 = vpop.f32.mrb[0].mxu0
  %v637 = vadd.f32 0.0, %v636
  %v638 = vpop.f32.mrb[0].mxu0
  %639 = vmatprep.mubr.f32.mxu0 0.0
  %640 = vmatmul.mubr.f32.gmra.mrb[0].mxu0 %v265
  %v641 = vpop.f32.mrb[0].mxu0
  %v642 = vadd.f32 0.0, %v641
  %v643 = vpop.f32.mrb[0].mxu0
  %644 = vmatprep.mubr.f32.mxu0 0.0
  %645 = vmatmul.mubr.f32.gmra.mrb[0].mxu0 %v268
  %v646 = vpop.f32.mrb[0].mxu0
  %v647 = vadd.f32 0.0, %v646
  %v648 = vpop.f32.mrb[0].mxu0
  %649 = vmatprep.mubr.f32.mxu0 0.0
  %650 = vmatmul.mubr.f32.gmra.mrb[0].mxu0 %v271
  %v651 = vpop.f32.mrb[0].mxu0
  %v652 = vadd.f32 0.0, %v651
  %v653 = vpop.f32.mrb[0].mxu0
  %654 = vdwg.mxu0
  %655 = vmatprep.subr.mxu0 0.0
  %656 = vmatpush1.msra.mxu0 %v224
  %657 = vmatprep.subr.mxu0 0.0
  %658 = vmatpush1.msra.mxu0 %v225
  %659 = vmatprep.subr.mxu0 0.0
  %660 = vmatpush1.msra.mxu0 %v226
  %661 = vmatprep.subr.mxu0 0.0
  %662 = vmatpush1.msra.mxu0 %v227
  %663 = vmatprep.subr.mxu0 0.0
  %664 = vmatpush1.msra.mxu0 0.0
  %665 = vmatprep.subr.mxu0 0.0
  %666 = vmatpush1.msra.mxu0 0.0
  %667 = vmatprep.subr.mxu0 0.0
  %668 = vmatpush1.msra.mxu0 0.0
  %669 = vmatprep.subr.mxu0 0.0
  %670 = vmatpush1.msra.mxu0 0.0
  %671 = vmatprep.subr.mxu0 0.0
  %672 = vmatpush1.msra.mxu0 0.0
  %673 = vmatprep.subr.mxu0 0.0
  %674 = vmatpush1.msra.mxu0 0.0
  %675 = vmatprep.subr.mxu0 0.0
  %676 = vmatpush1.msra.mxu0 0.0
  %677 = vmatprep.subr.mxu0 0.0
  %678 = vmatpush1.msra.mxu0 0.0
  %679 = vmatprep.subr.mxu0 0.0
  %680 = vmatpush1.msra.mxu0 0.0
  %681 = vmatprep.subr.mxu0 0.0
  %682 = vmatpush1.msra.mxu0 0.0
  %683 = vmatprep.subr.mxu0 0.0
  %684 = vmatpush1.msra.mxu0 0.0
  %685 = vmatprep.subr.mxu0 0.0
  %686 = vmatpush1.msra.mxu0 0.0
  %687 = vmatprep.subr.mxu0 0.0
  %688 = vmatpush1.msra.mxu0 0.0
  %689 = vmatprep.subr.mxu0 0.0
  %690 = vmatpush1.msra.mxu0 0.0
  %691 = vmatprep.subr.mxu0 0.0
  %692 = vmatpush1.msra.mxu0 0.0
  %693 = vmatprep.subr.mxu0 0.0
  %694 = vmatpush1.msra.mxu0 0.0
  %695 = vmatprep.subr.mxu0 0.0
  %696 = vmatpush1.msra.mxu0 0.0
  %697 = vmatprep.subr.mxu0 0.0
  %698 = vmatpush1.msra.mxu0 0.0
  %699 = vmatprep.subr.mxu0 0.0
  %700 = vmatpush1.msra.mxu0 0.0
  %701 = vmatprep.subr.mxu0 0.0
  %702 = vmatpush1.msra.mxu0 0.0
  %703 = vmatprep.subr.mxu0 0.0
  %704 = vmatpush1.msra.mxu0 0.0
  %705 = vmatprep.subr.mxu0 0.0
  %706 = vmatpush1.msra.mxu0 0.0
  %707 = vmatprep.subr.mxu0 0.0
  %708 = vmatpush1.msra.mxu0 0.0
  %709 = vmatprep.subr.mxu0 0.0
  %710 = vmatpush1.msra.mxu0 0.0
  %711 = vmatprep.subr.mxu0 0.0
  %712 = vmatpush1.msra.mxu0 0.0
  %713 = vmatprep.subr.mxu0 0.0
  %714 = vmatpush1.msra.mxu0 0.0
  %715 = vmatprep.subr.mxu0 0.0
  %716 = vmatpush1.msra.mxu0 0.0
  %717 = vmatprep.subr.mxu0 0.0
  %718 = vmatpush1.msra.mxu0 0.0
  %719 = vmatprep.mubr.f32.mxu0 0.0
  %720 = vmatmul.mubr.f32.gmra.mrb[0].mxu0 %v250
  %v721 = vpop.f32.mrb[0].mxu0
  %v722 = vadd.f32 0.0, %v721
  %v723 = vpop.f32.mrb[0].mxu0
  %724 = vmatprep.mubr.f32.mxu0 0.0
  %725 = vmatmul.mubr.f32.gmra.mrb[0].mxu0 %v253
  %v726 = vpop.f32.mrb[0].mxu0
  %v727 = vadd.f32 0.0, %v726
  %v728 = vpop.f32.mrb[0].mxu0
  %729 = vmatprep.mubr.f32.mxu0 0.0
  %730 = vmatmul.mubr.f32.gmra.mrb[0].mxu0 %v256
  %v731 = vpop.f32.mrb[0].mxu0
  %v732 = vadd.f32 0.0, %v731
  %v733 = vpop.f32.mrb[0].mxu0
  %734 = vmatprep.mubr.f32.mxu0 0.0
  %735 = vmatmul.mubr.f32.gmra.mrb[0].mxu0 %v259
  %v736 = vpop.f32.mrb[0].mxu0
  %v737 = vadd.f32 0.0, %v736
  %v738 = vpop.f32.mrb[0].mxu0
  %739 = vmatprep.mubr.f32.mxu0 0.0
  %740 = vmatmul.mubr.f32.gmra.mrb[0].mxu0 %v262
  %v741 = vpop.f32.mrb[0].mxu0
  %v742 = vadd.f32 0.0, %v741
  %v743 = vpop.f32.mrb[0].mxu0
  %744 = vmatprep.mubr.f32.mxu0 0.0
  %745 = vmatmul.mubr.f32.gmra.mrb[0].mxu0 %v265
  %v746 = vpop.f32.mrb[0].mxu0
  %v747 = vadd.f32 0.0, %v746
  %v748 = vpop.f32.mrb[0].mxu0
  %749 = vmatprep.mubr.f32.mxu0 0.0
  %750 = vmatmul.mubr.f32.gmra.mrb[0].mxu0 %v268
  %v751 = vpop.f32.mrb[0].mxu0
  %v752 = vadd.f32 0.0, %v751
  %v753 = vpop.f32.mrb[0].mxu0
  %754 = vmatprep.mubr.f32.mxu0 0.0
  %755 = vmatmul.mubr.f32.gmra.mrb[0].mxu0 %v271
  %v756 = vpop.f32.mrb[0].mxu0
  %v757 = vadd.f32 0.0, %v756
  %v758 = vpop.f32.mrb[0].mxu0
  %759 = vdwg.mxu0
  %768 = vrot.lane.b32.xlu0 %v203, 64
  %v769 = vpop.permute.xlu0 %768
  %770 = vrot.lane.b32.xlu0 %v204, 64
  %v771 = vpop.permute.xlu0 %770
  %772 = vrot.lane.b32.xlu0 %v205, 64
  %v773 = vpop.permute.xlu0 %772
  %774 = vrot.lane.b32.xlu0 %v206, 64
  %v775 = vpop.permute.xlu0 %774
  %776 = vrot.lane.b32.xlu0 %v207, 64
  %v777 = vpop.permute.xlu0 %776
  %778 = vrot.lane.b32.xlu0 %v208, 64
  %v779 = vpop.permute.xlu0 %778
  %780 = vrot.lane.b32.xlu0 %v209, 64
  %v781 = vpop.permute.xlu0 %780
  %782 = vrot.lane.b32.xlu0 %v210, 64
  %v783 = vpop.permute.xlu0 %782
  %v792 = vsel %vm426, %v722, %v769
  %v793 = vsel %vm426, %v727, %v771
  %v794 = vsel %vm426, %v732, %v773
  %v795 = vsel %vm426, %v737, %v775
  %v796 = vsel %vm426, %v742, %v777
  %v797 = vsel %vm426, %v747, %v779
  %v798 = vsel %vm426, %v752, %v781
  %v799 = vsel %vm426, %v757, %v783
  %v800 = vpack.c.bf16 %v793, %v792
  %v801 = vpack.c.bf16 %v795, %v794
  %v802 = vpack.c.bf16 %v797, %v796
  %v803 = vpack.c.bf16 %v799, %v798
  %v804 = vsel %vm426, %v542, -inf
  %805 = vmax.xlane.f32.xlu0 %v804
  %v806 = vpop.xlane.xlu0 %805
  %v807 = vsel %vm426, %v543, -inf
  %808 = vmax.xlane.f32.xlu0 %v807
  %v809 = vpop.xlane.xlu0 %808
  %v810 = vsel %vm426, %v544, -inf
  %811 = vmax.xlane.f32.xlu0 %v810
  %v812 = vpop.xlane.xlu0 %811
  %v813 = vsel %vm426, %v545, -inf
  %814 = vmax.xlane.f32.xlu0 %v813
  %v815 = vpop.xlane.xlu0 %814
  %v816 = vsel %vm426, %v546, -inf
  %817 = vmax.xlane.f32.xlu0 %v816
  %v818 = vpop.xlane.xlu0 %817
  %v819 = vsel %vm426, %v547, -inf
  %820 = vmax.xlane.f32.xlu0 %v819
  %v821 = vpop.xlane.xlu0 %820
  %v822 = vsel %vm426, %v548, -inf
  %823 = vmax.xlane.f32.xlu0 %v822
  %v824 = vpop.xlane.xlu0 %823
  %v825 = vsel %vm426, %v549, -inf
  %826 = vmax.xlane.f32.xlu0 %v825
  %v827 = vpop.xlane.xlu0 %826
  %vm828 = vcmp.eq.f32.partialorder %v542, %v806
  %vm829 = vcmp.eq.f32.partialorder %v543, %v809
  %vm830 = vcmp.eq.f32.partialorder %v544, %v812
  %vm831 = vcmp.eq.f32.partialorder %v545, %v815
  %vm832 = vcmp.eq.f32.partialorder %v546, %v818
  %vm833 = vcmp.eq.f32.partialorder %v547, %v821
  %vm834 = vcmp.eq.f32.partialorder %v548, %v824
  %vm835 = vcmp.eq.f32.partialorder %v549, %v827
  %v836 = vsel %vm828, %v247, 64.0
  %v837 = vsel %vm829, %v247, 64.0
  %v838 = vsel %vm830, %v247, 64.0
  %v839 = vsel %vm831, %v247, 64.0
  %v840 = vsel %vm832, %v247, 64.0
  %v841 = vsel %vm833, %v247, 64.0
  %v842 = vsel %vm834, %v247, 64.0
  %v843 = vsel %vm835, %v247, 64.0
  %v844 = vsel %vm426, %v836, inf
  %845 = vmin.xlane.f32.xlu0 %v844
  %v846 = vpop.xlane.xlu0 %845
  %v847 = vsel %vm426, %v837, inf
  %848 = vmin.xlane.f32.xlu0 %v847
  %v849 = vpop.xlane.xlu0 %848
  %v850 = vsel %vm426, %v838, inf
  %851 = vmin.xlane.f32.xlu0 %v850
  %v852 = vpop.xlane.xlu0 %851
  %v853 = vsel %vm426, %v839, inf
  %854 = vmin.xlane.f32.xlu0 %v853
  %v855 = vpop.xlane.xlu0 %854
  %v856 = vsel %vm426, %v840, inf
  %857 = vmin.xlane.f32.xlu0 %v856
  %v858 = vpop.xlane.xlu0 %857
  %v859 = vsel %vm426, %v841, inf
  %860 = vmin.xlane.f32.xlu0 %v859
  %v861 = vpop.xlane.xlu0 %860
  %v862 = vsel %vm426, %v842, inf
  %863 = vmin.xlane.f32.xlu0 %v862
  %v864 = vpop.xlane.xlu0 %863
  %v865 = vsel %vm426, %v843, inf
  %866 = vmin.xlane.f32.xlu0 %v865
  %v867 = vpop.xlane.xlu0 %866
  %vm868 = vcmp.eq.f32.partialorder %v247, %v846
  %vm869 = vcmp.eq.f32.partialorder %v247, %v849
  %vm870 = vcmp.eq.f32.partialorder %v247, %v852
  %vm871 = vcmp.eq.f32.partialorder %v247, %v855
  %vm872 = vcmp.eq.f32.partialorder %v247, %v858
  %vm873 = vcmp.eq.f32.partialorder %v247, %v861
  %vm874 = vcmp.eq.f32.partialorder %v247, %v864
  %vm875 = vcmp.eq.f32.partialorder %v247, %v867
  %v876 = vsel %vm868, -3e+38, %v542
  %v877 = vsel %vm869, -3e+38, %v543
  %v878 = vsel %vm870, -3e+38, %v544
  %v879 = vsel %vm871, -3e+38, %v545
  %v880 = vsel %vm872, -3e+38, %v546
  %v881 = vsel %vm873, -3e+38, %v547
  %v882 = vsel %vm874, -3e+38, %v548
  %v883 = vsel %vm875, -3e+38, %v549
  %v884 = vsel %vm868, 1.0, 0.0
  %v885 = vsel %vm869, 1.0, 0.0
  %v886 = vsel %vm870, 1.0, 0.0
  %v887 = vsel %vm871, 1.0, 0.0
  %v888 = vsel %vm872, 1.0, 0.0
  %v889 = vsel %vm873, 1.0, 0.0
  %v890 = vsel %vm874, 1.0, 0.0
  %v891 = vsel %vm875, 1.0, 0.0
  %v892 = vpack.c.bf16 %v885, %v884
  %v893 = vpack.c.bf16 %v887, %v886
  %v894 = vpack.c.bf16 %v889, %v888
  %v895 = vpack.c.bf16 %v891, %v890
  %v897 = vsel %vm426, %v892, 0
  %v900 = vsel %vm426, %v893, 0
  %v903 = vsel %vm426, %v894, 0
  %v906 = vsel %vm426, %v895, 0
  %908 = vmatprep.subr.bf16.mxu0 0
  %909 = vmatpush1.bf16.msra.mxu0 %v800
  %910 = vmatprep.subr.bf16.mxu0 0
  %911 = vmatpush1.bf16.msra.mxu0 %v801
  %912 = vmatprep.subr.bf16.mxu0 0
  %913 = vmatpush1.bf16.msra.mxu0 %v802
  %914 = vmatprep.subr.bf16.mxu0 0
  %915 = vmatpush1.bf16.msra.mxu0 %v803
  %916 = vmatprep.subr.bf16.mxu0 0
  %917 = vmatpush1.bf16.msra.mxu0 0
  %918 = vmatprep.subr.bf16.mxu0 0
  %919 = vmatpush1.bf16.msra.mxu0 0
  %920 = vmatprep.subr.bf16.mxu0 0
  %921 = vmatpush1.bf16.msra.mxu0 0
  %922 = vmatprep.subr.bf16.mxu0 0
  %923 = vmatpush1.bf16.msra.mxu0 0
  %924 = vmatprep.subr.bf16.mxu0 0
  %925 = vmatpush1.bf16.msra.mxu0 0
  %926 = vmatprep.subr.bf16.mxu0 0
  %927 = vmatpush1.bf16.msra.mxu0 0
  %928 = vmatprep.subr.bf16.mxu0 0
  %929 = vmatpush1.bf16.msra.mxu0 0
  %930 = vmatprep.subr.bf16.mxu0 0
  %931 = vmatpush1.bf16.msra.mxu0 0
  %932 = vmatprep.subr.bf16.mxu0 0
  %933 = vmatpush1.bf16.msra.mxu0 0
  %934 = vmatprep.subr.bf16.mxu0 0
  %935 = vmatpush1.bf16.msra.mxu0 0
  %936 = vmatprep.subr.bf16.mxu0 0
  %937 = vmatpush1.bf16.msra.mxu0 0
  %938 = vmatprep.subr.bf16.mxu0 0
  %939 = vmatpush1.bf16.msra.mxu0 0
  %940 = vmatprep.mubr.bf16.mxu0 0
  %941 = vmatmul.mubr.bf16.gmra.mrb[0].mxu0 %v897
  %v942 = vpop.f32.mrb[0].mxu0
  %v943 = vadd.f32 0.0, %v942
  %v944 = vpop.f32.mrb[0].mxu0
  %v945 = vpop.f32.mrb[0].mxu0
  %v946 = vadd.f32 0.0, %v945
  %v947 = vpop.f32.mrb[0].mxu0
  %948 = vmatprep.mubr.bf16.mxu0 0
  %949 = vmatmul.mubr.bf16.gmra.mrb[0].mxu0 %v900
  %v950 = vpop.f32.mrb[0].mxu0
  %v951 = vadd.f32 0.0, %v950
  %v952 = vpop.f32.mrb[0].mxu0
  %v953 = vpop.f32.mrb[0].mxu0
  %v954 = vadd.f32 0.0, %v953
  %v955 = vpop.f32.mrb[0].mxu0
  %956 = vmatprep.mubr.bf16.mxu0 0
  %957 = vmatmul.mubr.bf16.gmra.mrb[0].mxu0 %v903
  %v958 = vpop.f32.mrb[0].mxu0
  %v959 = vadd.f32 0.0, %v958
  %v960 = vpop.f32.mrb[0].mxu0
  %v961 = vpop.f32.mrb[0].mxu0
  %v962 = vadd.f32 0.0, %v961
  %v963 = vpop.f32.mrb[0].mxu0
  %964 = vmatprep.mubr.bf16.mxu0 0
  %965 = vmatmul.mubr.bf16.gmra.mrb[0].mxu0 %v906
  %v966 = vpop.f32.mrb[0].mxu0
  %v967 = vadd.f32 0.0, %v966
  %v968 = vpop.f32.mrb[0].mxu0
  %v969 = vpop.f32.mrb[0].mxu0
  %v970 = vadd.f32 0.0, %v969
  %v971 = vpop.f32.mrb[0].mxu0
  %972 = vdwg.mxu0
  %981 = vrot.lane.b32.xlu0 %v943, 64
  %v982 = vpop.permute.xlu0 %981
  %983 = vrot.lane.b32.xlu0 %v946, 64
  %v984 = vpop.permute.xlu0 %983
  %985 = vrot.lane.b32.xlu0 %v951, 64
  %v986 = vpop.permute.xlu0 %985
  %987 = vrot.lane.b32.xlu0 %v954, 64
  %v988 = vpop.permute.xlu0 %987
  %989 = vrot.lane.b32.xlu0 %v959, 64
  %v990 = vpop.permute.xlu0 %989
  %991 = vrot.lane.b32.xlu0 %v962, 64
  %v992 = vpop.permute.xlu0 %991
  %993 = vrot.lane.b32.xlu0 %v967, 64
  %v994 = vpop.permute.xlu0 %993
  %995 = vrot.lane.b32.xlu0 %v970, 64
  %v996 = vpop.permute.xlu0 %995
  %v1005 = vsub.f32 %v203, %v982
  %v1006 = vsub.f32 %v204, %v984
  %v1007 = vsub.f32 %v205, %v986
  %v1008 = vsub.f32 %v206, %v988
  %v1009 = vsub.f32 %v207, %v990
  %v1010 = vsub.f32 %v208, %v992
  %v1011 = vsub.f32 %v209, %v994
  %v1012 = vsub.f32 %v210, %v996
  %v1013 = vadd.f32 %v617, %v943
  %v1014 = vadd.f32 %v622, %v946
  %v1015 = vadd.f32 %v627, %v951
  %v1016 = vadd.f32 %v632, %v954
  %v1017 = vadd.f32 %v637, %v959
  %v1018 = vadd.f32 %v642, %v962
  %v1019 = vadd.f32 %v647, %v967
  %v1020 = vadd.f32 %v652, %v970
  %1022 = vset.pattern.permute.xlu0 0
  %1023 = vperm.xlu0 %1022, %v1005
  %v1024 = vpop.permute.xlu0 %1023
  %1027 = vset.pattern.permute.xlu0 0
  %1028 = vperm.xlu0 %1027, %v1006
  %v1029 = vpop.permute.xlu0 %1028
  %1032 = vset.pattern.permute.xlu0 0
  %1033 = vperm.xlu0 %1032, %v1007
  %v1034 = vpop.permute.xlu0 %1033
  %1037 = vset.pattern.permute.xlu0 0
  %1038 = vperm.xlu0 %1037, %v1008
  %v1039 = vpop.permute.xlu0 %1038
  %1042 = vset.pattern.permute.xlu0 0
  %1043 = vperm.xlu0 %1042, %v1009
  %v1044 = vpop.permute.xlu0 %1043
  %1047 = vset.pattern.permute.xlu0 0
  %1048 = vperm.xlu0 %1047, %v1010
  %v1049 = vpop.permute.xlu0 %1048
  %1052 = vset.pattern.permute.xlu0 0
  %1053 = vperm.xlu0 %1052, %v1011
  %v1054 = vpop.permute.xlu0 %1053
  %1057 = vset.pattern.permute.xlu0 0
  %1058 = vperm.xlu0 %1057, %v1012
  %v1059 = vpop.permute.xlu0 %1058
  %v1062 = vlaneseq
  %v1063 = vshrl.u32 %v1062, 7
  %v1064 = vsub.s32 0, %v1063
  %v1065 = vrot.slane %v228, %v1064
  %v1067 = vmul.f32 %v1024, %v1065
  %v1068 = vmul.f32 %v1029, %v1065
  %v1069 = vmul.f32 %v1034, %v1065
  %v1070 = vmul.f32 %v1039, %v1065
  %v1071 = vmul.f32 %v1044, %v1065
  %v1072 = vmul.f32 %v1049, %v1065
  %v1073 = vmul.f32 %v1054, %v1065
  %v1074 = vmul.f32 %v1059, %v1065
  %v1075 = vadd.f32 %v1013, %v1067
  %v1076 = vadd.f32 %v1014, %v1068
  %v1077 = vadd.f32 %v1015, %v1069
  %v1078 = vadd.f32 %v1016, %v1070
  %v1079 = vadd.f32 %v1017, %v1071
  %v1080 = vadd.f32 %v1018, %v1072
  %v1081 = vadd.f32 %v1019, %v1073
  %v1082 = vadd.f32 %v1020, %v1074
  %v1084 = vlaneseq
  %v1085 = vshrl.u32 %v1084, 7
  %v1086 = vsub.s32 0, %v1085
  %v1087 = vrot.slane %v229, %v1086
  %v1089 = vadd.f32 %v1075, %v1087
  %v1090 = vadd.f32 %v1076, %v1087
  %v1091 = vadd.f32 %v1077, %v1087
  %v1092 = vadd.f32 %v1078, %v1087
  %v1093 = vadd.f32 %v1079, %v1087
  %v1094 = vadd.f32 %v1080, %v1087
  %v1095 = vadd.f32 %v1081, %v1087
  %v1096 = vadd.f32 %v1082, %v1087
  %v1097 = vtanh.pop %v1089
  %v1098 = vtanh.pop %v1090
  %v1099 = vtanh.pop %v1091
  %v1100 = vtanh.pop %v1092
  %v1101 = vtanh.pop %v1093
  %v1102 = vtanh.pop %v1094
  %v1103 = vtanh.pop %v1095
  %v1104 = vtanh.pop %v1096
  %v1106 = vlaneseq
  %v1107 = vshrl.u32 %v1106, 7
  %v1108 = vsub.s32 0, %v1107
  %v1109 = vrot.slane %v230, %v1108
  %v1111 = vmul.f32 %v1097, %v1109
  %v1112 = vmul.f32 %v1098, %v1109
  %v1113 = vmul.f32 %v1099, %v1109
  %v1114 = vmul.f32 %v1100, %v1109
  %v1115 = vmul.f32 %v1101, %v1109
  %v1116 = vmul.f32 %v1102, %v1109
  %v1117 = vmul.f32 %v1103, %v1109
  %v1118 = vmul.f32 %v1104, %v1109
  %v1119 = vsel %vm248, %v1111, 0.0
  %1120 = vadd.xlane.f32.xlu0 %v1119
  %v1121 = vpop.xlane.xlu0 %1120
  %v1122 = vsel %vm248, %v1112, 0.0
  %1123 = vadd.xlane.f32.xlu0 %v1122
  %v1124 = vpop.xlane.xlu0 %1123
  %v1125 = vsel %vm248, %v1113, 0.0
  %1126 = vadd.xlane.f32.xlu0 %v1125
  %v1127 = vpop.xlane.xlu0 %1126
  %v1128 = vsel %vm248, %v1114, 0.0
  %1129 = vadd.xlane.f32.xlu0 %v1128
  %v1130 = vpop.xlane.xlu0 %1129
  %v1131 = vsel %vm248, %v1115, 0.0
  %1132 = vadd.xlane.f32.xlu0 %v1131
  %v1133 = vpop.xlane.xlu0 %1132
  %v1134 = vsel %vm248, %v1116, 0.0
  %1135 = vadd.xlane.f32.xlu0 %v1134
  %v1136 = vpop.xlane.xlu0 %1135
  %v1137 = vsel %vm248, %v1117, 0.0
  %1138 = vadd.xlane.f32.xlu0 %v1137
  %v1139 = vpop.xlane.xlu0 %1138
  %v1140 = vsel %vm248, %v1118, 0.0
  %1141 = vadd.xlane.f32.xlu0 %v1140
  %v1142 = vpop.xlane.xlu0 %1141
  %vm1143 = vcmp.gt.f32.partialorder %v1089, 0.0
  %vm1144 = vcmp.gt.f32.partialorder %v1090, 0.0
  %vm1145 = vcmp.gt.f32.partialorder %v1091, 0.0
  %vm1146 = vcmp.gt.f32.partialorder %v1092, 0.0
  %vm1147 = vcmp.gt.f32.partialorder %v1093, 0.0
  %vm1148 = vcmp.gt.f32.partialorder %v1094, 0.0
  %vm1149 = vcmp.gt.f32.partialorder %v1095, 0.0
  %vm1150 = vcmp.gt.f32.partialorder %v1096, 0.0
  %v1151 = vmul.f32 %v1089, 0.2
  %v1152 = vmul.f32 %v1090, 0.2
  %v1153 = vmul.f32 %v1091, 0.2
  %v1154 = vmul.f32 %v1092, 0.2
  %v1155 = vmul.f32 %v1093, 0.2
  %v1156 = vmul.f32 %v1094, 0.2
  %v1157 = vmul.f32 %v1095, 0.2
  %v1158 = vmul.f32 %v1096, 0.2
  %v1159 = vsel %vm1143, %v1089, %v1151
  %v1160 = vsel %vm1144, %v1090, %v1152
  %v1161 = vsel %vm1145, %v1091, %v1153
  %v1162 = vsel %vm1146, %v1092, %v1154
  %v1163 = vsel %vm1147, %v1093, %v1155
  %v1164 = vsel %vm1148, %v1094, %v1156
  %v1165 = vsel %vm1149, %v1095, %v1157
  %v1166 = vsel %vm1150, %v1096, %v1158
  %v1167 = vsel %vm426, %v876, -inf
  %1168 = vmax.xlane.f32.xlu0 %v1167
  %v1169 = vpop.xlane.xlu0 %1168
  %v1170 = vsel %vm426, %v877, -inf
  %1171 = vmax.xlane.f32.xlu0 %v1170
  %v1172 = vpop.xlane.xlu0 %1171
  %v1173 = vsel %vm426, %v878, -inf
  %1174 = vmax.xlane.f32.xlu0 %v1173
  %v1175 = vpop.xlane.xlu0 %1174
  %v1176 = vsel %vm426, %v879, -inf
  %1177 = vmax.xlane.f32.xlu0 %v1176
  %v1178 = vpop.xlane.xlu0 %1177
  %v1179 = vsel %vm426, %v880, -inf
  %1180 = vmax.xlane.f32.xlu0 %v1179
  %v1181 = vpop.xlane.xlu0 %1180
  %v1182 = vsel %vm426, %v881, -inf
  %1183 = vmax.xlane.f32.xlu0 %v1182
  %v1184 = vpop.xlane.xlu0 %1183
  %v1185 = vsel %vm426, %v882, -inf
  %1186 = vmax.xlane.f32.xlu0 %v1185
  %v1187 = vpop.xlane.xlu0 %1186
  %v1188 = vsel %vm426, %v883, -inf
  %1189 = vmax.xlane.f32.xlu0 %v1188
  %v1190 = vpop.xlane.xlu0 %1189
  %vm1191 = vcmp.eq.f32.partialorder %v876, %v1169
  %vm1192 = vcmp.eq.f32.partialorder %v877, %v1172
  %vm1193 = vcmp.eq.f32.partialorder %v878, %v1175
  %vm1194 = vcmp.eq.f32.partialorder %v879, %v1178
  %vm1195 = vcmp.eq.f32.partialorder %v880, %v1181
  %vm1196 = vcmp.eq.f32.partialorder %v881, %v1184
  %vm1197 = vcmp.eq.f32.partialorder %v882, %v1187
  %vm1198 = vcmp.eq.f32.partialorder %v883, %v1190
  %v1199 = vsel %vm1191, %v247, 64.0
  %v1200 = vsel %vm1192, %v247, 64.0
  %v1201 = vsel %vm1193, %v247, 64.0
  %v1202 = vsel %vm1194, %v247, 64.0
  %v1203 = vsel %vm1195, %v247, 64.0
  %v1204 = vsel %vm1196, %v247, 64.0
  %v1205 = vsel %vm1197, %v247, 64.0
  %v1206 = vsel %vm1198, %v247, 64.0
  %v1207 = vsel %vm426, %v1199, inf
  %1208 = vmin.xlane.f32.xlu0 %v1207
  %v1209 = vpop.xlane.xlu0 %1208
  %v1210 = vsel %vm426, %v1200, inf
  %1211 = vmin.xlane.f32.xlu0 %v1210
  %v1212 = vpop.xlane.xlu0 %1211
  %v1213 = vsel %vm426, %v1201, inf
  %1214 = vmin.xlane.f32.xlu0 %v1213
  %v1215 = vpop.xlane.xlu0 %1214
  %v1216 = vsel %vm426, %v1202, inf
  %1217 = vmin.xlane.f32.xlu0 %v1216
  %v1218 = vpop.xlane.xlu0 %1217
  %v1219 = vsel %vm426, %v1203, inf
  %1220 = vmin.xlane.f32.xlu0 %v1219
  %v1221 = vpop.xlane.xlu0 %1220
  %v1222 = vsel %vm426, %v1204, inf
  %1223 = vmin.xlane.f32.xlu0 %v1222
  %v1224 = vpop.xlane.xlu0 %1223
  %v1225 = vsel %vm426, %v1205, inf
  %1226 = vmin.xlane.f32.xlu0 %v1225
  %v1227 = vpop.xlane.xlu0 %1226
  %v1228 = vsel %vm426, %v1206, inf
  %1229 = vmin.xlane.f32.xlu0 %v1228
  %v1230 = vpop.xlane.xlu0 %1229
  %vm1231 = vcmp.eq.f32.partialorder %v247, %v1209
  %vm1232 = vcmp.eq.f32.partialorder %v247, %v1212
  %vm1233 = vcmp.eq.f32.partialorder %v247, %v1215
  %vm1234 = vcmp.eq.f32.partialorder %v247, %v1218
  %vm1235 = vcmp.eq.f32.partialorder %v247, %v1221
  %vm1236 = vcmp.eq.f32.partialorder %v247, %v1224
  %vm1237 = vcmp.eq.f32.partialorder %v247, %v1227
  %vm1238 = vcmp.eq.f32.partialorder %v247, %v1230
  %v1239 = vsel %vm1231, -3e+38, %v876
  %v1240 = vsel %vm1232, -3e+38, %v877
  %v1241 = vsel %vm1233, -3e+38, %v878
  %v1242 = vsel %vm1234, -3e+38, %v879
  %v1243 = vsel %vm1235, -3e+38, %v880
  %v1244 = vsel %vm1236, -3e+38, %v881
  %v1245 = vsel %vm1237, -3e+38, %v882
  %v1246 = vsel %vm1238, -3e+38, %v883
  %v1247 = vsel %vm1231, 1.0, 0.0
  %v1248 = vsel %vm1232, 1.0, 0.0
  %v1249 = vsel %vm1233, 1.0, 0.0
  %v1250 = vsel %vm1234, 1.0, 0.0
  %v1251 = vsel %vm1235, 1.0, 0.0
  %v1252 = vsel %vm1236, 1.0, 0.0
  %v1253 = vsel %vm1237, 1.0, 0.0
  %v1254 = vsel %vm1238, 1.0, 0.0
  %v1255 = vpack.c.bf16 %v1248, %v1247
  %v1256 = vpack.c.bf16 %v1250, %v1249
  %v1257 = vpack.c.bf16 %v1252, %v1251
  %v1258 = vpack.c.bf16 %v1254, %v1253
  %v1260 = vsel %vm426, %v1255, 0
  %v1263 = vsel %vm426, %v1256, 0
  %v1266 = vsel %vm426, %v1257, 0
  %v1269 = vsel %vm426, %v1258, 0
  %1271 = vmatprep.subr.bf16.mxu0 0
  %1272 = vmatpush1.bf16.msra.mxu0 %v800
  %1273 = vmatprep.subr.bf16.mxu0 0
  %1274 = vmatpush1.bf16.msra.mxu0 %v801
  %1275 = vmatprep.subr.bf16.mxu0 0
  %1276 = vmatpush1.bf16.msra.mxu0 %v802
  %1277 = vmatprep.subr.bf16.mxu0 0
  %1278 = vmatpush1.bf16.msra.mxu0 %v803
  %1279 = vmatprep.subr.bf16.mxu0 0
  %1280 = vmatpush1.bf16.msra.mxu0 0
  %1281 = vmatprep.subr.bf16.mxu0 0
  %1282 = vmatpush1.bf16.msra.mxu0 0
  %1283 = vmatprep.subr.bf16.mxu0 0
  %1284 = vmatpush1.bf16.msra.mxu0 0
  %1285 = vmatprep.subr.bf16.mxu0 0
  %1286 = vmatpush1.bf16.msra.mxu0 0
  %1287 = vmatprep.subr.bf16.mxu0 0
  %1288 = vmatpush1.bf16.msra.mxu0 0
  %1289 = vmatprep.subr.bf16.mxu0 0
  %1290 = vmatpush1.bf16.msra.mxu0 0
  %1291 = vmatprep.subr.bf16.mxu0 0
  %1292 = vmatpush1.bf16.msra.mxu0 0
  %1293 = vmatprep.subr.bf16.mxu0 0
  %1294 = vmatpush1.bf16.msra.mxu0 0
  %1295 = vmatprep.subr.bf16.mxu0 0
  %1296 = vmatpush1.bf16.msra.mxu0 0
  %1297 = vmatprep.subr.bf16.mxu0 0
  %1298 = vmatpush1.bf16.msra.mxu0 0
  %1299 = vmatprep.subr.bf16.mxu0 0
  %1300 = vmatpush1.bf16.msra.mxu0 0
  %1301 = vmatprep.subr.bf16.mxu0 0
  %1302 = vmatpush1.bf16.msra.mxu0 0
  %1303 = vmatprep.mubr.bf16.mxu0 0
  %1304 = vmatmul.mubr.bf16.gmra.mrb[0].mxu0 %v1260
  %v1305 = vpop.f32.mrb[0].mxu0
  %v1306 = vadd.f32 0.0, %v1305
  %v1307 = vpop.f32.mrb[0].mxu0
  %v1308 = vpop.f32.mrb[0].mxu0
  %v1309 = vadd.f32 0.0, %v1308
  %v1310 = vpop.f32.mrb[0].mxu0
  %1311 = vmatprep.mubr.bf16.mxu0 0
  %1312 = vmatmul.mubr.bf16.gmra.mrb[0].mxu0 %v1263
  %v1313 = vpop.f32.mrb[0].mxu0
  %v1314 = vadd.f32 0.0, %v1313
  %v1315 = vpop.f32.mrb[0].mxu0
  %v1316 = vpop.f32.mrb[0].mxu0
  %v1317 = vadd.f32 0.0, %v1316
  %v1318 = vpop.f32.mrb[0].mxu0
  %1319 = vmatprep.mubr.bf16.mxu0 0
  %1320 = vmatmul.mubr.bf16.gmra.mrb[0].mxu0 %v1266
  %v1321 = vpop.f32.mrb[0].mxu0
  %v1322 = vadd.f32 0.0, %v1321
  %v1323 = vpop.f32.mrb[0].mxu0
  %v1324 = vpop.f32.mrb[0].mxu0
  %v1325 = vadd.f32 0.0, %v1324
  %v1326 = vpop.f32.mrb[0].mxu0
  %1327 = vmatprep.mubr.bf16.mxu0 0
  %1328 = vmatmul.mubr.bf16.gmra.mrb[0].mxu0 %v1269
  %v1329 = vpop.f32.mrb[0].mxu0
  %v1330 = vadd.f32 0.0, %v1329
  %v1331 = vpop.f32.mrb[0].mxu0
  %v1332 = vpop.f32.mrb[0].mxu0
  %v1333 = vadd.f32 0.0, %v1332
  %v1334 = vpop.f32.mrb[0].mxu0
  %1335 = vdwg.mxu0
  %1344 = vrot.lane.b32.xlu0 %v1306, 64
  %v1345 = vpop.permute.xlu0 %1344
  %1346 = vrot.lane.b32.xlu0 %v1309, 64
  %v1347 = vpop.permute.xlu0 %1346
  %1348 = vrot.lane.b32.xlu0 %v1314, 64
  %v1349 = vpop.permute.xlu0 %1348
  %1350 = vrot.lane.b32.xlu0 %v1317, 64
  %v1351 = vpop.permute.xlu0 %1350
  %1352 = vrot.lane.b32.xlu0 %v1322, 64
  %v1353 = vpop.permute.xlu0 %1352
  %1354 = vrot.lane.b32.xlu0 %v1325, 64
  %v1355 = vpop.permute.xlu0 %1354
  %1356 = vrot.lane.b32.xlu0 %v1330, 64
  %v1357 = vpop.permute.xlu0 %1356
  %1358 = vrot.lane.b32.xlu0 %v1333, 64
  %v1359 = vpop.permute.xlu0 %1358
  %v1368 = vsub.f32 %v203, %v1345
  %v1369 = vsub.f32 %v204, %v1347
  %v1370 = vsub.f32 %v205, %v1349
  %v1371 = vsub.f32 %v206, %v1351
  %v1372 = vsub.f32 %v207, %v1353
  %v1373 = vsub.f32 %v208, %v1355
  %v1374 = vsub.f32 %v209, %v1357
  %v1375 = vsub.f32 %v210, %v1359
  %v1376 = vadd.f32 %v617, %v1306
  %v1377 = vadd.f32 %v622, %v1309
  %v1378 = vadd.f32 %v627, %v1314
  %v1379 = vadd.f32 %v632, %v1317
  %v1380 = vadd.f32 %v637, %v1322
  %v1381 = vadd.f32 %v642, %v1325
  %v1382 = vadd.f32 %v647, %v1330
  %v1383 = vadd.f32 %v652, %v1333
  %1385 = vset.pattern.permute.xlu0 0
  %1386 = vperm.xlu0 %1385, %v1368
  %v1387 = vpop.permute.xlu0 %1386
  %1390 = vset.pattern.permute.xlu0 0
  %1391 = vperm.xlu0 %1390, %v1369
  %v1392 = vpop.permute.xlu0 %1391
  %1395 = vset.pattern.permute.xlu0 0
  %1396 = vperm.xlu0 %1395, %v1370
  %v1397 = vpop.permute.xlu0 %1396
  %1400 = vset.pattern.permute.xlu0 0
  %1401 = vperm.xlu0 %1400, %v1371
  %v1402 = vpop.permute.xlu0 %1401
  %1405 = vset.pattern.permute.xlu0 0
  %1406 = vperm.xlu0 %1405, %v1372
  %v1407 = vpop.permute.xlu0 %1406
  %1410 = vset.pattern.permute.xlu0 0
  %1411 = vperm.xlu0 %1410, %v1373
  %v1412 = vpop.permute.xlu0 %1411
  %1415 = vset.pattern.permute.xlu0 0
  %1416 = vperm.xlu0 %1415, %v1374
  %v1417 = vpop.permute.xlu0 %1416
  %1420 = vset.pattern.permute.xlu0 0
  %1421 = vperm.xlu0 %1420, %v1375
  %v1422 = vpop.permute.xlu0 %1421
  %v1424 = vmul.f32 %v1387, %v1065
  %v1425 = vmul.f32 %v1392, %v1065
  %v1426 = vmul.f32 %v1397, %v1065
  %v1427 = vmul.f32 %v1402, %v1065
  %v1428 = vmul.f32 %v1407, %v1065
  %v1429 = vmul.f32 %v1412, %v1065
  %v1430 = vmul.f32 %v1417, %v1065
  %v1431 = vmul.f32 %v1422, %v1065
  %v1432 = vadd.f32 %v1376, %v1424
  %v1433 = vadd.f32 %v1377, %v1425
  %v1434 = vadd.f32 %v1378, %v1426
  %v1435 = vadd.f32 %v1379, %v1427
  %v1436 = vadd.f32 %v1380, %v1428
  %v1437 = vadd.f32 %v1381, %v1429
  %v1438 = vadd.f32 %v1382, %v1430
  %v1439 = vadd.f32 %v1383, %v1431
  %v1440 = vadd.f32 %v1432, %v1087
  %v1441 = vadd.f32 %v1433, %v1087
  %v1442 = vadd.f32 %v1434, %v1087
  %v1443 = vadd.f32 %v1435, %v1087
  %v1444 = vadd.f32 %v1436, %v1087
  %v1445 = vadd.f32 %v1437, %v1087
  %v1446 = vadd.f32 %v1438, %v1087
  %v1447 = vadd.f32 %v1439, %v1087
  %v1448 = vtanh.pop %v1440
  %v1449 = vtanh.pop %v1441
  %v1450 = vtanh.pop %v1442
  %v1451 = vtanh.pop %v1443
  %v1452 = vtanh.pop %v1444
  %v1453 = vtanh.pop %v1445
  %v1454 = vtanh.pop %v1446
  %v1455 = vtanh.pop %v1447
  %v1456 = vmul.f32 %v1448, %v1109
  %v1457 = vmul.f32 %v1449, %v1109
  %v1458 = vmul.f32 %v1450, %v1109
  %v1459 = vmul.f32 %v1451, %v1109
  %v1460 = vmul.f32 %v1452, %v1109
  %v1461 = vmul.f32 %v1453, %v1109
  %v1462 = vmul.f32 %v1454, %v1109
  %v1463 = vmul.f32 %v1455, %v1109
  %v1464 = vsel %vm248, %v1456, 0.0
  %1465 = vadd.xlane.f32.xlu0 %v1464
  %v1466 = vpop.xlane.xlu0 %1465
  %v1467 = vsel %vm248, %v1457, 0.0
  %1468 = vadd.xlane.f32.xlu0 %v1467
  %v1469 = vpop.xlane.xlu0 %1468
  %v1470 = vsel %vm248, %v1458, 0.0
  %1471 = vadd.xlane.f32.xlu0 %v1470
  %v1472 = vpop.xlane.xlu0 %1471
  %v1473 = vsel %vm248, %v1459, 0.0
  %1474 = vadd.xlane.f32.xlu0 %v1473
  %v1475 = vpop.xlane.xlu0 %1474
  %v1476 = vsel %vm248, %v1460, 0.0
  %1477 = vadd.xlane.f32.xlu0 %v1476
  %v1478 = vpop.xlane.xlu0 %1477
  %v1479 = vsel %vm248, %v1461, 0.0
  %1480 = vadd.xlane.f32.xlu0 %v1479
  %v1481 = vpop.xlane.xlu0 %1480
  %v1482 = vsel %vm248, %v1462, 0.0
  %1483 = vadd.xlane.f32.xlu0 %v1482
  %v1484 = vpop.xlane.xlu0 %1483
  %v1485 = vsel %vm248, %v1463, 0.0
  %1486 = vadd.xlane.f32.xlu0 %v1485
  %v1487 = vpop.xlane.xlu0 %1486
  %vm1488 = vcmp.gt.f32.partialorder %v1440, 0.0
  %vm1489 = vcmp.gt.f32.partialorder %v1441, 0.0
  %vm1490 = vcmp.gt.f32.partialorder %v1442, 0.0
  %vm1491 = vcmp.gt.f32.partialorder %v1443, 0.0
  %vm1492 = vcmp.gt.f32.partialorder %v1444, 0.0
  %vm1493 = vcmp.gt.f32.partialorder %v1445, 0.0
  %vm1494 = vcmp.gt.f32.partialorder %v1446, 0.0
  %vm1495 = vcmp.gt.f32.partialorder %v1447, 0.0
  %v1496 = vmul.f32 %v1440, 0.2
  %v1497 = vmul.f32 %v1441, 0.2
  %v1498 = vmul.f32 %v1442, 0.2
  %v1499 = vmul.f32 %v1443, 0.2
  %v1500 = vmul.f32 %v1444, 0.2
  %v1501 = vmul.f32 %v1445, 0.2
  %v1502 = vmul.f32 %v1446, 0.2
  %v1503 = vmul.f32 %v1447, 0.2
  %v1504 = vsel %vm1488, %v1440, %v1496
  %v1505 = vsel %vm1489, %v1441, %v1497
  %v1506 = vsel %vm1490, %v1442, %v1498
  %v1507 = vsel %vm1491, %v1443, %v1499
  %v1508 = vsel %vm1492, %v1444, %v1500
  %v1509 = vsel %vm1493, %v1445, %v1501
  %v1510 = vsel %vm1494, %v1446, %v1502
  %v1511 = vsel %vm1495, %v1447, %v1503
  %v1512 = vsel %vm426, %v1239, -inf
  %1513 = vmax.xlane.f32.xlu0 %v1512
  %v1514 = vpop.xlane.xlu0 %1513
  %v1515 = vsel %vm426, %v1240, -inf
  %1516 = vmax.xlane.f32.xlu0 %v1515
  %v1517 = vpop.xlane.xlu0 %1516
  %v1518 = vsel %vm426, %v1241, -inf
  %1519 = vmax.xlane.f32.xlu0 %v1518
  %v1520 = vpop.xlane.xlu0 %1519
  %v1521 = vsel %vm426, %v1242, -inf
  %1522 = vmax.xlane.f32.xlu0 %v1521
  %v1523 = vpop.xlane.xlu0 %1522
  %v1524 = vsel %vm426, %v1243, -inf
  %1525 = vmax.xlane.f32.xlu0 %v1524
  %v1526 = vpop.xlane.xlu0 %1525
  %v1527 = vsel %vm426, %v1244, -inf
  %1528 = vmax.xlane.f32.xlu0 %v1527
  %v1529 = vpop.xlane.xlu0 %1528
  %v1530 = vsel %vm426, %v1245, -inf
  %1531 = vmax.xlane.f32.xlu0 %v1530
  %v1532 = vpop.xlane.xlu0 %1531
  %v1533 = vsel %vm426, %v1246, -inf
  %1534 = vmax.xlane.f32.xlu0 %v1533
  %v1535 = vpop.xlane.xlu0 %1534
  %vm1536 = vcmp.eq.f32.partialorder %v1239, %v1514
  %vm1537 = vcmp.eq.f32.partialorder %v1240, %v1517
  %vm1538 = vcmp.eq.f32.partialorder %v1241, %v1520
  %vm1539 = vcmp.eq.f32.partialorder %v1242, %v1523
  %vm1540 = vcmp.eq.f32.partialorder %v1243, %v1526
  %vm1541 = vcmp.eq.f32.partialorder %v1244, %v1529
  %vm1542 = vcmp.eq.f32.partialorder %v1245, %v1532
  %vm1543 = vcmp.eq.f32.partialorder %v1246, %v1535
  %v1544 = vsel %vm1536, %v247, 64.0
  %v1545 = vsel %vm1537, %v247, 64.0
  %v1546 = vsel %vm1538, %v247, 64.0
  %v1547 = vsel %vm1539, %v247, 64.0
  %v1548 = vsel %vm1540, %v247, 64.0
  %v1549 = vsel %vm1541, %v247, 64.0
  %v1550 = vsel %vm1542, %v247, 64.0
  %v1551 = vsel %vm1543, %v247, 64.0
  %v1552 = vsel %vm426, %v1544, inf
  %1553 = vmin.xlane.f32.xlu0 %v1552
  %v1554 = vpop.xlane.xlu0 %1553
  %v1555 = vsel %vm426, %v1545, inf
  %1556 = vmin.xlane.f32.xlu0 %v1555
  %v1557 = vpop.xlane.xlu0 %1556
  %v1558 = vsel %vm426, %v1546, inf
  %1559 = vmin.xlane.f32.xlu0 %v1558
  %v1560 = vpop.xlane.xlu0 %1559
  %v1561 = vsel %vm426, %v1547, inf
  %1562 = vmin.xlane.f32.xlu0 %v1561
  %v1563 = vpop.xlane.xlu0 %1562
  %v1564 = vsel %vm426, %v1548, inf
  %1565 = vmin.xlane.f32.xlu0 %v1564
  %v1566 = vpop.xlane.xlu0 %1565
  %v1567 = vsel %vm426, %v1549, inf
  %1568 = vmin.xlane.f32.xlu0 %v1567
  %v1569 = vpop.xlane.xlu0 %1568
  %v1570 = vsel %vm426, %v1550, inf
  %1571 = vmin.xlane.f32.xlu0 %v1570
  %v1572 = vpop.xlane.xlu0 %1571
  %v1573 = vsel %vm426, %v1551, inf
  %1574 = vmin.xlane.f32.xlu0 %v1573
  %v1575 = vpop.xlane.xlu0 %1574
  %vm1576 = vcmp.eq.f32.partialorder %v247, %v1554
  %vm1577 = vcmp.eq.f32.partialorder %v247, %v1557
  %vm1578 = vcmp.eq.f32.partialorder %v247, %v1560
  %vm1579 = vcmp.eq.f32.partialorder %v247, %v1563
  %vm1580 = vcmp.eq.f32.partialorder %v247, %v1566
  %vm1581 = vcmp.eq.f32.partialorder %v247, %v1569
  %vm1582 = vcmp.eq.f32.partialorder %v247, %v1572
  %vm1583 = vcmp.eq.f32.partialorder %v247, %v1575
  %v1584 = vsel %vm1576, -3e+38, %v1239
  %v1585 = vsel %vm1577, -3e+38, %v1240
  %v1586 = vsel %vm1578, -3e+38, %v1241
  %v1587 = vsel %vm1579, -3e+38, %v1242
  %v1588 = vsel %vm1580, -3e+38, %v1243
  %v1589 = vsel %vm1581, -3e+38, %v1244
  %v1590 = vsel %vm1582, -3e+38, %v1245
  %v1591 = vsel %vm1583, -3e+38, %v1246
  %v1592 = vsel %vm1576, 1.0, 0.0
  %v1593 = vsel %vm1577, 1.0, 0.0
  %v1594 = vsel %vm1578, 1.0, 0.0
  %v1595 = vsel %vm1579, 1.0, 0.0
  %v1596 = vsel %vm1580, 1.0, 0.0
  %v1597 = vsel %vm1581, 1.0, 0.0
  %v1598 = vsel %vm1582, 1.0, 0.0
  %v1599 = vsel %vm1583, 1.0, 0.0
  %v1600 = vpack.c.bf16 %v1593, %v1592
  %v1601 = vpack.c.bf16 %v1595, %v1594
  %v1602 = vpack.c.bf16 %v1597, %v1596
  %v1603 = vpack.c.bf16 %v1599, %v1598
  %v1605 = vsel %vm426, %v1600, 0
  %v1608 = vsel %vm426, %v1601, 0
  %v1611 = vsel %vm426, %v1602, 0
  %v1614 = vsel %vm426, %v1603, 0
  %1616 = vmatprep.subr.bf16.mxu0 0
  %1617 = vmatpush1.bf16.msra.mxu0 %v800
  %1618 = vmatprep.subr.bf16.mxu0 0
  %1619 = vmatpush1.bf16.msra.mxu0 %v801
  %1620 = vmatprep.subr.bf16.mxu0 0
  %1621 = vmatpush1.bf16.msra.mxu0 %v802
  %1622 = vmatprep.subr.bf16.mxu0 0
  %1623 = vmatpush1.bf16.msra.mxu0 %v803
  %1624 = vmatprep.subr.bf16.mxu0 0
  %1625 = vmatpush1.bf16.msra.mxu0 0
  %1626 = vmatprep.subr.bf16.mxu0 0
  %1627 = vmatpush1.bf16.msra.mxu0 0
  %1628 = vmatprep.subr.bf16.mxu0 0
  %1629 = vmatpush1.bf16.msra.mxu0 0
  %1630 = vmatprep.subr.bf16.mxu0 0
  %1631 = vmatpush1.bf16.msra.mxu0 0
  %1632 = vmatprep.subr.bf16.mxu0 0
  %1633 = vmatpush1.bf16.msra.mxu0 0
  %1634 = vmatprep.subr.bf16.mxu0 0
  %1635 = vmatpush1.bf16.msra.mxu0 0
  %1636 = vmatprep.subr.bf16.mxu0 0
  %1637 = vmatpush1.bf16.msra.mxu0 0
  %1638 = vmatprep.subr.bf16.mxu0 0
  %1639 = vmatpush1.bf16.msra.mxu0 0
  %1640 = vmatprep.subr.bf16.mxu0 0
  %1641 = vmatpush1.bf16.msra.mxu0 0
  %1642 = vmatprep.subr.bf16.mxu0 0
  %1643 = vmatpush1.bf16.msra.mxu0 0
  %1644 = vmatprep.subr.bf16.mxu0 0
  %1645 = vmatpush1.bf16.msra.mxu0 0
  %1646 = vmatprep.subr.bf16.mxu0 0
  %1647 = vmatpush1.bf16.msra.mxu0 0
  %1648 = vmatprep.mubr.bf16.mxu0 0
  %1649 = vmatmul.mubr.bf16.gmra.mrb[0].mxu0 %v1605
  %v1650 = vpop.f32.mrb[0].mxu0
  %v1651 = vadd.f32 0.0, %v1650
  %v1652 = vpop.f32.mrb[0].mxu0
  %v1653 = vpop.f32.mrb[0].mxu0
  %v1654 = vadd.f32 0.0, %v1653
  %v1655 = vpop.f32.mrb[0].mxu0
  %1656 = vmatprep.mubr.bf16.mxu0 0
  %1657 = vmatmul.mubr.bf16.gmra.mrb[0].mxu0 %v1608
  %v1658 = vpop.f32.mrb[0].mxu0
  %v1659 = vadd.f32 0.0, %v1658
  %v1660 = vpop.f32.mrb[0].mxu0
  %v1661 = vpop.f32.mrb[0].mxu0
  %v1662 = vadd.f32 0.0, %v1661
  %v1663 = vpop.f32.mrb[0].mxu0
  %1664 = vmatprep.mubr.bf16.mxu0 0
  %1665 = vmatmul.mubr.bf16.gmra.mrb[0].mxu0 %v1611
  %v1666 = vpop.f32.mrb[0].mxu0
  %v1667 = vadd.f32 0.0, %v1666
  %v1668 = vpop.f32.mrb[0].mxu0
  %v1669 = vpop.f32.mrb[0].mxu0
  %v1670 = vadd.f32 0.0, %v1669
  %v1671 = vpop.f32.mrb[0].mxu0
  %1672 = vmatprep.mubr.bf16.mxu0 0
  %1673 = vmatmul.mubr.bf16.gmra.mrb[0].mxu0 %v1614
  %v1674 = vpop.f32.mrb[0].mxu0
  %v1675 = vadd.f32 0.0, %v1674
  %v1676 = vpop.f32.mrb[0].mxu0
  %v1677 = vpop.f32.mrb[0].mxu0
  %v1678 = vadd.f32 0.0, %v1677
  %v1679 = vpop.f32.mrb[0].mxu0
  %1680 = vdwg.mxu0
  %1689 = vrot.lane.b32.xlu0 %v1651, 64
  %v1690 = vpop.permute.xlu0 %1689
  %1691 = vrot.lane.b32.xlu0 %v1654, 64
  %v1692 = vpop.permute.xlu0 %1691
  %1693 = vrot.lane.b32.xlu0 %v1659, 64
  %v1694 = vpop.permute.xlu0 %1693
  %1695 = vrot.lane.b32.xlu0 %v1662, 64
  %v1696 = vpop.permute.xlu0 %1695
  %1697 = vrot.lane.b32.xlu0 %v1667, 64
  %v1698 = vpop.permute.xlu0 %1697
  %1699 = vrot.lane.b32.xlu0 %v1670, 64
  %v1700 = vpop.permute.xlu0 %1699
  %1701 = vrot.lane.b32.xlu0 %v1675, 64
  %v1702 = vpop.permute.xlu0 %1701
  %1703 = vrot.lane.b32.xlu0 %v1678, 64
  %v1704 = vpop.permute.xlu0 %1703
  %v1713 = vsub.f32 %v203, %v1690
  %v1714 = vsub.f32 %v204, %v1692
  %v1715 = vsub.f32 %v205, %v1694
  %v1716 = vsub.f32 %v206, %v1696
  %v1717 = vsub.f32 %v207, %v1698
  %v1718 = vsub.f32 %v208, %v1700
  %v1719 = vsub.f32 %v209, %v1702
  %v1720 = vsub.f32 %v210, %v1704
  %v1721 = vadd.f32 %v617, %v1651
  %v1722 = vadd.f32 %v622, %v1654
  %v1723 = vadd.f32 %v627, %v1659
  %v1724 = vadd.f32 %v632, %v1662
  %v1725 = vadd.f32 %v637, %v1667
  %v1726 = vadd.f32 %v642, %v1670
  %v1727 = vadd.f32 %v647, %v1675
  %v1728 = vadd.f32 %v652, %v1678
  %1730 = vset.pattern.permute.xlu0 0
  %1731 = vperm.xlu0 %1730, %v1713
  %v1732 = vpop.permute.xlu0 %1731
  %1735 = vset.pattern.permute.xlu0 0
  %1736 = vperm.xlu0 %1735, %v1714
  %v1737 = vpop.permute.xlu0 %1736
  %1740 = vset.pattern.permute.xlu0 0
  %1741 = vperm.xlu0 %1740, %v1715
  %v1742 = vpop.permute.xlu0 %1741
  %1745 = vset.pattern.permute.xlu0 0
  %1746 = vperm.xlu0 %1745, %v1716
  %v1747 = vpop.permute.xlu0 %1746
  %1750 = vset.pattern.permute.xlu0 0
  %1751 = vperm.xlu0 %1750, %v1717
  %v1752 = vpop.permute.xlu0 %1751
  %1755 = vset.pattern.permute.xlu0 0
  %1756 = vperm.xlu0 %1755, %v1718
  %v1757 = vpop.permute.xlu0 %1756
  %1760 = vset.pattern.permute.xlu0 0
  %1761 = vperm.xlu0 %1760, %v1719
  %v1762 = vpop.permute.xlu0 %1761
  %1765 = vset.pattern.permute.xlu0 0
  %1766 = vperm.xlu0 %1765, %v1720
  %v1767 = vpop.permute.xlu0 %1766
  %v1769 = vmul.f32 %v1732, %v1065
  %v1770 = vmul.f32 %v1737, %v1065
  %v1771 = vmul.f32 %v1742, %v1065
  %v1772 = vmul.f32 %v1747, %v1065
  %v1773 = vmul.f32 %v1752, %v1065
  %v1774 = vmul.f32 %v1757, %v1065
  %v1775 = vmul.f32 %v1762, %v1065
  %v1776 = vmul.f32 %v1767, %v1065
  %v1777 = vadd.f32 %v1721, %v1769
  %v1778 = vadd.f32 %v1722, %v1770
  %v1779 = vadd.f32 %v1723, %v1771
  %v1780 = vadd.f32 %v1724, %v1772
  %v1781 = vadd.f32 %v1725, %v1773
  %v1782 = vadd.f32 %v1726, %v1774
  %v1783 = vadd.f32 %v1727, %v1775
  %v1784 = vadd.f32 %v1728, %v1776
  %v1785 = vadd.f32 %v1777, %v1087
  %v1786 = vadd.f32 %v1778, %v1087
  %v1787 = vadd.f32 %v1779, %v1087
  %v1788 = vadd.f32 %v1780, %v1087
  %v1789 = vadd.f32 %v1781, %v1087
  %v1790 = vadd.f32 %v1782, %v1087
  %v1791 = vadd.f32 %v1783, %v1087
  %v1792 = vadd.f32 %v1784, %v1087
  %v1793 = vtanh.pop %v1785
  %v1794 = vtanh.pop %v1786
  %v1795 = vtanh.pop %v1787
  %v1796 = vtanh.pop %v1788
  %v1797 = vtanh.pop %v1789
  %v1798 = vtanh.pop %v1790
  %v1799 = vtanh.pop %v1791
  %v1800 = vtanh.pop %v1792
  %v1801 = vmul.f32 %v1793, %v1109
  %v1802 = vmul.f32 %v1794, %v1109
  %v1803 = vmul.f32 %v1795, %v1109
  %v1804 = vmul.f32 %v1796, %v1109
  %v1805 = vmul.f32 %v1797, %v1109
  %v1806 = vmul.f32 %v1798, %v1109
  %v1807 = vmul.f32 %v1799, %v1109
  %v1808 = vmul.f32 %v1800, %v1109
  %v1809 = vsel %vm248, %v1801, 0.0
  %1810 = vadd.xlane.f32.xlu0 %v1809
  %v1811 = vpop.xlane.xlu0 %1810
  %v1812 = vsel %vm248, %v1802, 0.0
  %1813 = vadd.xlane.f32.xlu0 %v1812
  %v1814 = vpop.xlane.xlu0 %1813
  %v1815 = vsel %vm248, %v1803, 0.0
  %1816 = vadd.xlane.f32.xlu0 %v1815
  %v1817 = vpop.xlane.xlu0 %1816
  %v1818 = vsel %vm248, %v1804, 0.0
  %1819 = vadd.xlane.f32.xlu0 %v1818
  %v1820 = vpop.xlane.xlu0 %1819
  %v1821 = vsel %vm248, %v1805, 0.0
  %1822 = vadd.xlane.f32.xlu0 %v1821
  %v1823 = vpop.xlane.xlu0 %1822
  %v1824 = vsel %vm248, %v1806, 0.0
  %1825 = vadd.xlane.f32.xlu0 %v1824
  %v1826 = vpop.xlane.xlu0 %1825
  %v1827 = vsel %vm248, %v1807, 0.0
  %1828 = vadd.xlane.f32.xlu0 %v1827
  %v1829 = vpop.xlane.xlu0 %1828
  %v1830 = vsel %vm248, %v1808, 0.0
  %1831 = vadd.xlane.f32.xlu0 %v1830
  %v1832 = vpop.xlane.xlu0 %1831
  %vm1833 = vcmp.gt.f32.partialorder %v1785, 0.0
  %vm1834 = vcmp.gt.f32.partialorder %v1786, 0.0
  %vm1835 = vcmp.gt.f32.partialorder %v1787, 0.0
  %vm1836 = vcmp.gt.f32.partialorder %v1788, 0.0
  %vm1837 = vcmp.gt.f32.partialorder %v1789, 0.0
  %vm1838 = vcmp.gt.f32.partialorder %v1790, 0.0
  %vm1839 = vcmp.gt.f32.partialorder %v1791, 0.0
  %vm1840 = vcmp.gt.f32.partialorder %v1792, 0.0
  %v1841 = vmul.f32 %v1785, 0.2
  %v1842 = vmul.f32 %v1786, 0.2
  %v1843 = vmul.f32 %v1787, 0.2
  %v1844 = vmul.f32 %v1788, 0.2
  %v1845 = vmul.f32 %v1789, 0.2
  %v1846 = vmul.f32 %v1790, 0.2
  %v1847 = vmul.f32 %v1791, 0.2
  %v1848 = vmul.f32 %v1792, 0.2
  %v1849 = vsel %vm1833, %v1785, %v1841
  %v1850 = vsel %vm1834, %v1786, %v1842
  %v1851 = vsel %vm1835, %v1787, %v1843
  %v1852 = vsel %vm1836, %v1788, %v1844
  %v1853 = vsel %vm1837, %v1789, %v1845
  %v1854 = vsel %vm1838, %v1790, %v1846
  %v1855 = vsel %vm1839, %v1791, %v1847
  %v1856 = vsel %vm1840, %v1792, %v1848
  %v1857 = vsel %vm426, %v1584, -inf
  %1858 = vmax.xlane.f32.xlu0 %v1857
  %v1859 = vpop.xlane.xlu0 %1858
  %v1860 = vsel %vm426, %v1585, -inf
  %1861 = vmax.xlane.f32.xlu0 %v1860
  %v1862 = vpop.xlane.xlu0 %1861
  %v1863 = vsel %vm426, %v1586, -inf
  %1864 = vmax.xlane.f32.xlu0 %v1863
  %v1865 = vpop.xlane.xlu0 %1864
  %v1866 = vsel %vm426, %v1587, -inf
  %1867 = vmax.xlane.f32.xlu0 %v1866
  %v1868 = vpop.xlane.xlu0 %1867
  %v1869 = vsel %vm426, %v1588, -inf
  %1870 = vmax.xlane.f32.xlu0 %v1869
  %v1871 = vpop.xlane.xlu0 %1870
  %v1872 = vsel %vm426, %v1589, -inf
  %1873 = vmax.xlane.f32.xlu0 %v1872
  %v1874 = vpop.xlane.xlu0 %1873
  %v1875 = vsel %vm426, %v1590, -inf
  %1876 = vmax.xlane.f32.xlu0 %v1875
  %v1877 = vpop.xlane.xlu0 %1876
  %v1878 = vsel %vm426, %v1591, -inf
  %1879 = vmax.xlane.f32.xlu0 %v1878
  %v1880 = vpop.xlane.xlu0 %1879
  %vm1881 = vcmp.eq.f32.partialorder %v1584, %v1859
  %vm1882 = vcmp.eq.f32.partialorder %v1585, %v1862
  %vm1883 = vcmp.eq.f32.partialorder %v1586, %v1865
  %vm1884 = vcmp.eq.f32.partialorder %v1587, %v1868
  %vm1885 = vcmp.eq.f32.partialorder %v1588, %v1871
  %vm1886 = vcmp.eq.f32.partialorder %v1589, %v1874
  %vm1887 = vcmp.eq.f32.partialorder %v1590, %v1877
  %vm1888 = vcmp.eq.f32.partialorder %v1591, %v1880
  %v1889 = vsel %vm1881, %v247, 64.0
  %v1890 = vsel %vm1882, %v247, 64.0
  %v1891 = vsel %vm1883, %v247, 64.0
  %v1892 = vsel %vm1884, %v247, 64.0
  %v1893 = vsel %vm1885, %v247, 64.0
  %v1894 = vsel %vm1886, %v247, 64.0
  %v1895 = vsel %vm1887, %v247, 64.0
  %v1896 = vsel %vm1888, %v247, 64.0
  %v1897 = vsel %vm426, %v1889, inf
  %1898 = vmin.xlane.f32.xlu0 %v1897
  %v1899 = vpop.xlane.xlu0 %1898
  %v1900 = vsel %vm426, %v1890, inf
  %1901 = vmin.xlane.f32.xlu0 %v1900
  %v1902 = vpop.xlane.xlu0 %1901
  %v1903 = vsel %vm426, %v1891, inf
  %1904 = vmin.xlane.f32.xlu0 %v1903
  %v1905 = vpop.xlane.xlu0 %1904
  %v1906 = vsel %vm426, %v1892, inf
  %1907 = vmin.xlane.f32.xlu0 %v1906
  %v1908 = vpop.xlane.xlu0 %1907
  %v1909 = vsel %vm426, %v1893, inf
  %1910 = vmin.xlane.f32.xlu0 %v1909
  %v1911 = vpop.xlane.xlu0 %1910
  %v1912 = vsel %vm426, %v1894, inf
  %1913 = vmin.xlane.f32.xlu0 %v1912
  %v1914 = vpop.xlane.xlu0 %1913
  %v1915 = vsel %vm426, %v1895, inf
  %1916 = vmin.xlane.f32.xlu0 %v1915
  %v1917 = vpop.xlane.xlu0 %1916
  %v1918 = vsel %vm426, %v1896, inf
  %1919 = vmin.xlane.f32.xlu0 %v1918
  %v1920 = vpop.xlane.xlu0 %1919
  %vm1921 = vcmp.eq.f32.partialorder %v247, %v1899
  %vm1922 = vcmp.eq.f32.partialorder %v247, %v1902
  %vm1923 = vcmp.eq.f32.partialorder %v247, %v1905
  %vm1924 = vcmp.eq.f32.partialorder %v247, %v1908
  %vm1925 = vcmp.eq.f32.partialorder %v247, %v1911
  %vm1926 = vcmp.eq.f32.partialorder %v247, %v1914
  %vm1927 = vcmp.eq.f32.partialorder %v247, %v1917
  %vm1928 = vcmp.eq.f32.partialorder %v247, %v1920
  %v1929 = vsel %vm1921, -3e+38, %v1584
  %v1930 = vsel %vm1922, -3e+38, %v1585
  %v1931 = vsel %vm1923, -3e+38, %v1586
  %v1932 = vsel %vm1924, -3e+38, %v1587
  %v1933 = vsel %vm1925, -3e+38, %v1588
  %v1934 = vsel %vm1926, -3e+38, %v1589
  %v1935 = vsel %vm1927, -3e+38, %v1590
  %v1936 = vsel %vm1928, -3e+38, %v1591
  %v1937 = vsel %vm1921, 1.0, 0.0
  %v1938 = vsel %vm1922, 1.0, 0.0
  %v1939 = vsel %vm1923, 1.0, 0.0
  %v1940 = vsel %vm1924, 1.0, 0.0
  %v1941 = vsel %vm1925, 1.0, 0.0
  %v1942 = vsel %vm1926, 1.0, 0.0
  %v1943 = vsel %vm1927, 1.0, 0.0
  %v1944 = vsel %vm1928, 1.0, 0.0
  %v1945 = vpack.c.bf16 %v1938, %v1937
  %v1946 = vpack.c.bf16 %v1940, %v1939
  %v1947 = vpack.c.bf16 %v1942, %v1941
  %v1948 = vpack.c.bf16 %v1944, %v1943
  %v1950 = vsel %vm426, %v1945, 0
  %v1953 = vsel %vm426, %v1946, 0
  %v1956 = vsel %vm426, %v1947, 0
  %v1959 = vsel %vm426, %v1948, 0
  %1961 = vmatprep.subr.bf16.mxu0 0
  %1962 = vmatpush1.bf16.msra.mxu0 %v800
  %1963 = vmatprep.subr.bf16.mxu0 0
  %1964 = vmatpush1.bf16.msra.mxu0 %v801
  %1965 = vmatprep.subr.bf16.mxu0 0
  %1966 = vmatpush1.bf16.msra.mxu0 %v802
  %1967 = vmatprep.subr.bf16.mxu0 0
  %1968 = vmatpush1.bf16.msra.mxu0 %v803
  %1969 = vmatprep.subr.bf16.mxu0 0
  %1970 = vmatpush1.bf16.msra.mxu0 0
  %1971 = vmatprep.subr.bf16.mxu0 0
  %1972 = vmatpush1.bf16.msra.mxu0 0
  %1973 = vmatprep.subr.bf16.mxu0 0
  %1974 = vmatpush1.bf16.msra.mxu0 0
  %1975 = vmatprep.subr.bf16.mxu0 0
  %1976 = vmatpush1.bf16.msra.mxu0 0
  %1977 = vmatprep.subr.bf16.mxu0 0
  %1978 = vmatpush1.bf16.msra.mxu0 0
  %1979 = vmatprep.subr.bf16.mxu0 0
  %1980 = vmatpush1.bf16.msra.mxu0 0
  %1981 = vmatprep.subr.bf16.mxu0 0
  %1982 = vmatpush1.bf16.msra.mxu0 0
  %1983 = vmatprep.subr.bf16.mxu0 0
  %1984 = vmatpush1.bf16.msra.mxu0 0
  %1985 = vmatprep.subr.bf16.mxu0 0
  %1986 = vmatpush1.bf16.msra.mxu0 0
  %1987 = vmatprep.subr.bf16.mxu0 0
  %1988 = vmatpush1.bf16.msra.mxu0 0
  %1989 = vmatprep.subr.bf16.mxu0 0
  %1990 = vmatpush1.bf16.msra.mxu0 0
  %1991 = vmatprep.subr.bf16.mxu0 0
  %1992 = vmatpush1.bf16.msra.mxu0 0
  %1993 = vmatprep.mubr.bf16.mxu0 0
  %1994 = vmatmul.mubr.bf16.gmra.mrb[0].mxu0 %v1950
  %v1995 = vpop.f32.mrb[0].mxu0
  %v1996 = vadd.f32 0.0, %v1995
  %v1997 = vpop.f32.mrb[0].mxu0
  %v1998 = vpop.f32.mrb[0].mxu0
  %v1999 = vadd.f32 0.0, %v1998
  %v2000 = vpop.f32.mrb[0].mxu0
  %2001 = vmatprep.mubr.bf16.mxu0 0
  %2002 = vmatmul.mubr.bf16.gmra.mrb[0].mxu0 %v1953
  %v2003 = vpop.f32.mrb[0].mxu0
  %v2004 = vadd.f32 0.0, %v2003
  %v2005 = vpop.f32.mrb[0].mxu0
  %v2006 = vpop.f32.mrb[0].mxu0
  %v2007 = vadd.f32 0.0, %v2006
  %v2008 = vpop.f32.mrb[0].mxu0
  %2009 = vmatprep.mubr.bf16.mxu0 0
  %2010 = vmatmul.mubr.bf16.gmra.mrb[0].mxu0 %v1956
  %v2011 = vpop.f32.mrb[0].mxu0
  %v2012 = vadd.f32 0.0, %v2011
  %v2013 = vpop.f32.mrb[0].mxu0
  %v2014 = vpop.f32.mrb[0].mxu0
  %v2015 = vadd.f32 0.0, %v2014
  %v2016 = vpop.f32.mrb[0].mxu0
  %2017 = vmatprep.mubr.bf16.mxu0 0
  %2018 = vmatmul.mubr.bf16.gmra.mrb[0].mxu0 %v1959
  %v2019 = vpop.f32.mrb[0].mxu0
  %v2020 = vadd.f32 0.0, %v2019
  %v2021 = vpop.f32.mrb[0].mxu0
  %v2022 = vpop.f32.mrb[0].mxu0
  %v2023 = vadd.f32 0.0, %v2022
  %v2024 = vpop.f32.mrb[0].mxu0
  %2025 = vdwg.mxu0
  %2034 = vrot.lane.b32.xlu0 %v1996, 64
  %v2035 = vpop.permute.xlu0 %2034
  %2036 = vrot.lane.b32.xlu0 %v1999, 64
  %v2037 = vpop.permute.xlu0 %2036
  %2038 = vrot.lane.b32.xlu0 %v2004, 64
  %v2039 = vpop.permute.xlu0 %2038
  %2040 = vrot.lane.b32.xlu0 %v2007, 64
  %v2041 = vpop.permute.xlu0 %2040
  %2042 = vrot.lane.b32.xlu0 %v2012, 64
  %v2043 = vpop.permute.xlu0 %2042
  %2044 = vrot.lane.b32.xlu0 %v2015, 64
  %v2045 = vpop.permute.xlu0 %2044
  %2046 = vrot.lane.b32.xlu0 %v2020, 64
  %v2047 = vpop.permute.xlu0 %2046
  %2048 = vrot.lane.b32.xlu0 %v2023, 64
  %v2049 = vpop.permute.xlu0 %2048
  %v2058 = vsub.f32 %v203, %v2035
  %v2059 = vsub.f32 %v204, %v2037
  %v2060 = vsub.f32 %v205, %v2039
  %v2061 = vsub.f32 %v206, %v2041
  %v2062 = vsub.f32 %v207, %v2043
  %v2063 = vsub.f32 %v208, %v2045
  %v2064 = vsub.f32 %v209, %v2047
  %v2065 = vsub.f32 %v210, %v2049
  %v2066 = vadd.f32 %v617, %v1996
  %v2067 = vadd.f32 %v622, %v1999
  %v2068 = vadd.f32 %v627, %v2004
  %v2069 = vadd.f32 %v632, %v2007
  %v2070 = vadd.f32 %v637, %v2012
  %v2071 = vadd.f32 %v642, %v2015
  %v2072 = vadd.f32 %v647, %v2020
  %v2073 = vadd.f32 %v652, %v2023
  %2075 = vset.pattern.permute.xlu0 0
  %2076 = vperm.xlu0 %2075, %v2058
  %v2077 = vpop.permute.xlu0 %2076
  %2080 = vset.pattern.permute.xlu0 0
  %2081 = vperm.xlu0 %2080, %v2059
  %v2082 = vpop.permute.xlu0 %2081
  %2085 = vset.pattern.permute.xlu0 0
  %2086 = vperm.xlu0 %2085, %v2060
  %v2087 = vpop.permute.xlu0 %2086
  %2090 = vset.pattern.permute.xlu0 0
  %2091 = vperm.xlu0 %2090, %v2061
  %v2092 = vpop.permute.xlu0 %2091
  %2095 = vset.pattern.permute.xlu0 0
  %2096 = vperm.xlu0 %2095, %v2062
  %v2097 = vpop.permute.xlu0 %2096
  %2100 = vset.pattern.permute.xlu0 0
  %2101 = vperm.xlu0 %2100, %v2063
  %v2102 = vpop.permute.xlu0 %2101
  %2105 = vset.pattern.permute.xlu0 0
  %2106 = vperm.xlu0 %2105, %v2064
  %v2107 = vpop.permute.xlu0 %2106
  %2110 = vset.pattern.permute.xlu0 0
  %2111 = vperm.xlu0 %2110, %v2065
  %v2112 = vpop.permute.xlu0 %2111
  %v2114 = vmul.f32 %v2077, %v1065
  %v2115 = vmul.f32 %v2082, %v1065
  %v2116 = vmul.f32 %v2087, %v1065
  %v2117 = vmul.f32 %v2092, %v1065
  %v2118 = vmul.f32 %v2097, %v1065
  %v2119 = vmul.f32 %v2102, %v1065
  %v2120 = vmul.f32 %v2107, %v1065
  %v2121 = vmul.f32 %v2112, %v1065
  %v2122 = vadd.f32 %v2066, %v2114
  %v2123 = vadd.f32 %v2067, %v2115
  %v2124 = vadd.f32 %v2068, %v2116
  %v2125 = vadd.f32 %v2069, %v2117
  %v2126 = vadd.f32 %v2070, %v2118
  %v2127 = vadd.f32 %v2071, %v2119
  %v2128 = vadd.f32 %v2072, %v2120
  %v2129 = vadd.f32 %v2073, %v2121
  %v2130 = vadd.f32 %v2122, %v1087
  %v2131 = vadd.f32 %v2123, %v1087
  %v2132 = vadd.f32 %v2124, %v1087
  %v2133 = vadd.f32 %v2125, %v1087
  %v2134 = vadd.f32 %v2126, %v1087
  %v2135 = vadd.f32 %v2127, %v1087
  %v2136 = vadd.f32 %v2128, %v1087
  %v2137 = vadd.f32 %v2129, %v1087
  %v2138 = vtanh.pop %v2130
  %v2139 = vtanh.pop %v2131
  %v2140 = vtanh.pop %v2132
  %v2141 = vtanh.pop %v2133
  %v2142 = vtanh.pop %v2134
  %v2143 = vtanh.pop %v2135
  %v2144 = vtanh.pop %v2136
  %v2145 = vtanh.pop %v2137
  %v2146 = vmul.f32 %v2138, %v1109
  %v2147 = vmul.f32 %v2139, %v1109
  %v2148 = vmul.f32 %v2140, %v1109
  %v2149 = vmul.f32 %v2141, %v1109
  %v2150 = vmul.f32 %v2142, %v1109
  %v2151 = vmul.f32 %v2143, %v1109
  %v2152 = vmul.f32 %v2144, %v1109
  %v2153 = vmul.f32 %v2145, %v1109
  %v2154 = vsel %vm248, %v2146, 0.0
  %2155 = vadd.xlane.f32.xlu0 %v2154
  %v2156 = vpop.xlane.xlu0 %2155
  %v2157 = vsel %vm248, %v2147, 0.0
  %2158 = vadd.xlane.f32.xlu0 %v2157
  %v2159 = vpop.xlane.xlu0 %2158
  %v2160 = vsel %vm248, %v2148, 0.0
  %2161 = vadd.xlane.f32.xlu0 %v2160
  %v2162 = vpop.xlane.xlu0 %2161
  %v2163 = vsel %vm248, %v2149, 0.0
  %2164 = vadd.xlane.f32.xlu0 %v2163
  %v2165 = vpop.xlane.xlu0 %2164
  %v2166 = vsel %vm248, %v2150, 0.0
  %2167 = vadd.xlane.f32.xlu0 %v2166
  %v2168 = vpop.xlane.xlu0 %2167
  %v2169 = vsel %vm248, %v2151, 0.0
  %2170 = vadd.xlane.f32.xlu0 %v2169
  %v2171 = vpop.xlane.xlu0 %2170
  %v2172 = vsel %vm248, %v2152, 0.0
  %2173 = vadd.xlane.f32.xlu0 %v2172
  %v2174 = vpop.xlane.xlu0 %2173
  %v2175 = vsel %vm248, %v2153, 0.0
  %2176 = vadd.xlane.f32.xlu0 %v2175
  %v2177 = vpop.xlane.xlu0 %2176
  %vm2178 = vcmp.gt.f32.partialorder %v2130, 0.0
  %vm2179 = vcmp.gt.f32.partialorder %v2131, 0.0
  %vm2180 = vcmp.gt.f32.partialorder %v2132, 0.0
  %vm2181 = vcmp.gt.f32.partialorder %v2133, 0.0
  %vm2182 = vcmp.gt.f32.partialorder %v2134, 0.0
  %vm2183 = vcmp.gt.f32.partialorder %v2135, 0.0
  %vm2184 = vcmp.gt.f32.partialorder %v2136, 0.0
  %vm2185 = vcmp.gt.f32.partialorder %v2137, 0.0
  %v2186 = vmul.f32 %v2130, 0.2
  %v2187 = vmul.f32 %v2131, 0.2
  %v2188 = vmul.f32 %v2132, 0.2
  %v2189 = vmul.f32 %v2133, 0.2
  %v2190 = vmul.f32 %v2134, 0.2
  %v2191 = vmul.f32 %v2135, 0.2
  %v2192 = vmul.f32 %v2136, 0.2
  %v2193 = vmul.f32 %v2137, 0.2
  %v2194 = vsel %vm2178, %v2130, %v2186
  %v2195 = vsel %vm2179, %v2131, %v2187
  %v2196 = vsel %vm2180, %v2132, %v2188
  %v2197 = vsel %vm2181, %v2133, %v2189
  %v2198 = vsel %vm2182, %v2134, %v2190
  %v2199 = vsel %vm2183, %v2135, %v2191
  %v2200 = vsel %vm2184, %v2136, %v2192
  %v2201 = vsel %vm2185, %v2137, %v2193
  %v2202 = vsel %vm426, %v1929, -inf
  %2203 = vmax.xlane.f32.xlu0 %v2202
  %v2204 = vpop.xlane.xlu0 %2203
  %v2205 = vsel %vm426, %v1930, -inf
  %2206 = vmax.xlane.f32.xlu0 %v2205
  %v2207 = vpop.xlane.xlu0 %2206
  %v2208 = vsel %vm426, %v1931, -inf
  %2209 = vmax.xlane.f32.xlu0 %v2208
  %v2210 = vpop.xlane.xlu0 %2209
  %v2211 = vsel %vm426, %v1932, -inf
  %2212 = vmax.xlane.f32.xlu0 %v2211
  %v2213 = vpop.xlane.xlu0 %2212
  %v2214 = vsel %vm426, %v1933, -inf
  %2215 = vmax.xlane.f32.xlu0 %v2214
  %v2216 = vpop.xlane.xlu0 %2215
  %v2217 = vsel %vm426, %v1934, -inf
  %2218 = vmax.xlane.f32.xlu0 %v2217
  %v2219 = vpop.xlane.xlu0 %2218
  %v2220 = vsel %vm426, %v1935, -inf
  %2221 = vmax.xlane.f32.xlu0 %v2220
  %v2222 = vpop.xlane.xlu0 %2221
  %v2223 = vsel %vm426, %v1936, -inf
  %2224 = vmax.xlane.f32.xlu0 %v2223
  %v2225 = vpop.xlane.xlu0 %2224
  %vm2226 = vcmp.eq.f32.partialorder %v1929, %v2204
  %vm2227 = vcmp.eq.f32.partialorder %v1930, %v2207
  %vm2228 = vcmp.eq.f32.partialorder %v1931, %v2210
  %vm2229 = vcmp.eq.f32.partialorder %v1932, %v2213
  %vm2230 = vcmp.eq.f32.partialorder %v1933, %v2216
  %vm2231 = vcmp.eq.f32.partialorder %v1934, %v2219
  %vm2232 = vcmp.eq.f32.partialorder %v1935, %v2222
  %vm2233 = vcmp.eq.f32.partialorder %v1936, %v2225
  %v2234 = vsel %vm2226, %v247, 64.0
  %v2235 = vsel %vm2227, %v247, 64.0
  %v2236 = vsel %vm2228, %v247, 64.0
  %v2237 = vsel %vm2229, %v247, 64.0
  %v2238 = vsel %vm2230, %v247, 64.0
  %v2239 = vsel %vm2231, %v247, 64.0
  %v2240 = vsel %vm2232, %v247, 64.0
  %v2241 = vsel %vm2233, %v247, 64.0
  %v2242 = vsel %vm426, %v2234, inf
  %2243 = vmin.xlane.f32.xlu0 %v2242
  %v2244 = vpop.xlane.xlu0 %2243
  %v2245 = vsel %vm426, %v2235, inf
  %2246 = vmin.xlane.f32.xlu0 %v2245
  %v2247 = vpop.xlane.xlu0 %2246
  %v2248 = vsel %vm426, %v2236, inf
  %2249 = vmin.xlane.f32.xlu0 %v2248
  %v2250 = vpop.xlane.xlu0 %2249
  %v2251 = vsel %vm426, %v2237, inf
  %2252 = vmin.xlane.f32.xlu0 %v2251
  %v2253 = vpop.xlane.xlu0 %2252
  %v2254 = vsel %vm426, %v2238, inf
  %2255 = vmin.xlane.f32.xlu0 %v2254
  %v2256 = vpop.xlane.xlu0 %2255
  %v2257 = vsel %vm426, %v2239, inf
  %2258 = vmin.xlane.f32.xlu0 %v2257
  %v2259 = vpop.xlane.xlu0 %2258
  %v2260 = vsel %vm426, %v2240, inf
  %2261 = vmin.xlane.f32.xlu0 %v2260
  %v2262 = vpop.xlane.xlu0 %2261
  %v2263 = vsel %vm426, %v2241, inf
  %2264 = vmin.xlane.f32.xlu0 %v2263
  %v2265 = vpop.xlane.xlu0 %2264
  %vm2266 = vcmp.eq.f32.partialorder %v247, %v2244
  %vm2267 = vcmp.eq.f32.partialorder %v247, %v2247
  %vm2268 = vcmp.eq.f32.partialorder %v247, %v2250
  %vm2269 = vcmp.eq.f32.partialorder %v247, %v2253
  %vm2270 = vcmp.eq.f32.partialorder %v247, %v2256
  %vm2271 = vcmp.eq.f32.partialorder %v247, %v2259
  %vm2272 = vcmp.eq.f32.partialorder %v247, %v2262
  %vm2273 = vcmp.eq.f32.partialorder %v247, %v2265
  %v2274 = vsel %vm2266, 1.0, 0.0
  %v2275 = vsel %vm2267, 1.0, 0.0
  %v2276 = vsel %vm2268, 1.0, 0.0
  %v2277 = vsel %vm2269, 1.0, 0.0
  %v2278 = vsel %vm2270, 1.0, 0.0
  %v2279 = vsel %vm2271, 1.0, 0.0
  %v2280 = vsel %vm2272, 1.0, 0.0
  %v2281 = vsel %vm2273, 1.0, 0.0
  %v2282 = vpack.c.bf16 %v2275, %v2274
  %v2283 = vpack.c.bf16 %v2277, %v2276
  %v2284 = vpack.c.bf16 %v2279, %v2278
  %v2285 = vpack.c.bf16 %v2281, %v2280
  %v2287 = vsel %vm426, %v2282, 0
  %v2290 = vsel %vm426, %v2283, 0
  %v2293 = vsel %vm426, %v2284, 0
  %v2296 = vsel %vm426, %v2285, 0
  %2298 = vmatprep.subr.bf16.mxu0 0
  %2299 = vmatpush1.bf16.msra.mxu0 %v800
  %2300 = vmatprep.subr.bf16.mxu0 0
  %2301 = vmatpush1.bf16.msra.mxu0 %v801
  %2302 = vmatprep.subr.bf16.mxu0 0
  %2303 = vmatpush1.bf16.msra.mxu0 %v802
  %2304 = vmatprep.subr.bf16.mxu0 0
  %2305 = vmatpush1.bf16.msra.mxu0 %v803
  %2306 = vmatprep.subr.bf16.mxu0 0
  %2307 = vmatpush1.bf16.msra.mxu0 0
  %2308 = vmatprep.subr.bf16.mxu0 0
  %2309 = vmatpush1.bf16.msra.mxu0 0
  %2310 = vmatprep.subr.bf16.mxu0 0
  %2311 = vmatpush1.bf16.msra.mxu0 0
  %2312 = vmatprep.subr.bf16.mxu0 0
  %2313 = vmatpush1.bf16.msra.mxu0 0
  %2314 = vmatprep.subr.bf16.mxu0 0
  %2315 = vmatpush1.bf16.msra.mxu0 0
  %2316 = vmatprep.subr.bf16.mxu0 0
  %2317 = vmatpush1.bf16.msra.mxu0 0
  %2318 = vmatprep.subr.bf16.mxu0 0
  %2319 = vmatpush1.bf16.msra.mxu0 0
  %2320 = vmatprep.subr.bf16.mxu0 0
  %2321 = vmatpush1.bf16.msra.mxu0 0
  %2322 = vmatprep.subr.bf16.mxu0 0
  %2323 = vmatpush1.bf16.msra.mxu0 0
  %2324 = vmatprep.subr.bf16.mxu0 0
  %2325 = vmatpush1.bf16.msra.mxu0 0
  %2326 = vmatprep.subr.bf16.mxu0 0
  %2327 = vmatpush1.bf16.msra.mxu0 0
  %2328 = vmatprep.subr.bf16.mxu0 0
  %2329 = vmatpush1.bf16.msra.mxu0 0
  %2330 = vmatprep.mubr.bf16.mxu0 0
  %2331 = vmatmul.mubr.bf16.gmra.mrb[0].mxu0 %v2287
  %v2332 = vpop.f32.mrb[0].mxu0
  %v2333 = vadd.f32 0.0, %v2332
  %v2334 = vpop.f32.mrb[0].mxu0
  %v2335 = vpop.f32.mrb[0].mxu0
  %v2336 = vadd.f32 0.0, %v2335
  %v2337 = vpop.f32.mrb[0].mxu0
  %2338 = vmatprep.mubr.bf16.mxu0 0
  %2339 = vmatmul.mubr.bf16.gmra.mrb[0].mxu0 %v2290
  %v2340 = vpop.f32.mrb[0].mxu0
  %v2341 = vadd.f32 0.0, %v2340
  %v2342 = vpop.f32.mrb[0].mxu0
  %v2343 = vpop.f32.mrb[0].mxu0
  %v2344 = vadd.f32 0.0, %v2343
  %v2345 = vpop.f32.mrb[0].mxu0
  %2346 = vmatprep.mubr.bf16.mxu0 0
  %2347 = vmatmul.mubr.bf16.gmra.mrb[0].mxu0 %v2293
  %v2348 = vpop.f32.mrb[0].mxu0
  %v2349 = vadd.f32 0.0, %v2348
  %v2350 = vpop.f32.mrb[0].mxu0
  %v2351 = vpop.f32.mrb[0].mxu0
  %v2352 = vadd.f32 0.0, %v2351
  %v2353 = vpop.f32.mrb[0].mxu0
  %2354 = vmatprep.mubr.bf16.mxu0 0
  %2355 = vmatmul.mubr.bf16.gmra.mrb[0].mxu0 %v2296
  %v2356 = vpop.f32.mrb[0].mxu0
  %v2357 = vadd.f32 0.0, %v2356
  %v2358 = vpop.f32.mrb[0].mxu0
  %v2359 = vpop.f32.mrb[0].mxu0
  %v2360 = vadd.f32 0.0, %v2359
  %v2361 = vpop.f32.mrb[0].mxu0
  %2362 = vdwg.mxu0
  %2371 = vrot.lane.b32.xlu0 %v2333, 64
  %v2372 = vpop.permute.xlu0 %2371
  %2373 = vrot.lane.b32.xlu0 %v2336, 64
  %v2374 = vpop.permute.xlu0 %2373
  %2375 = vrot.lane.b32.xlu0 %v2341, 64
  %v2376 = vpop.permute.xlu0 %2375
  %2377 = vrot.lane.b32.xlu0 %v2344, 64
  %v2378 = vpop.permute.xlu0 %2377
  %2379 = vrot.lane.b32.xlu0 %v2349, 64
  %v2380 = vpop.permute.xlu0 %2379
  %2381 = vrot.lane.b32.xlu0 %v2352, 64
  %v2382 = vpop.permute.xlu0 %2381
  %2383 = vrot.lane.b32.xlu0 %v2357, 64
  %v2384 = vpop.permute.xlu0 %2383
  %2385 = vrot.lane.b32.xlu0 %v2360, 64
  %v2386 = vpop.permute.xlu0 %2385
  %v2395 = vsub.f32 %v203, %v2372
  %v2396 = vsub.f32 %v204, %v2374
  %v2397 = vsub.f32 %v205, %v2376
  %v2398 = vsub.f32 %v206, %v2378
  %v2399 = vsub.f32 %v207, %v2380
  %v2400 = vsub.f32 %v208, %v2382
  %v2401 = vsub.f32 %v209, %v2384
  %v2402 = vsub.f32 %v210, %v2386
  %v2403 = vadd.f32 %v617, %v2333
  %v2404 = vadd.f32 %v622, %v2336
  %v2405 = vadd.f32 %v627, %v2341
  %v2406 = vadd.f32 %v632, %v2344
  %v2407 = vadd.f32 %v637, %v2349
  %v2408 = vadd.f32 %v642, %v2352
  %v2409 = vadd.f32 %v647, %v2357
  %v2410 = vadd.f32 %v652, %v2360
  %2412 = vset.pattern.permute.xlu0 0
  %2413 = vperm.xlu0 %2412, %v2395
  %v2414 = vpop.permute.xlu0 %2413
  %2417 = vset.pattern.permute.xlu0 0
  %2418 = vperm.xlu0 %2417, %v2396
  %v2419 = vpop.permute.xlu0 %2418
  %2422 = vset.pattern.permute.xlu0 0
  %2423 = vperm.xlu0 %2422, %v2397
  %v2424 = vpop.permute.xlu0 %2423
  %2427 = vset.pattern.permute.xlu0 0
  %2428 = vperm.xlu0 %2427, %v2398
  %v2429 = vpop.permute.xlu0 %2428
  %2432 = vset.pattern.permute.xlu0 0
  %2433 = vperm.xlu0 %2432, %v2399
  %v2434 = vpop.permute.xlu0 %2433
  %2437 = vset.pattern.permute.xlu0 0
  %2438 = vperm.xlu0 %2437, %v2400
  %v2439 = vpop.permute.xlu0 %2438
  %2442 = vset.pattern.permute.xlu0 0
  %2443 = vperm.xlu0 %2442, %v2401
  %v2444 = vpop.permute.xlu0 %2443
  %2447 = vset.pattern.permute.xlu0 0
  %2448 = vperm.xlu0 %2447, %v2402
  %v2449 = vpop.permute.xlu0 %2448
  %v2451 = vmul.f32 %v2414, %v1065
  %v2452 = vmul.f32 %v2419, %v1065
  %v2453 = vmul.f32 %v2424, %v1065
  %v2454 = vmul.f32 %v2429, %v1065
  %v2455 = vmul.f32 %v2434, %v1065
  %v2456 = vmul.f32 %v2439, %v1065
  %v2457 = vmul.f32 %v2444, %v1065
  %v2458 = vmul.f32 %v2449, %v1065
  %v2459 = vadd.f32 %v2403, %v2451
  %v2460 = vadd.f32 %v2404, %v2452
  %v2461 = vadd.f32 %v2405, %v2453
  %v2462 = vadd.f32 %v2406, %v2454
  %v2463 = vadd.f32 %v2407, %v2455
  %v2464 = vadd.f32 %v2408, %v2456
  %v2465 = vadd.f32 %v2409, %v2457
  %v2466 = vadd.f32 %v2410, %v2458
  %v2467 = vadd.f32 %v2459, %v1087
  %v2468 = vadd.f32 %v2460, %v1087
  %v2469 = vadd.f32 %v2461, %v1087
  %v2470 = vadd.f32 %v2462, %v1087
  %v2471 = vadd.f32 %v2463, %v1087
  %v2472 = vadd.f32 %v2464, %v1087
  %v2473 = vadd.f32 %v2465, %v1087
  %v2474 = vadd.f32 %v2466, %v1087
  %v2475 = vtanh.pop %v2467
  %v2476 = vtanh.pop %v2468
  %v2477 = vtanh.pop %v2469
  %v2478 = vtanh.pop %v2470
  %v2479 = vtanh.pop %v2471
  %v2480 = vtanh.pop %v2472
  %v2481 = vtanh.pop %v2473
  %v2482 = vtanh.pop %v2474
  %v2483 = vmul.f32 %v2475, %v1109
  %v2484 = vmul.f32 %v2476, %v1109
  %v2485 = vmul.f32 %v2477, %v1109
  %v2486 = vmul.f32 %v2478, %v1109
  %v2487 = vmul.f32 %v2479, %v1109
  %v2488 = vmul.f32 %v2480, %v1109
  %v2489 = vmul.f32 %v2481, %v1109
  %v2490 = vmul.f32 %v2482, %v1109
  %v2491 = vsel %vm248, %v2483, 0.0
  %2492 = vadd.xlane.f32.xlu0 %v2491
  %v2493 = vpop.xlane.xlu0 %2492
  %v2494 = vsel %vm248, %v2484, 0.0
  %2495 = vadd.xlane.f32.xlu0 %v2494
  %v2496 = vpop.xlane.xlu0 %2495
  %v2497 = vsel %vm248, %v2485, 0.0
  %2498 = vadd.xlane.f32.xlu0 %v2497
  %v2499 = vpop.xlane.xlu0 %2498
  %v2500 = vsel %vm248, %v2486, 0.0
  %2501 = vadd.xlane.f32.xlu0 %v2500
  %v2502 = vpop.xlane.xlu0 %2501
  %v2503 = vsel %vm248, %v2487, 0.0
  %2504 = vadd.xlane.f32.xlu0 %v2503
  %v2505 = vpop.xlane.xlu0 %2504
  %v2506 = vsel %vm248, %v2488, 0.0
  %2507 = vadd.xlane.f32.xlu0 %v2506
  %v2508 = vpop.xlane.xlu0 %2507
  %v2509 = vsel %vm248, %v2489, 0.0
  %2510 = vadd.xlane.f32.xlu0 %v2509
  %v2511 = vpop.xlane.xlu0 %2510
  %v2512 = vsel %vm248, %v2490, 0.0
  %2513 = vadd.xlane.f32.xlu0 %v2512
  %v2514 = vpop.xlane.xlu0 %2513
  %vm2515 = vcmp.gt.f32.partialorder %v2467, 0.0
  %vm2516 = vcmp.gt.f32.partialorder %v2468, 0.0
  %vm2517 = vcmp.gt.f32.partialorder %v2469, 0.0
  %vm2518 = vcmp.gt.f32.partialorder %v2470, 0.0
  %vm2519 = vcmp.gt.f32.partialorder %v2471, 0.0
  %vm2520 = vcmp.gt.f32.partialorder %v2472, 0.0
  %vm2521 = vcmp.gt.f32.partialorder %v2473, 0.0
  %vm2522 = vcmp.gt.f32.partialorder %v2474, 0.0
  %v2523 = vmul.f32 %v2467, 0.2
  %v2524 = vmul.f32 %v2468, 0.2
  %v2525 = vmul.f32 %v2469, 0.2
  %v2526 = vmul.f32 %v2470, 0.2
  %v2527 = vmul.f32 %v2471, 0.2
  %v2528 = vmul.f32 %v2472, 0.2
  %v2529 = vmul.f32 %v2473, 0.2
  %v2530 = vmul.f32 %v2474, 0.2
  %v2531 = vsel %vm2515, %v2467, %v2523
  %v2532 = vsel %vm2516, %v2468, %v2524
  %v2533 = vsel %vm2517, %v2469, %v2525
  %v2534 = vsel %vm2518, %v2470, %v2526
  %v2535 = vsel %vm2519, %v2471, %v2527
  %v2536 = vsel %vm2520, %v2472, %v2528
  %v2537 = vsel %vm2521, %v2473, %v2529
  %v2538 = vsel %vm2522, %v2474, %v2530
  %vm2539 = vcmask 7168
  %v2540 = vsel %vm2539, %v1121, %v1466
  %v2541 = vsel %vm2539, %v1124, %v1469
  %v2542 = vsel %vm2539, %v1127, %v1472
  %v2543 = vsel %vm2539, %v1130, %v1475
  %v2544 = vsel %vm2539, %v1133, %v1478
  %v2545 = vsel %vm2539, %v1136, %v1481
  %v2546 = vsel %vm2539, %v1139, %v1484
  %v2547 = vsel %vm2539, %v1142, %v1487
  %vm2548 = vcmask 15360
  %v2549 = vsel %vm2548, %v2540, %v1811
  %v2550 = vsel %vm2548, %v2541, %v1814
  %v2551 = vsel %vm2548, %v2542, %v1817
  %v2552 = vsel %vm2548, %v2543, %v1820
  %v2553 = vsel %vm2548, %v2544, %v1823
  %v2554 = vsel %vm2548, %v2545, %v1826
  %v2555 = vsel %vm2548, %v2546, %v1829
  %v2556 = vsel %vm2548, %v2547, %v1832
  %vm2557 = vcmask 23552
  %v2558 = vsel %vm2557, %v2549, %v2156
  %v2559 = vsel %vm2557, %v2550, %v2159
  %v2560 = vsel %vm2557, %v2551, %v2162
  %v2561 = vsel %vm2557, %v2552, %v2165
  %v2562 = vsel %vm2557, %v2553, %v2168
  %v2563 = vsel %vm2557, %v2554, %v2171
  %v2564 = vsel %vm2557, %v2555, %v2174
  %v2565 = vsel %vm2557, %v2556, %v2177
  %v2566 = vsel %vm61, %v2558, %v2493
  %v2567 = vsel %vm61, %v2559, %v2496
  %v2568 = vsel %vm61, %v2560, %v2499
  %v2569 = vsel %vm61, %v2561, %v2502
  %v2570 = vsel %vm61, %v2562, %v2505
  %v2571 = vsel %vm61, %v2563, %v2508
  %v2572 = vsel %vm61, %v2564, %v2511
  %v2573 = vsel %vm61, %v2565, %v2514
  %vm2574 = vcmask 39936
  %v2575 = vsel %vm2574, %v2566, -inf
  %2576 = vmax.xlane.f32.xlu0 %v2575
  %v2577 = vpop.xlane.xlu0 %2576
  %v2578 = vsel %vm2574, %v2567, -inf
  %2579 = vmax.xlane.f32.xlu0 %v2578
  %v2580 = vpop.xlane.xlu0 %2579
  %v2581 = vsel %vm2574, %v2568, -inf
  %2582 = vmax.xlane.f32.xlu0 %v2581
  %v2583 = vpop.xlane.xlu0 %2582
  %v2584 = vsel %vm2574, %v2569, -inf
  %2585 = vmax.xlane.f32.xlu0 %v2584
  %v2586 = vpop.xlane.xlu0 %2585
  %v2587 = vsel %vm2574, %v2570, -inf
  %2588 = vmax.xlane.f32.xlu0 %v2587
  %v2589 = vpop.xlane.xlu0 %2588
  %v2590 = vsel %vm2574, %v2571, -inf
  %2591 = vmax.xlane.f32.xlu0 %v2590
  %v2592 = vpop.xlane.xlu0 %2591
  %v2593 = vsel %vm2574, %v2572, -inf
  %2594 = vmax.xlane.f32.xlu0 %v2593
  %v2595 = vpop.xlane.xlu0 %2594
  %v2596 = vsel %vm2574, %v2573, -inf
  %2597 = vmax.xlane.f32.xlu0 %v2596
  %v2598 = vpop.xlane.xlu0 %2597
  %v2599 = vmax.f32 %v2577, %v2589
  %v2600 = vmax.f32 %v2580, %v2592
  %v2601 = vmax.f32 %v2583, %v2595
  %v2602 = vmax.f32 %v2586, %v2598
  %v2603 = vmax.f32 %v2599, %v2600
  %v2604 = vmax.f32 %v2601, %v2602
  %v2605 = vmax.f32 %v2603, %v2604
  %v2606 = vrot.slane %v2605, 4
  %v2607 = vmax.f32 %v2605, %v2606
  %v2608 = vrot.slane %v2607, 2
  %v2609 = vmax.f32 %v2607, %v2608
  %v2610 = vrot.slane %v2609, 1
  %v2611 = vmax.f32 %v2609, %v2610
  %v2612 = vsub.f32 %v2566, %v2611
  %v2613 = vsub.f32 %v2567, %v2611
  %v2614 = vsub.f32 %v2568, %v2611
  %v2615 = vsub.f32 %v2569, %v2611
  %v2616 = vsub.f32 %v2570, %v2611
  %v2617 = vsub.f32 %v2571, %v2611
  %v2618 = vsub.f32 %v2572, %v2611
  %v2619 = vsub.f32 %v2573, %v2611
  %v2620 = vmul.f32 %v2612, 1.442695
  %v2621 = vpow.pop %v2620
  %v2622 = vmul.f32 %v2613, 1.442695
  %v2623 = vpow.pop %v2622
  %v2624 = vmul.f32 %v2614, 1.442695
  %v2625 = vpow.pop %v2624
  %v2626 = vmul.f32 %v2615, 1.442695
  %v2627 = vpow.pop %v2626
  %v2628 = vmul.f32 %v2616, 1.442695
  %v2629 = vpow.pop %v2628
  %v2630 = vmul.f32 %v2617, 1.442695
  %v2631 = vpow.pop %v2630
  %v2632 = vmul.f32 %v2618, 1.442695
  %v2633 = vpow.pop %v2632
  %v2634 = vmul.f32 %v2619, 1.442695
  %v2635 = vpow.pop %v2634
  %v2636 = vsel %vm2574, %v2621, 0.0
  %2637 = vadd.xlane.f32.xlu0 %v2636
  %v2638 = vpop.xlane.xlu0 %2637
  %v2639 = vsel %vm2574, %v2623, 0.0
  %2640 = vadd.xlane.f32.xlu0 %v2639
  %v2641 = vpop.xlane.xlu0 %2640
  %v2642 = vsel %vm2574, %v2625, 0.0
  %2643 = vadd.xlane.f32.xlu0 %v2642
  %v2644 = vpop.xlane.xlu0 %2643
  %v2645 = vsel %vm2574, %v2627, 0.0
  %2646 = vadd.xlane.f32.xlu0 %v2645
  %v2647 = vpop.xlane.xlu0 %2646
  %v2648 = vsel %vm2574, %v2629, 0.0
  %2649 = vadd.xlane.f32.xlu0 %v2648
  %v2650 = vpop.xlane.xlu0 %2649
  %v2651 = vsel %vm2574, %v2631, 0.0
  %2652 = vadd.xlane.f32.xlu0 %v2651
  %v2653 = vpop.xlane.xlu0 %2652
  %v2654 = vsel %vm2574, %v2633, 0.0
  %2655 = vadd.xlane.f32.xlu0 %v2654
  %v2656 = vpop.xlane.xlu0 %2655
  %v2657 = vsel %vm2574, %v2635, 0.0
  %2658 = vadd.xlane.f32.xlu0 %v2657
  %v2659 = vpop.xlane.xlu0 %2658
  %v2660 = vadd.f32 %v2638, %v2641
  %v2661 = vadd.f32 %v2660, %v2644
  %v2662 = vadd.f32 %v2661, %v2647
  %v2663 = vadd.f32 %v2662, %v2650
  %v2664 = vadd.f32 %v2663, %v2653
  %v2665 = vadd.f32 %v2664, %v2656
  %v2666 = vadd.f32 %v2665, %v2659
  %v2667 = vrot.slane %v2666, 4
  %v2668 = vadd.f32 %v2666, %v2667
  %v2669 = vrot.slane %v2668, 2
  %v2670 = vadd.f32 %v2668, %v2669
  %v2671 = vrot.slane %v2670, 1
  %v2672 = vadd.f32 %v2670, %v2671
  %v2673 = vrcp.pop %v2672
  %v2674 = vmul.f32 %v2621, %v2673
  %v2675 = vmul.f32 %v2623, %v2673
  %v2676 = vmul.f32 %v2625, %v2673
  %v2677 = vmul.f32 %v2627, %v2673
  %v2678 = vmul.f32 %v2629, %v2673
  %v2679 = vmul.f32 %v2631, %v2673
  %v2680 = vmul.f32 %v2633, %v2673
  %v2681 = vmul.f32 %v2635, %v2673
  %2683 = vset.pattern.permute.xlu0 0
  %2684 = vperm.xlu0 %2683, %v2674
  %v2685 = vpop.permute.xlu0 %2684
  %2688 = vset.pattern.permute.xlu0 0
  %2689 = vperm.xlu0 %2688, %v2675
  %v2690 = vpop.permute.xlu0 %2689
  %2693 = vset.pattern.permute.xlu0 0
  %2694 = vperm.xlu0 %2693, %v2676
  %v2695 = vpop.permute.xlu0 %2694
  %2698 = vset.pattern.permute.xlu0 0
  %2699 = vperm.xlu0 %2698, %v2677
  %v2700 = vpop.permute.xlu0 %2699
  %2703 = vset.pattern.permute.xlu0 0
  %2704 = vperm.xlu0 %2703, %v2678
  %v2705 = vpop.permute.xlu0 %2704
  %2708 = vset.pattern.permute.xlu0 0
  %2709 = vperm.xlu0 %2708, %v2679
  %v2710 = vpop.permute.xlu0 %2709
  %2713 = vset.pattern.permute.xlu0 0
  %2714 = vperm.xlu0 %2713, %v2680
  %v2715 = vpop.permute.xlu0 %2714
  %2718 = vset.pattern.permute.xlu0 0
  %2719 = vperm.xlu0 %2718, %v2681
  %v2720 = vpop.permute.xlu0 %2719
  %v2722 = vmul.f32 %v2685, %v1159
  %v2723 = vmul.f32 %v2690, %v1160
  %v2724 = vmul.f32 %v2695, %v1161
  %v2725 = vmul.f32 %v2700, %v1162
  %v2726 = vmul.f32 %v2705, %v1163
  %v2727 = vmul.f32 %v2710, %v1164
  %v2728 = vmul.f32 %v2715, %v1165
  %v2729 = vmul.f32 %v2720, %v1166
  %2730 = vset.pattern.permute.xlu0 1
  %2731 = vperm.xlu0 %2730, %v2674
  %v2732 = vpop.permute.xlu0 %2731
  %2734 = vset.pattern.permute.xlu0 1
  %2735 = vperm.xlu0 %2734, %v2675
  %v2736 = vpop.permute.xlu0 %2735
  %2738 = vset.pattern.permute.xlu0 1
  %2739 = vperm.xlu0 %2738, %v2676
  %v2740 = vpop.permute.xlu0 %2739
  %2742 = vset.pattern.permute.xlu0 1
  %2743 = vperm.xlu0 %2742, %v2677
  %v2744 = vpop.permute.xlu0 %2743
  %2746 = vset.pattern.permute.xlu0 1
  %2747 = vperm.xlu0 %2746, %v2678
  %v2748 = vpop.permute.xlu0 %2747
  %2750 = vset.pattern.permute.xlu0 1
  %2751 = vperm.xlu0 %2750, %v2679
  %v2752 = vpop.permute.xlu0 %2751
  %2754 = vset.pattern.permute.xlu0 1
  %2755 = vperm.xlu0 %2754, %v2680
  %v2756 = vpop.permute.xlu0 %2755
  %2758 = vset.pattern.permute.xlu0 1
  %2759 = vperm.xlu0 %2758, %v2681
  %v2760 = vpop.permute.xlu0 %2759
  %v2762 = vmul.f32 %v2732, %v1504
  %v2763 = vmul.f32 %v2736, %v1505
  %v2764 = vmul.f32 %v2740, %v1506
  %v2765 = vmul.f32 %v2744, %v1507
  %v2766 = vmul.f32 %v2748, %v1508
  %v2767 = vmul.f32 %v2752, %v1509
  %v2768 = vmul.f32 %v2756, %v1510
  %v2769 = vmul.f32 %v2760, %v1511
  %v2770 = vadd.f32 %v2722, %v2762
  %v2771 = vadd.f32 %v2723, %v2763
  %v2772 = vadd.f32 %v2724, %v2764
  %v2773 = vadd.f32 %v2725, %v2765
  %v2774 = vadd.f32 %v2726, %v2766
  %v2775 = vadd.f32 %v2727, %v2767
  %v2776 = vadd.f32 %v2728, %v2768
  %v2777 = vadd.f32 %v2729, %v2769
  %2778 = vset.pattern.permute.xlu0 2
  %2779 = vperm.xlu0 %2778, %v2674
  %v2780 = vpop.permute.xlu0 %2779
  %2782 = vset.pattern.permute.xlu0 2
  %2783 = vperm.xlu0 %2782, %v2675
  %v2784 = vpop.permute.xlu0 %2783
  %2786 = vset.pattern.permute.xlu0 2
  %2787 = vperm.xlu0 %2786, %v2676
  %v2788 = vpop.permute.xlu0 %2787
  %2790 = vset.pattern.permute.xlu0 2
  %2791 = vperm.xlu0 %2790, %v2677
  %v2792 = vpop.permute.xlu0 %2791
  %2794 = vset.pattern.permute.xlu0 2
  %2795 = vperm.xlu0 %2794, %v2678
  %v2796 = vpop.permute.xlu0 %2795
  %2798 = vset.pattern.permute.xlu0 2
  %2799 = vperm.xlu0 %2798, %v2679
  %v2800 = vpop.permute.xlu0 %2799
  %2802 = vset.pattern.permute.xlu0 2
  %2803 = vperm.xlu0 %2802, %v2680
  %v2804 = vpop.permute.xlu0 %2803
  %2806 = vset.pattern.permute.xlu0 2
  %2807 = vperm.xlu0 %2806, %v2681
  %v2808 = vpop.permute.xlu0 %2807
  %v2810 = vmul.f32 %v2780, %v1849
  %v2811 = vmul.f32 %v2784, %v1850
  %v2812 = vmul.f32 %v2788, %v1851
  %v2813 = vmul.f32 %v2792, %v1852
  %v2814 = vmul.f32 %v2796, %v1853
  %v2815 = vmul.f32 %v2800, %v1854
  %v2816 = vmul.f32 %v2804, %v1855
  %v2817 = vmul.f32 %v2808, %v1856
  %v2818 = vadd.f32 %v2770, %v2810
  %v2819 = vadd.f32 %v2771, %v2811
  %v2820 = vadd.f32 %v2772, %v2812
  %v2821 = vadd.f32 %v2773, %v2813
  %v2822 = vadd.f32 %v2774, %v2814
  %v2823 = vadd.f32 %v2775, %v2815
  %v2824 = vadd.f32 %v2776, %v2816
  %v2825 = vadd.f32 %v2777, %v2817
  %2826 = vset.pattern.permute.xlu0 3
  %2827 = vperm.xlu0 %2826, %v2674
  %v2828 = vpop.permute.xlu0 %2827
  %2830 = vset.pattern.permute.xlu0 3
  %2831 = vperm.xlu0 %2830, %v2675
  %v2832 = vpop.permute.xlu0 %2831
  %2834 = vset.pattern.permute.xlu0 3
  %2835 = vperm.xlu0 %2834, %v2676
  %v2836 = vpop.permute.xlu0 %2835
  %2838 = vset.pattern.permute.xlu0 3
  %2839 = vperm.xlu0 %2838, %v2677
  %v2840 = vpop.permute.xlu0 %2839
  %2842 = vset.pattern.permute.xlu0 3
  %2843 = vperm.xlu0 %2842, %v2678
  %v2844 = vpop.permute.xlu0 %2843
  %2846 = vset.pattern.permute.xlu0 3
  %2847 = vperm.xlu0 %2846, %v2679
  %v2848 = vpop.permute.xlu0 %2847
  %2850 = vset.pattern.permute.xlu0 3
  %2851 = vperm.xlu0 %2850, %v2680
  %v2852 = vpop.permute.xlu0 %2851
  %2854 = vset.pattern.permute.xlu0 3
  %2855 = vperm.xlu0 %2854, %v2681
  %v2856 = vpop.permute.xlu0 %2855
  %v2858 = vmul.f32 %v2828, %v2194
  %v2859 = vmul.f32 %v2832, %v2195
  %v2860 = vmul.f32 %v2836, %v2196
  %v2861 = vmul.f32 %v2840, %v2197
  %v2862 = vmul.f32 %v2844, %v2198
  %v2863 = vmul.f32 %v2848, %v2199
  %v2864 = vmul.f32 %v2852, %v2200
  %v2865 = vmul.f32 %v2856, %v2201
  %v2866 = vadd.f32 %v2818, %v2858
  %v2867 = vadd.f32 %v2819, %v2859
  %v2868 = vadd.f32 %v2820, %v2860
  %v2869 = vadd.f32 %v2821, %v2861
  %v2870 = vadd.f32 %v2822, %v2862
  %v2871 = vadd.f32 %v2823, %v2863
  %v2872 = vadd.f32 %v2824, %v2864
  %v2873 = vadd.f32 %v2825, %v2865
  %2874 = vset.pattern.permute.xlu0 4
  %2875 = vperm.xlu0 %2874, %v2674
  %v2876 = vpop.permute.xlu0 %2875
  %2878 = vset.pattern.permute.xlu0 4
  %2879 = vperm.xlu0 %2878, %v2675
  %v2880 = vpop.permute.xlu0 %2879
  %2882 = vset.pattern.permute.xlu0 4
  %2883 = vperm.xlu0 %2882, %v2676
  %v2884 = vpop.permute.xlu0 %2883
  %2886 = vset.pattern.permute.xlu0 4
  %2887 = vperm.xlu0 %2886, %v2677
  %v2888 = vpop.permute.xlu0 %2887
  %2890 = vset.pattern.permute.xlu0 4
  %2891 = vperm.xlu0 %2890, %v2678
  %v2892 = vpop.permute.xlu0 %2891
  %2894 = vset.pattern.permute.xlu0 4
  %2895 = vperm.xlu0 %2894, %v2679
  %v2896 = vpop.permute.xlu0 %2895
  %2898 = vset.pattern.permute.xlu0 4
  %2899 = vperm.xlu0 %2898, %v2680
  %v2900 = vpop.permute.xlu0 %2899
  %2902 = vset.pattern.permute.xlu0 4
  %2903 = vperm.xlu0 %2902, %v2681
  %v2904 = vpop.permute.xlu0 %2903
  %v2906 = vmul.f32 %v2876, %v2531
  %v2907 = vmul.f32 %v2880, %v2532
  %v2908 = vmul.f32 %v2884, %v2533
  %v2909 = vmul.f32 %v2888, %v2534
  %v2910 = vmul.f32 %v2892, %v2535
  %v2911 = vmul.f32 %v2896, %v2536
  %v2912 = vmul.f32 %v2900, %v2537
  %v2913 = vmul.f32 %v2904, %v2538
  %v2914 = vadd.f32 %v2866, %v2906
  %v2915 = vadd.f32 %v2867, %v2907
  %v2916 = vadd.f32 %v2868, %v2908
  %v2917 = vadd.f32 %v2869, %v2909
  %v2918 = vadd.f32 %v2870, %v2910
  %v2919 = vadd.f32 %v2871, %v2911
  %v2920 = vadd.f32 %v2872, %v2912
  %v2921 = vadd.f32 %v2873, %v2913
  %v2922 = vsel %vm2574, %v2674, 0.0
  %2923 = vadd.xlane.f32.xlu0 %v2922
  %v2924 = vpop.xlane.xlu0 %2923
  %v2925 = vsel %vm2574, %v2675, 0.0
  %2926 = vadd.xlane.f32.xlu0 %v2925
  %v2927 = vpop.xlane.xlu0 %2926
  %v2928 = vsel %vm2574, %v2676, 0.0
  %2929 = vadd.xlane.f32.xlu0 %v2928
  %v2930 = vpop.xlane.xlu0 %2929
  %v2931 = vsel %vm2574, %v2677, 0.0
  %2932 = vadd.xlane.f32.xlu0 %v2931
  %v2933 = vpop.xlane.xlu0 %2932
  %v2934 = vsel %vm2574, %v2678, 0.0
  %2935 = vadd.xlane.f32.xlu0 %v2934
  %v2936 = vpop.xlane.xlu0 %2935
  %v2937 = vsel %vm2574, %v2679, 0.0
  %2938 = vadd.xlane.f32.xlu0 %v2937
  %v2939 = vpop.xlane.xlu0 %2938
  %v2940 = vsel %vm2574, %v2680, 0.0
  %2941 = vadd.xlane.f32.xlu0 %v2940
  %v2942 = vpop.xlane.xlu0 %2941
  %v2943 = vsel %vm2574, %v2681, 0.0
  %2944 = vadd.xlane.f32.xlu0 %v2943
  %v2945 = vpop.xlane.xlu0 %2944
  %v2947 = vlaneseq
  %v2948 = vshrl.u32 %v2947, 7
  %v2949 = vsub.s32 0, %v2948
  %v2950 = vrot.slane %v235, %v2949
  %v2952 = vmul.f32 %v2924, %v2950
  %v2953 = vmul.f32 %v2927, %v2950
  %v2954 = vmul.f32 %v2930, %v2950
  %v2955 = vmul.f32 %v2933, %v2950
  %v2956 = vmul.f32 %v2936, %v2950
  %v2957 = vmul.f32 %v2939, %v2950
  %v2958 = vmul.f32 %v2942, %v2950
  %v2959 = vmul.f32 %v2945, %v2950
  %2968 = vrot.lane.b32.xlu0 %v2914, 96
  %v2969 = vpop.permute.xlu0 %2968
  %2970 = vrot.lane.b32.xlu0 %v2915, 96
  %v2971 = vpop.permute.xlu0 %2970
  %2972 = vrot.lane.b32.xlu0 %v2916, 96
  %v2973 = vpop.permute.xlu0 %2972
  %2974 = vrot.lane.b32.xlu0 %v2917, 96
  %v2975 = vpop.permute.xlu0 %2974
  %2976 = vrot.lane.b32.xlu0 %v2918, 96
  %v2977 = vpop.permute.xlu0 %2976
  %2978 = vrot.lane.b32.xlu0 %v2919, 96
  %v2979 = vpop.permute.xlu0 %2978
  %2980 = vrot.lane.b32.xlu0 %v2920, 96
  %v2981 = vpop.permute.xlu0 %2980
  %2982 = vrot.lane.b32.xlu0 %v2921, 96
  %v2983 = vpop.permute.xlu0 %2982
  %v2984 = vsel %vm248, %v2969, 0
  %v2986 = vsel %vm248, %v2971, 0
  %v2988 = vsel %vm248, %v2973, 0
  %v2990 = vsel %vm248, %v2975, 0
  %v2992 = vsel %vm248, %v2977, 0
  %v2994 = vsel %vm248, %v2979, 0
  %v2996 = vsel %vm248, %v2981, 0
  %v2998 = vsel %vm248, %v2983, 0
  %3000 = vmatprep.subr.mxu0 0.0
  %3001 = vmatpush1.msra.mxu0 %v231
  %3002 = vmatprep.subr.mxu0 0.0
  %3003 = vmatpush1.msra.mxu0 %v232
  %3004 = vmatprep.subr.mxu0 0.0
  %3005 = vmatpush1.msra.mxu0 %v233
  %3006 = vmatprep.subr.mxu0 0.0
  %3007 = vmatpush1.msra.mxu0 %v234
  %3008 = vmatprep.subr.mxu0 0.0
  %3009 = vmatpush1.msra.mxu0 0.0
  %3010 = vmatprep.subr.mxu0 0.0
  %3011 = vmatpush1.msra.mxu0 0.0
  %3012 = vmatprep.subr.mxu0 0.0
  %3013 = vmatpush1.msra.mxu0 0.0
  %3014 = vmatprep.subr.mxu0 0.0
  %3015 = vmatpush1.msra.mxu0 0.0
  %3016 = vmatprep.subr.mxu0 0.0
  %3017 = vmatpush1.msra.mxu0 0.0
  %3018 = vmatprep.subr.mxu0 0.0
  %3019 = vmatpush1.msra.mxu0 0.0
  %3020 = vmatprep.subr.mxu0 0.0
  %3021 = vmatpush1.msra.mxu0 0.0
  %3022 = vmatprep.subr.mxu0 0.0
  %3023 = vmatpush1.msra.mxu0 0.0
  %3024 = vmatprep.subr.mxu0 0.0
  %3025 = vmatpush1.msra.mxu0 0.0
  %3026 = vmatprep.subr.mxu0 0.0
  %3027 = vmatpush1.msra.mxu0 0.0
  %3028 = vmatprep.subr.mxu0 0.0
  %3029 = vmatpush1.msra.mxu0 0.0
  %3030 = vmatprep.subr.mxu0 0.0
  %3031 = vmatpush1.msra.mxu0 0.0
  %3032 = vmatprep.subr.mxu0 0.0
  %3033 = vmatpush1.msra.mxu0 0.0
  %3034 = vmatprep.subr.mxu0 0.0
  %3035 = vmatpush1.msra.mxu0 0.0
  %3036 = vmatprep.subr.mxu0 0.0
  %3037 = vmatpush1.msra.mxu0 0.0
  %3038 = vmatprep.subr.mxu0 0.0
  %3039 = vmatpush1.msra.mxu0 0.0
  %3040 = vmatprep.subr.mxu0 0.0
  %3041 = vmatpush1.msra.mxu0 0.0
  %3042 = vmatprep.subr.mxu0 0.0
  %3043 = vmatpush1.msra.mxu0 0.0
  %3044 = vmatprep.subr.mxu0 0.0
  %3045 = vmatpush1.msra.mxu0 0.0
  %3046 = vmatprep.subr.mxu0 0.0
  %3047 = vmatpush1.msra.mxu0 0.0
  %3048 = vmatprep.subr.mxu0 0.0
  %3049 = vmatpush1.msra.mxu0 0.0
  %3050 = vmatprep.subr.mxu0 0.0
  %3051 = vmatpush1.msra.mxu0 0.0
  %3052 = vmatprep.subr.mxu0 0.0
  %3053 = vmatpush1.msra.mxu0 0.0
  %3054 = vmatprep.subr.mxu0 0.0
  %3055 = vmatpush1.msra.mxu0 0.0
  %3056 = vmatprep.subr.mxu0 0.0
  %3057 = vmatpush1.msra.mxu0 0.0
  %3058 = vmatprep.subr.mxu0 0.0
  %3059 = vmatpush1.msra.mxu0 0.0
  %3060 = vmatprep.subr.mxu0 0.0
  %3061 = vmatpush1.msra.mxu0 0.0
  %3062 = vmatprep.subr.mxu0 0.0
  %3063 = vmatpush1.msra.mxu0 0.0
  %3064 = vmatprep.mubr.f32.mxu0 0.0
  %3065 = vmatmul.mubr.f32.gmra.mrb[0].mxu0 %v2984
  %v3066 = vpop.f32.mrb[0].mxu0
  %v3067 = vadd.f32 %v2952, %v3066
  %v3068 = vpop.f32.mrb[0].mxu0
  %3069 = vmatprep.mubr.f32.mxu0 0.0
  %3070 = vmatmul.mubr.f32.gmra.mrb[0].mxu0 %v2986
  %v3071 = vpop.f32.mrb[0].mxu0
  %v3072 = vadd.f32 %v2953, %v3071
  %v3073 = vpop.f32.mrb[0].mxu0
  %3074 = vmatprep.mubr.f32.mxu0 0.0
  %3075 = vmatmul.mubr.f32.gmra.mrb[0].mxu0 %v2988
  %v3076 = vpop.f32.mrb[0].mxu0
  %v3077 = vadd.f32 %v2954, %v3076
  %v3078 = vpop.f32.mrb[0].mxu0
  %3079 = vmatprep.mubr.f32.mxu0 0.0
  %3080 = vmatmul.mubr.f32.gmra.mrb[0].mxu0 %v2990
  %v3081 = vpop.f32.mrb[0].mxu0
  %v3082 = vadd.f32 %v2955, %v3081
  %v3083 = vpop.f32.mrb[0].mxu0
  %3084 = vmatprep.mubr.f32.mxu0 0.0
  %3085 = vmatmul.mubr.f32.gmra.mrb[0].mxu0 %v2992
  %v3086 = vpop.f32.mrb[0].mxu0
  %v3087 = vadd.f32 %v2956, %v3086
  %v3088 = vpop.f32.mrb[0].mxu0
  %3089 = vmatprep.mubr.f32.mxu0 0.0
  %3090 = vmatmul.mubr.f32.gmra.mrb[0].mxu0 %v2994
  %v3091 = vpop.f32.mrb[0].mxu0
  %v3092 = vadd.f32 %v2957, %v3091
  %v3093 = vpop.f32.mrb[0].mxu0
  %3094 = vmatprep.mubr.f32.mxu0 0.0
  %3095 = vmatmul.mubr.f32.gmra.mrb[0].mxu0 %v2996
  %v3096 = vpop.f32.mrb[0].mxu0
  %v3097 = vadd.f32 %v2958, %v3096
  %v3098 = vpop.f32.mrb[0].mxu0
  %3099 = vmatprep.mubr.f32.mxu0 0.0
  %3100 = vmatmul.mubr.f32.gmra.mrb[0].mxu0 %v2998
  %v3101 = vpop.f32.mrb[0].mxu0
  %v3102 = vadd.f32 %v2959, %v3101
  %v3103 = vpop.f32.mrb[0].mxu0
  %3104 = vdwg.mxu0
  %v3105 = vadd.f32 %v3067, %v195
  %v3106 = vadd.f32 %v3072, %v196
  %v3107 = vadd.f32 %v3077, %v197
  %v3108 = vadd.f32 %v3082, %v198
  %v3109 = vadd.f32 %v3087, %v199
  %v3110 = vadd.f32 %v3092, %v200
  %v3111 = vadd.f32 %v3097, %v201
  %v3112 = vadd.f32 %v3102, %v202
  %vm3113 = vcmp.gt.f32.partialorder %v3105, 0.0
  %vm3114 = vcmp.gt.f32.partialorder %v3106, 0.0
  %vm3115 = vcmp.gt.f32.partialorder %v3107, 0.0
  %vm3116 = vcmp.gt.f32.partialorder %v3108, 0.0
  %vm3117 = vcmp.gt.f32.partialorder %v3109, 0.0
  %vm3118 = vcmp.gt.f32.partialorder %v3110, 0.0
  %vm3119 = vcmp.gt.f32.partialorder %v3111, 0.0
  %vm3120 = vcmp.gt.f32.partialorder %v3112, 0.0
  %v3121 = vmul.f32 %v3105, 0.2
  %v3122 = vmul.f32 %v3106, 0.2
  %v3123 = vmul.f32 %v3107, 0.2
  %v3124 = vmul.f32 %v3108, 0.2
  %v3125 = vmul.f32 %v3109, 0.2
  %v3126 = vmul.f32 %v3110, 0.2
  %v3127 = vmul.f32 %v3111, 0.2
  %v3128 = vmul.f32 %v3112, 0.2
  %v3129 = vsel %vm3113, %v3105, %v3121
  %v3130 = vsel %vm3114, %v3106, %v3122
  %v3131 = vsel %vm3115, %v3107, %v3123
  %v3132 = vsel %vm3116, %v3108, %v3124
  %v3133 = vsel %vm3117, %v3109, %v3125
  %v3134 = vsel %vm3118, %v3110, %v3126
  %v3135 = vsel %vm3119, %v3111, %v3127
  %v3136 = vsel %vm3120, %v3112, %v3128
  %3137 = vst.msk [vmem:[%s13] sm:$0xff] %vm248, %v3129
  %3138 = vst.msk [vmem:[%s13 + $0x8] sm:$0xff] %vm248, %v3130
  %3139 = vst.msk [vmem:[%s13 + $0x10] sm:$0xff] %vm248, %v3131
  %3140 = vst.msk [vmem:[%s13 + $0x18] sm:$0xff] %vm248, %v3132
  %3141 = vst.msk [vmem:[%s13 + $0x20] sm:$0xff] %vm248, %v3133
  %3142 = vst.msk [vmem:[%s13 + $0x28] sm:$0xff] %vm248, %v3134
  %3143 = vst.msk [vmem:[%s13 + $0x30] sm:$0xff] %vm248, %v3135
  %3144 = vst.msk [vmem:[%s13 + $0x38] sm:$0xff] %vm248, %v3136
  // Predicated region
  $region54: #{tpu_custom_call.1} parent=0 // pred_check
    _
  $region55: #{tpu_custom_call.1} parent=0 // pred_check_branch
    %3146 = sbr.rel (0) target = $region57
  $region56: #{tpu_custom_call.1} parent=0 // pred_region
    _
  $region57: #{tpu_custom_call.1} parent=0 // pred_fallthru
    _
  // Predicated region
  $region58: #{tpu_custom_call.1} parent=0 // pred_check
    _
  $region59: #{tpu_custom_call.1} parent=0 // pred_check_branch
    %3148 = sbr.rel (0) target = $region61
  $region60: #{tpu_custom_call.1} parent=0 // pred_region
    _
  $region61: #{tpu_custom_call.1} parent=0 // pred_fallthru
    _

</llo_original>
